<compile_context>
chip_gen: v6e
topology: v6e:2x2x1
jax: 0.10.0
libtpu: 0.0.40
codegen_flags: <defaults>
</compile_context>

<pallas_src>
import functools

import jax
import jax.numpy as jnp
from jax.experimental import pallas as pl
from jax.experimental.pallas import tpu as pltpu

F32 = jnp.float32
VN_EPS = 1e-6
HIGH = jax.lax.Precision.HIGHEST


def _leaky_relu(x, negative_slope=0.01):
    return jnp.where(x >= 0, x, negative_slope * x)


# ----------------------------------------------------------------------------
# Pallas kernel: full AtomFlow forward for one tile of pivotal rows.
# Vector (equivariant) features live as (3, T, C); reshaped to (3T, C) only for
# MXU matmuls (T is a multiple of 8, so the reshape is tile-aligned / free).
# ----------------------------------------------------------------------------
def _atom_flow_kernel(sca_ref, vec_ref, z_ref, w_ref, out_ref, *,
                      off, num_flow, num_atom_type):
    T = sca_ref.shape[0]
    A = num_atom_type
    L = num_flow

    def W(name):
        r, k, n = off[name]
        return w_ref[r:r + k, :n]          # static, sublane-aligned slice

    def dot(a, b):
        return jnp.dot(a, b, preferred_element_type=jnp.float32)

    def gb_linear(s, v2, wv1, wv2, wsn, wss, wg, bg):
        # GBLinear: inter = VNLinear(vec); norm = ||inter||;
        # out_sca = Linear([norm, sca]); out_vec = sigmoid(Linear(out_sca)) * VNLinear(inter)
        inter2 = dot(v2, wv1)                                   # (3T, H)
        inter3 = inter2.reshape(3, T, inter2.shape[-1])
        norm = jnp.sqrt(jnp.sum(inter3 * inter3, axis=0))       # (T, H)
        out_s = dot(norm, wsn) + dot(s, wss)                    # (T, out_s)
        out_v2 = dot(inter2, wv2)                               # (3T, out_v)
        gate = jax.nn.sigmoid(dot(out_s, wg) + bg)              # (T, out_v)
        out_v3 = out_v2.reshape(3, T, out_v2.shape[-1]) * gate[None]
        return out_s, out_v3

    def vn_leaky_relu(v3, wdir, ns=0.2):
        C = v3.shape[-1]
        v2 = v3.reshape(3 * T, C)
        d3 = dot(v2, wdir).reshape(3, T, C)
        vd = jnp.sum(v3 * d3, axis=0)                           # (T, C)
        dn = jnp.sum(d3 * d3, axis=0)
        coef = vd / (dn + VN_EPS)
        keep = (vd >= 0.0)[None]
        return ns * v3 + (1.0 - ns) * jnp.where(keep, v3, v3 - coef[None] * d3)

    sca = sca_ref[...]                                          # (T, in_s)
    vec3 = vec_ref[...]                                         # (3, T, in_v)
    vec2 = vec3.reshape(3 * T, vec3.shape[-1])

    # self.net = GBPerceptronVN -> GBLinear
    sca, vec3 = gb_linear(sca, vec2, W("n1_v1"), W("n1_v2"), W("n1_sn"),
                          W("n1_ss"), W("n1_g"), W("n1_b"))
    vec3 = vn_leaky_relu(vec3, W("n1_dir"))
    sca = _leaky_relu(sca)
    vec2 = vec3.reshape(3 * T, vec3.shape[-1])
    sca, vec3 = gb_linear(sca, vec2, W("n2_v1"), W("n2_v2"), W("n2_sn"),
                          W("n2_ss"), W("n2_g"), W("n2_b"))
    vec2 = vec3.reshape(3 * T, vec3.shape[-1])

    # All L flow layers batched along lanes (stacked / block-diagonal weights).
    hs, hv3 = gb_linear(sca, vec2, W("fp_v1"), W("fp_v2"), W("fp_sn"),
                        W("fp_ss"), W("fp_g"), W("fp_b"))
    hv3 = vn_leaky_relu(hv3, W("fp_dir"))
    hs = _leaky_relu(hs)
    hv2 = hv3.reshape(3 * T, hv3.shape[-1])

    # Batched flow heads: fused [s|t] output, layer l at lanes [2A*l : 2A*(l+1)].
    h_inter2 = dot(hv2, W("fh_v1"))                             # (3T, L*Hv)
    h_inter3 = h_inter2.reshape(3, T, h_inter2.shape[-1])
    h_norm = jnp.sqrt(jnp.sum(h_inter3 * h_inter3, axis=0))     # (T, L*Hv)
    st = dot(h_norm, W("fh_n")) + dot(hs, W("fh_c"))            # (T, L*2A)

    # Sequential (trivially cheap) flow recurrence.
    z = z_ref[...]
    lj = jnp.zeros_like(z)
    for l in range(L):
        s_l = st[:, 2 * A * l: 2 * A * l + A]
        t_l = st[:, 2 * A * l + A: 2 * A * l + 2 * A]
        es = jnp.exp(s_l)
        z = (z + t_l) * es
        lj = lj + jnp.log(es + 1e-20)      # exact reference formula: log(|exp(s)|+1e-20)

    out_ref[...] = jnp.concatenate([z, lj], axis=-1)            # (T, 2A)


# ----------------------------------------------------------------------------
# Parameter init (deterministic, synthetic; torch-orientation f32 weights).
# ----------------------------------------------------------------------------
def _init_gblinear(key, in_s, in_v, out_s, out_v, scale=0.5, bottleneck=1):
    hid_v = in_v // bottleneck
    ks = jax.random.split(key, 5)

    def w(k, shape):
        return scale * jax.random.normal(k, shape, F32) / jnp.sqrt(shape[-1] * 1.0)

    return {
        "w_v1": w(ks[0], (hid_v, in_v)),
        "w_v2": w(ks[1], (out_v, hid_v)),
        "w_s": w(ks[2], (out_s, hid_v + in_s)),     # acts on concat([norm, sca])
        "w_g": w(ks[3], (out_v, out_s)),
        "b_g": 0.1 * jax.random.normal(ks[4], (1, out_v), F32),
    }


def _init_gbperceptron(key, in_s, in_v, out_s, out_v, scale=0.5, bottleneck=1):
    k1, k2 = jax.random.split(key)
    p = _init_gblinear(k1, in_s, in_v, out_s, out_v, scale, bottleneck)
    p["w_dir"] = jax.random.normal(k2, (out_v, out_v), F32) / jnp.sqrt(out_v * 1.0)
    return p


def init_atom_flow_params(key, in_sca, in_vec, hid_sca, hid_vec, num_atom_type, num_flow):
    k1, k2, k3 = jax.random.split(key, 3)
    net1 = _init_gbperceptron(k1, in_sca, in_vec, hid_sca, hid_vec)
    net2 = _init_gblinear(k2, hid_sca, hid_vec, hid_sca, hid_vec)
    flow = []
    for kl in jax.random.split(k3, num_flow):
        kp, kh = jax.random.split(kl)
        flow.append({
            "p": _init_gbperceptron(kp, hid_sca, hid_vec, hid_sca, hid_vec),
            "l": _init_gblinear(kh, hid_sca, hid_vec, 2 * num_atom_type, hid_vec, scale=0.2),
        })
    return {"net1": net1, "net2": net2, "flow": flow}


# ----------------------------------------------------------------------------
# Host-side weight restructuring:
#   * pre-transpose to (in, out), split w_s into norm-/sca- parts
#   * stack (shared input) or block-diagonalize (layer-dependent input) the
#     6 flow layers' weights so the flow stack runs as a few wide matmuls
#   * pack everything into ONE f32 slab (1 DMA), 8-row aligned per weight
# ----------------------------------------------------------------------------
def _block_diag(mats):
    rows = sum(int(m.shape[0]) for m in mats)
    cols = sum(int(m.shape[1]) for m in mats)
    out = jnp.zeros((rows, cols), F32)
    r = c = 0
    for m in mats:
        out = out.at[r:r + m.shape[0], c:c + m.shape[1]].set(m.astype(F32))
        r += int(m.shape[0])
        c += int(m.shape[1])
    return out


def _build_weight_slab(params, num_atom_type):
    mats = []

    def add_gbl(prefix, p):
        hv = p["w_v1"].shape[0]
        mats.extend([
            (prefix + "v1", p["w_v1"].T),
            (prefix + "v2", p["w_v2"].T),
            (prefix + "sn", p["w_s"][:, :hv].T),
            (prefix + "ss", p["w_s"][:, hv:].T),
            (prefix + "g", p["w_g"].T),
            (prefix + "b", p["b_g"]),
        ])

    add_gbl("n1_", params["net1"])
    mats.append(("n1_dir", params["net1"]["w_dir"].T))
    add_gbl("n2_", params["net2"])

    fp = [f["p"] for f in params["flow"]]
    fl = [f["l"] for f in params["flow"]]
    hvp = fp[0]["w_v1"].shape[0]
    hvl = fl[0]["w_v1"].shape[0]
    cat = lambda ws: jnp.concatenate(ws, axis=1)     # shared input -> stack outputs
    mats.extend([
        ("fp_v1", cat([p["w_v1"].T for p in fp])),
        ("fp_v2", _block_diag([p["w_v2"].T for p in fp])),
        ("fp_sn", _block_diag([p["w_s"][:, :hvp].T for p in fp])),
        ("fp_ss", cat([p["w_s"][:, hvp:].T for p in fp])),
        ("fp_g", _block_diag([p["w_g"].T for p in fp])),
        ("fp_b", cat([p["b_g"] for p in fp])),
        ("fp_dir", _block_diag([p["w_dir"].T for p in fp])),
        ("fh_v1", _block_diag([p["w_v1"].T for p in fl])),
        ("fh_n", _block_diag([p["w_s"][:, :hvl].T for p in fl])),
        ("fh_c", _block_diag([p["w_s"][:, hvl:].T for p in fl])),
    ])

    width = max(int(m.shape[1]) for _, m in mats)
    width = ((width + 127) // 128) * 128
    pieces, off, row = [], {}, 0
    for name, m in mats:
        k, n = int(m.shape[0]), int(m.shape[1])
        kp = ((k + 7) // 8) * 8                       # sublane-align every weight
        block = jnp.zeros((kp, width), F32).at[:k, :n].set(m.astype(F32))
        pieces.append(block)
        off[name] = (row, k, n)
        row += kp
    slab = jnp.concatenate(pieces, axis=0)
    return slab, off


def _choose_tile_n(n, max_tile=256):
    # Single grid step for small N: the grid is a serial loop on v5e/v6e, and at
    # tiny per-step row counts a 2-way v7x split just duplicates weight DMAs and
    # prologues. Only tile (256 rows/step) when N is genuinely large.
    n8 = max(8, ((n + 7) // 8) * 8)
    return n8 if n8 <= max_tile else max_tile


# ----------------------------------------------------------------------------
# Wrapper: gather pivotal rows, pad, call the kernel, un-pad / split output.
# ----------------------------------------------------------------------------
def atom_flow_forward(params, z_atom, compose_features, pivotal_idx):
    comp_sca, comp_vec = compose_features                        # (M, Ds), (M, Dv, 3)
    sca_pv = comp_sca[pivotal_idx].astype(F32)                   # (N, Ds)
    vec_pv = jnp.transpose(comp_vec[pivotal_idx], (2, 0, 1)).astype(F32)   # (3, N, Dv)

    n, ds = sca_pv.shape
    dv = vec_pv.shape[2]
    a = z_atom.shape[1]
    num_flow = len(params["flow"])

    tile_n = _choose_tile_n(n)
    n_pad = pl.cdiv(n, tile_n) * tile_n
    pad = n_pad - n
    sca_pv = jnp.pad(sca_pv, ((0, pad), (0, 0)))
    vec_pv = jnp.pad(vec_pv, ((0, 0), (0, pad), (0, 0)))
    z_pad = jnp.pad(z_atom.astype(F32), ((0, pad), (0, 0)))

    # In production the slab would be built once and reused across calls.
    w_slab, off = _build_weight_slab(params, a)

    kernel = functools.partial(_atom_flow_kernel, off=off,
                               num_flow=num_flow, num_atom_type=a)

    out = pl.pallas_call(
        kernel,
        grid=(n_pad // tile_n,),
        in_specs=[
            pl.BlockSpec((tile_n, ds), lambda i: (i, 0)),
            pl.BlockSpec((3, tile_n, dv), lambda i: (0, i, 0)),
            pl.BlockSpec((tile_n, a), lambda i: (i, 0)),
            pl.BlockSpec(w_slab.shape, lambda i: (0, 0)),        # resident weight slab
        ],
        out_specs=pl.BlockSpec((tile_n, 2 * a), lambda i: (i, 0)),
        out_shape=jax.ShapeDtypeStruct((n_pad, 2 * a), F32),
        compiler_params=pltpu.CompilerParams(dimension_semantics=("parallel",)),
    )(sca_pv, vec_pv, z_pad, w_slab)

    return out[:n, :a], out[:n, a:]


# ----------------------------------------------------------------------------
# Pure-JAX f32 reference (per-layer, no batching/restructuring) for validation.
# ----------------------------------------------------------------------------
def _ref_vnlinear(w, vec):          # w: torch-style (out,in); vec: (N, in, 3)
    return jnp.einsum("oi,nic->noc", w, vec, precision=HIGH)


def _ref_gblinear(p, sca, vec):
    hid_v = p["w_v1"].shape[0]
    inter = _ref_vnlinear(p["w_v1"], vec)
    norm = jnp.sqrt(jnp.sum(inter * inter, axis=-1))
    feat = jnp.concatenate([norm, sca], axis=-1)
    out_sca = jnp.dot(feat, p["w_s"].T, precision=HIGH)
    out_vec = _ref_vnlinear(p["w_v2"], inter)
    gate = jax.nn.sigmoid(jnp.dot(out_sca, p["w_g"].T, precision=HIGH) + p["b_g"])
    return out_sca, out_vec * gate[..., None]


def _ref_vn_leaky_relu(w_dir, vec, ns=0.2):
    d = _ref_vnlinear(w_dir, vec)
    vd = jnp.sum(vec * d, axis=-1, keepdims=True)
    dn = jnp.sum(d * d, axis=-1, keepdims=True)
    coef = vd / (dn + VN_EPS)
    return ns * vec + (1.0 - ns) * jnp.where(vd >= 0, vec, vec - coef * d)


def atom_flow_reference(params, z_atom, compose_features, pivotal_idx):
    comp_sca, comp_vec = compose_features
    sca = comp_sca[pivotal_idx]
    vec = comp_vec[pivotal_idx]                                  # (N, Dv, 3)
    a = z_atom.shape[1]

    n1, n2 = params["net1"], params["net2"]
    sca, vec = _ref_gblinear(n1, sca, vec)
    vec = _ref_vn_leaky_relu(n1["w_dir"], vec)
    sca = _leaky_relu(sca)
    sca, vec = _ref_gblinear(n2, sca, vec)

    z = z_atom
    lj = jnp.zeros_like(z)
    for f in params["flow"]:
        hs, hv = _ref_gblinear(f["p"], sca, vec)
        hv = _ref_vn_leaky_relu(f["p"]["w_dir"], hv)
        hs = _leaky_relu(hs)
        p = f["l"]
        hid_v = p["w_v1"].shape[0]
        inter = _ref_vnlinear(p["w_v1"], hv)
        norm = jnp.sqrt(jnp.sum(inter * inter, axis=-1))
        st = jnp.dot(jnp.concatenate([norm, hs], axis=-1), p["w_s"].T, precision=HIGH)
        s = jnp.exp(st[:, :a])
        t = st[:, a:]
        z = (z + t) * s
        lj = lj + jnp.log(jnp.abs(s) + 1e-20)
    return z, lj


# ----------------------------------------------------------------------------
if __name__ == "__main__":
    # Shapes implied by the module: in_sca=16, in_vec=8, hidden_sca=32,
    # hidden_vec=16, num_lig_atom_type=10, num_flow_layers=6.
    M, N = 24, 13
    DS_IN, DV_IN, HS, HV, A, L = 16, 8, 32, 16, 10, 6

    key = jax.random.PRNGKey(0)
    k_sca, k_vec, k_z, k_idx, k_par = jax.random.split(key, 5)

    comp_sca = jax.random.normal(k_sca, (M, DS_IN), F32)
    comp_vec = jax.random.normal(k_vec, (M, DV_IN, 3), F32)
    z_atom = jax.random.normal(k_z, (N, A), F32)
    pivotal_idx = jax.random.randint(k_idx, (N,), 0, M)

    params = init_atom_flow_params(k_par, DS_IN, DV_IN, HS, HV, A, L)

    z_out, log_jacob = atom_flow_forward(params, z_atom, (comp_sca, comp_vec), pivotal_idx)
    jax.block_until_ready((z_out, log_jacob))

    z_ref, lj_ref = atom_flow_reference(params, z_atom, (comp_sca, comp_vec), pivotal_idx)
    assert z_out.shape == (N, A) and log_jacob.shape == (N, A)
    assert jnp.allclose(z_out, z_ref, rtol=2e-2, atol=2e-2)
    assert jnp.allclose(log_jacob, lj_ref, rtol=2e-2, atol=2e-2)

    print("KERNEL_OK")
</pallas_src>

<mosaic_0001>
module attributes {stable_mosaic.version = 11 : i64} {
  func.func @_atom_flow_kernel(%arg0: i32, %arg1: memref<16x16xf32, #tpu.memory_space<vmem>>, %arg2: memref<3x16x8xf32, #tpu.memory_space<vmem>>, %arg3: memref<16x10xf32, #tpu.memory_space<vmem>>, %arg4: memref<1136x256xf32, #tpu.memory_space<vmem>>, %arg5: memref<16x20xf32, #tpu.memory_space<vmem>>) attributes {dimension_semantics = [#tpu.dimension_semantics<parallel>], iteration_bounds = array<i64: 1>, scalar_prefetch = 0 : i64, scratch_operands = 0 : i64, tpu.core_type = #tpu.core_type<tc>, window_params = [{transform_indices = @transform_0, window_bounds = array<i64: 16, 16>}, {transform_indices = @transform_1, window_bounds = array<i64: 3, 16, 8>}, {transform_indices = @transform_2, window_bounds = array<i64: 16, 10>}, {pipeline_mode = #tpu.pipeline_mode<synchronous>, transform_indices = @transform_3, window_bounds = array<i64: 1136, 256>}, {transform_indices = @transform_4, window_bounds = array<i64: 16, 20>}]} {
    %c0 = arith.constant 0 : index
    %c0_0 = arith.constant 0 : index
    %0 = vector.load %arg1[%c0, %c0_0] : memref<16x16xf32, #tpu.memory_space<vmem>>, vector<16x16xf32>
    %c0_1 = arith.constant 0 : index
    %c0_2 = arith.constant 0 : index
    %c0_3 = arith.constant 0 : index
    %1 = vector.load %arg2[%c0_1, %c0_2, %c0_3] : memref<3x16x8xf32, #tpu.memory_space<vmem>>, vector<3x16x8xf32>
    %2 = vector.shape_cast %1 : vector<3x16x8xf32> to vector<48x8xf32>
    %c0_4 = arith.constant 0 : index
    %c0_5 = arith.constant 0 : index
    %3 = vector.load %arg4[%c0_4, %c0_5] : memref<1136x256xf32, #tpu.memory_space<vmem>>, vector<8x8xf32>
    %c8 = arith.constant 8 : index
    %c0_6 = arith.constant 0 : index
    %4 = vector.load %arg4[%c8, %c0_6] : memref<1136x256xf32, #tpu.memory_space<vmem>>, vector<8x16xf32>
    %c16 = arith.constant 16 : index
    %c0_7 = arith.constant 0 : index
    %5 = vector.load %arg4[%c16, %c0_7] : memref<1136x256xf32, #tpu.memory_space<vmem>>, vector<8x32xf32>
    %c24 = arith.constant 24 : index
    %c0_8 = arith.constant 0 : index
    %6 = vector.load %arg4[%c24, %c0_8] : memref<1136x256xf32, #tpu.memory_space<vmem>>, vector<16x32xf32>
    %c40 = arith.constant 40 : index
    %c0_9 = arith.constant 0 : index
    %7 = vector.load %arg4[%c40, %c0_9] : memref<1136x256xf32, #tpu.memory_space<vmem>>, vector<32x16xf32>
    %c72 = arith.constant 72 : index
    %c0_10 = arith.constant 0 : index
    %8 = vector.load %arg4[%c72, %c0_10] : memref<1136x256xf32, #tpu.memory_space<vmem>>, vector<1x16xf32>
    %cst = arith.constant dense<0.000000e+00> : vector<48x8xf32>
    %9 = tpu.matmul %2, %3, %cst {dimension_numbers = #tpu.dot_dimension_numbers<[1], [0], [0], [1], [0, 0, 1, 1], [], []>} : vector<48x8xf32>, vector<8x8xf32>, vector<48x8xf32> -> vector<48x8xf32>
    %10 = vector.shape_cast %9 : vector<48x8xf32> to vector<3x16x8xf32>
    %11 = arith.mulf %10, %10 : vector<3x16x8xf32>
    %cst_11 = arith.constant dense<0.000000e+00> : vector<16x8xf32>
    %12 = vector.multi_reduction <add>, %11, %cst_11 [0] : vector<3x16x8xf32> to vector<16x8xf32>
    %13 = math.sqrt %12 : vector<16x8xf32>
    %cst_12 = arith.constant dense<0.000000e+00> : vector<16x32xf32>
    %14 = tpu.matmul %13, %5, %cst_12 {dimension_numbers = #tpu.dot_dimension_numbers<[1], [0], [0], [1], [0, 0, 1, 1], [], []>} : vector<16x8xf32>, vector<8x32xf32>, vector<16x32xf32> -> vector<16x32xf32>
    %cst_13 = arith.constant dense<0.000000e+00> : vector<16x32xf32>
    %15 = tpu.matmul %0, %6, %cst_13 {dimension_numbers = #tpu.dot_dimension_numbers<[1], [0], [0], [1], [0, 0, 1, 1], [], []>} : vector<16x16xf32>, vector<16x32xf32>, vector<16x32xf32> -> vector<16x32xf32>
    %16 = arith.addf %14, %15 : vector<16x32xf32>
    %cst_14 = arith.constant dense<0.000000e+00> : vector<48x16xf32>
    %17 = tpu.matmul %9, %4, %cst_14 {dimension_numbers = #tpu.dot_dimension_numbers<[1], [0], [0], [1], [0, 0, 1, 1], [], []>} : vector<48x8xf32>, vector<8x16xf32>, vector<48x16xf32> -> vector<48x16xf32>
    %cst_15 = arith.constant dense<0.000000e+00> : vector<16x16xf32>
    %18 = tpu.matmul %16, %7, %cst_15 {dimension_numbers = #tpu.dot_dimension_numbers<[1], [0], [0], [1], [0, 0, 1, 1], [], []>} : vector<16x32xf32>, vector<32x16xf32>, vector<16x16xf32> -> vector<16x16xf32>
    %19 = vector.broadcast %8 : vector<1x16xf32> to vector<16x16xf32>
    %20 = arith.addf %18, %19 : vector<16x16xf32>
    %21 = arith.negf %20 : vector<16x16xf32>
    %22 = math.exp %21 : vector<16x16xf32>
    %cst_16 = arith.constant 1.000000e+00 : f32
    %23 = vector.broadcast %cst_16 : f32 to vector<16x16xf32>
    %24 = arith.addf %23, %22 : vector<16x16xf32>
    %25 = arith.divf %23, %24 : vector<16x16xf32>
    %26 = vector.shape_cast %17 : vector<48x16xf32> to vector<3x16x16xf32>
    %27 = vector.shape_cast %25 : vector<16x16xf32> to vector<1x16x16xf32>
    %28 = vector.broadcast %27 : vector<1x16x16xf32> to vector<3x16x16xf32>
    %29 = arith.mulf %26, %28 : vector<3x16x16xf32>
    %c80 = arith.constant 80 : index
    %c0_17 = arith.constant 0 : index
    %30 = vector.load %arg4[%c80, %c0_17] : memref<1136x256xf32, #tpu.memory_space<vmem>>, vector<16x16xf32>
    %31 = vector.shape_cast %29 : vector<3x16x16xf32> to vector<48x16xf32>
    %cst_18 = arith.constant dense<0.000000e+00> : vector<48x16xf32>
    %32 = tpu.matmul %31, %30, %cst_18 {dimension_numbers = #tpu.dot_dimension_numbers<[1], [0], [0], [1], [0, 0, 1, 1], [], []>} : vector<48x16xf32>, vector<16x16xf32>, vector<48x16xf32> -> vector<48x16xf32>
    %33 = vector.shape_cast %32 : vector<48x16xf32> to vector<3x16x16xf32>
    %34 = arith.mulf %29, %33 : vector<3x16x16xf32>
    %cst_19 = arith.constant dense<0.000000e+00> : vector<16x16xf32>
    %35 = vector.multi_reduction <add>, %34, %cst_19 [0] : vector<3x16x16xf32> to vector<16x16xf32>
    %36 = arith.mulf %33, %33 : vector<3x16x16xf32>
    %cst_20 = arith.constant dense<0.000000e+00> : vector<16x16xf32>
    %37 = vector.multi_reduction <add>, %36, %cst_20 [0] : vector<3x16x16xf32> to vector<16x16xf32>
    %cst_21 = arith.constant 9.99999997E-7 : f32
    %38 = vector.broadcast %cst_21 : f32 to vector<16x16xf32>
    %39 = arith.addf %37, %38 : vector<16x16xf32>
    %40 = arith.divf %35, %39 : vector<16x16xf32>
    %cst_22 = arith.constant 0.000000e+00 : f32
    %41 = vector.broadcast %cst_22 : f32 to vector<16x16xf32>
    %42 = arith.cmpf oge, %35, %41 : vector<16x16xf32>
    %43 = vector.shape_cast %42 : vector<16x16xi1> to vector<1x16x16xi1>
    %cst_23 = arith.constant 2.000000e-01 : f32
    %44 = vector.broadcast %cst_23 : f32 to vector<3x16x16xf32>
    %45 = arith.mulf %44, %29 : vector<3x16x16xf32>
    %46 = vector.shape_cast %40 : vector<16x16xf32> to vector<1x16x16xf32>
    %47 = vector.broadcast %46 : vector<1x16x16xf32> to vector<3x16x16xf32>
    %48 = arith.mulf %47, %33 : vector<3x16x16xf32>
    %49 = arith.subf %29, %48 : vector<3x16x16xf32>
    %50 = vector.shape_cast %43 : vector<1x16x16xi1> to vector<1x16x16xi1>
    %51 = vector.broadcast %50 : vector<1x16x16xi1> to vector<3x16x16xi1>
    %52 = arith.select %51, %29, %49 : vector<3x16x16xi1>, vector<3x16x16xf32>
    %cst_24 = arith.constant 8.000000e-01 : f32
    %53 = vector.broadcast %cst_24 : f32 to vector<3x16x16xf32>
    %54 = arith.mulf %53, %52 : vector<3x16x16xf32>
    %55 = arith.addf %45, %54 : vector<3x16x16xf32>
    %cst_25 = arith.constant 0.000000e+00 : f32
    %56 = vector.broadcast %cst_25 : f32 to vector<16x32xf32>
    %57 = arith.cmpf oge, %16, %56 : vector<16x32xf32>
    %cst_26 = arith.constant 0.00999999977 : f32
    %58 = vector.broadcast %cst_26 : f32 to vector<16x32xf32>
    %59 = arith.mulf %58, %16 : vector<16x32xf32>
    %60 = arith.select %57, %16, %59 : vector<16x32xi1>, vector<16x32xf32>
    %61 = vector.shape_cast %55 : vector<3x16x16xf32> to vector<48x16xf32>
    %c96 = arith.constant 96 : index
    %c0_27 = arith.constant 0 : index
    %62 = vector.load %arg4[%c96, %c0_27] : memref<1136x256xf32, #tpu.memory_space<vmem>>, vector<16x16xf32>
    %c112 = arith.constant 112 : index
    %c0_28 = arith.constant 0 : index
    %63 = vector.load %arg4[%c112, %c0_28] : memref<1136x256xf32, #tpu.memory_space<vmem>>, vector<16x16xf32>
    %c128 = arith.constant 128 : index
    %c0_29 = arith.constant 0 : index
    %64 = vector.load %arg4[%c128, %c0_29] : memref<1136x256xf32, #tpu.memory_space<vmem>>, vector<16x32xf32>
    %c144 = arith.constant 144 : index
    %c0_30 = arith.constant 0 : index
    %65 = vector.load %arg4[%c144, %c0_30] : memref<1136x256xf32, #tpu.memory_space<vmem>>, vector<32x32xf32>
    %c176 = arith.constant 176 : index
    %c0_31 = arith.constant 0 : index
    %66 = vector.load %arg4[%c176, %c0_31] : memref<1136x256xf32, #tpu.memory_space<vmem>>, vector<32x16xf32>
    %c208 = arith.constant 208 : index
    %c0_32 = arith.constant 0 : index
    %67 = vector.load %arg4[%c208, %c0_32] : memref<1136x256xf32, #tpu.memory_space<vmem>>, vector<1x16xf32>
    %cst_33 = arith.constant dense<0.000000e+00> : vector<48x16xf32>
    %68 = tpu.matmul %61, %62, %cst_33 {dimension_numbers = #tpu.dot_dimension_numbers<[1], [0], [0], [1], [0, 0, 1, 1], [], []>} : vector<48x16xf32>, vector<16x16xf32>, vector<48x16xf32> -> vector<48x16xf32>
    %69 = vector.shape_cast %68 : vector<48x16xf32> to vector<3x16x16xf32>
    %70 = arith.mulf %69, %69 : vector<3x16x16xf32>
    %cst_34 = arith.constant dense<0.000000e+00> : vector<16x16xf32>
    %71 = vector.multi_reduction <add>, %70, %cst_34 [0] : vector<3x16x16xf32> to vector<16x16xf32>
    %72 = math.sqrt %71 : vector<16x16xf32>
    %cst_35 = arith.constant dense<0.000000e+00> : vector<16x32xf32>
    %73 = tpu.matmul %72, %64, %cst_35 {dimension_numbers = #tpu.dot_dimension_numbers<[1], [0], [0], [1], [0, 0, 1, 1], [], []>} : vector<16x16xf32>, vector<16x32xf32>, vector<16x32xf32> -> vector<16x32xf32>
    %cst_36 = arith.constant dense<0.000000e+00> : vector<16x32xf32>
    %74 = tpu.matmul %60, %65, %cst_36 {dimension_numbers = #tpu.dot_dimension_numbers<[1], [0], [0], [1], [0, 0, 1, 1], [], []>} : vector<16x32xf32>, vector<32x32xf32>, vector<16x32xf32> -> vector<16x32xf32>
    %75 = arith.addf %73, %74 : vector<16x32xf32>
    %cst_37 = arith.constant dense<0.000000e+00> : vector<48x16xf32>
    %76 = tpu.matmul %68, %63, %cst_37 {dimension_numbers = #tpu.dot_dimension_numbers<[1], [0], [0], [1], [0, 0, 1, 1], [], []>} : vector<48x16xf32>, vector<16x16xf32>, vector<48x16xf32> -> vector<48x16xf32>
    %cst_38 = arith.constant dense<0.000000e+00> : vector<16x16xf32>
    %77 = tpu.matmul %75, %66, %cst_38 {dimension_numbers = #tpu.dot_dimension_numbers<[1], [0], [0], [1], [0, 0, 1, 1], [], []>} : vector<16x32xf32>, vector<32x16xf32>, vector<16x16xf32> -> vector<16x16xf32>
    %78 = vector.broadcast %67 : vector<1x16xf32> to vector<16x16xf32>
    %79 = arith.addf %77, %78 : vector<16x16xf32>
    %80 = arith.negf %79 : vector<16x16xf32>
    %81 = math.exp %80 : vector<16x16xf32>
    %cst_39 = arith.constant 1.000000e+00 : f32
    %82 = vector.broadcast %cst_39 : f32 to vector<16x16xf32>
    %83 = arith.addf %82, %81 : vector<16x16xf32>
    %84 = arith.divf %82, %83 : vector<16x16xf32>
    %85 = vector.shape_cast %76 : vector<48x16xf32> to vector<3x16x16xf32>
    %86 = vector.shape_cast %84 : vector<16x16xf32> to vector<1x16x16xf32>
    %87 = vector.broadcast %86 : vector<1x16x16xf32> to vector<3x16x16xf32>
    %88 = arith.mulf %85, %87 : vector<3x16x16xf32>
    %89 = vector.shape_cast %88 : vector<3x16x16xf32> to vector<48x16xf32>
    %c216 = arith.constant 216 : index
    %c0_40 = arith.constant 0 : index
    %90 = vector.load %arg4[%c216, %c0_40] : memref<1136x256xf32, #tpu.memory_space<vmem>>, vector<16x96xf32>
    %c232 = arith.constant 232 : index
    %c0_41 = arith.constant 0 : index
    %91 = vector.load %arg4[%c232, %c0_41] : memref<1136x256xf32, #tpu.memory_space<vmem>>, vector<96x96xf32>
    %c328 = arith.constant 328 : index
    %c0_42 = arith.constant 0 : index
    %92 = vector.load %arg4[%c328, %c0_42] : memref<1136x256xf32, #tpu.memory_space<vmem>>, vector<96x192xf32>
    %c424 = arith.constant 424 : index
    %c0_43 = arith.constant 0 : index
    %93 = vector.load %arg4[%c424, %c0_43] : memref<1136x256xf32, #tpu.memory_space<vmem>>, vector<32x192xf32>
    %c456 = arith.constant 456 : index
    %c0_44 = arith.constant 0 : index
    %94 = vector.load %arg4[%c456, %c0_44] : memref<1136x256xf32, #tpu.memory_space<vmem>>, vector<192x96xf32>
    %c648 = arith.constant 648 : index
    %c0_45 = arith.constant 0 : index
    %95 = vector.load %arg4[%c648, %c0_45] : memref<1136x256xf32, #tpu.memory_space<vmem>>, vector<1x96xf32>
    %cst_46 = arith.constant dense<0.000000e+00> : vector<48x96xf32>
    %96 = tpu.matmul %89, %90, %cst_46 {dimension_numbers = #tpu.dot_dimension_numbers<[1], [0], [0], [1], [0, 0, 1, 1], [], []>} : vector<48x16xf32>, vector<16x96xf32>, vector<48x96xf32> -> vector<48x96xf32>
    %97 = vector.shape_cast %96 : vector<48x96xf32> to vector<3x16x96xf32>
    %98 = arith.mulf %97, %97 : vector<3x16x96xf32>
    %cst_47 = arith.constant dense<0.000000e+00> : vector<16x96xf32>
    %99 = vector.multi_reduction <add>, %98, %cst_47 [0] : vector<3x16x96xf32> to vector<16x96xf32>
    %100 = math.sqrt %99 : vector<16x96xf32>
    %cst_48 = arith.constant dense<0.000000e+00> : vector<16x192xf32>
    %101 = tpu.matmul %100, %92, %cst_48 {dimension_numbers = #tpu.dot_dimension_numbers<[1], [0], [0], [1], [0, 0, 1, 1], [], []>} : vector<16x96xf32>, vector<96x192xf32>, vector<16x192xf32> -> vector<16x192xf32>
    %cst_49 = arith.constant dense<0.000000e+00> : vector<16x192xf32>
    %102 = tpu.matmul %75, %93, %cst_49 {dimension_numbers = #tpu.dot_dimension_numbers<[1], [0], [0], [1], [0, 0, 1, 1], [], []>} : vector<16x32xf32>, vector<32x192xf32>, vector<16x192xf32> -> vector<16x192xf32>
    %103 = arith.addf %101, %102 : vector<16x192xf32>
    %cst_50 = arith.constant dense<0.000000e+00> : vector<48x96xf32>
    %104 = tpu.matmul %96, %91, %cst_50 {dimension_numbers = #tpu.dot_dimension_numbers<[1], [0], [0], [1], [0, 0, 1, 1], [], []>} : vector<48x96xf32>, vector<96x96xf32>, vector<48x96xf32> -> vector<48x96xf32>
    %cst_51 = arith.constant dense<0.000000e+00> : vector<16x96xf32>
    %105 = tpu.matmul %103, %94, %cst_51 {dimension_numbers = #tpu.dot_dimension_numbers<[1], [0], [0], [1], [0, 0, 1, 1], [], []>} : vector<16x192xf32>, vector<192x96xf32>, vector<16x96xf32> -> vector<16x96xf32>
    %106 = vector.broadcast %95 : vector<1x96xf32> to vector<16x96xf32>
    %107 = arith.addf %105, %106 : vector<16x96xf32>
    %108 = arith.negf %107 : vector<16x96xf32>
    %109 = math.exp %108 : vector<16x96xf32>
    %cst_52 = arith.constant 1.000000e+00 : f32
    %110 = vector.broadcast %cst_52 : f32 to vector<16x96xf32>
    %111 = arith.addf %110, %109 : vector<16x96xf32>
    %112 = arith.divf %110, %111 : vector<16x96xf32>
    %113 = vector.shape_cast %104 : vector<48x96xf32> to vector<3x16x96xf32>
    %114 = vector.shape_cast %112 : vector<16x96xf32> to vector<1x16x96xf32>
    %115 = vector.broadcast %114 : vector<1x16x96xf32> to vector<3x16x96xf32>
    %116 = arith.mulf %113, %115 : vector<3x16x96xf32>
    %c656 = arith.constant 656 : index
    %c0_53 = arith.constant 0 : index
    %117 = vector.load %arg4[%c656, %c0_53] : memref<1136x256xf32, #tpu.memory_space<vmem>>, vector<96x96xf32>
    %118 = vector.shape_cast %116 : vector<3x16x96xf32> to vector<48x96xf32>
    %cst_54 = arith.constant dense<0.000000e+00> : vector<48x96xf32>
    %119 = tpu.matmul %118, %117, %cst_54 {dimension_numbers = #tpu.dot_dimension_numbers<[1], [0], [0], [1], [0, 0, 1, 1], [], []>} : vector<48x96xf32>, vector<96x96xf32>, vector<48x96xf32> -> vector<48x96xf32>
    %120 = vector.shape_cast %119 : vector<48x96xf32> to vector<3x16x96xf32>
    %121 = arith.mulf %116, %120 : vector<3x16x96xf32>
    %cst_55 = arith.constant dense<0.000000e+00> : vector<16x96xf32>
    %122 = vector.multi_reduction <add>, %121, %cst_55 [0] : vector<3x16x96xf32> to vector<16x96xf32>
    %123 = arith.mulf %120, %120 : vector<3x16x96xf32>
    %cst_56 = arith.constant dense<0.000000e+00> : vector<16x96xf32>
    %124 = vector.multi_reduction <add>, %123, %cst_56 [0] : vector<3x16x96xf32> to vector<16x96xf32>
    %cst_57 = arith.constant 9.99999997E-7 : f32
    %125 = vector.broadcast %cst_57 : f32 to vector<16x96xf32>
    %126 = arith.addf %124, %125 : vector<16x96xf32>
    %127 = arith.divf %122, %126 : vector<16x96xf32>
    %cst_58 = arith.constant 0.000000e+00 : f32
    %128 = vector.broadcast %cst_58 : f32 to vector<16x96xf32>
    %129 = arith.cmpf oge, %122, %128 : vector<16x96xf32>
    %130 = vector.shape_cast %129 : vector<16x96xi1> to vector<1x16x96xi1>
    %cst_59 = arith.constant 2.000000e-01 : f32
    %131 = vector.broadcast %cst_59 : f32 to vector<3x16x96xf32>
    %132 = arith.mulf %131, %116 : vector<3x16x96xf32>
    %133 = vector.shape_cast %127 : vector<16x96xf32> to vector<1x16x96xf32>
    %134 = vector.broadcast %133 : vector<1x16x96xf32> to vector<3x16x96xf32>
    %135 = arith.mulf %134, %120 : vector<3x16x96xf32>
    %136 = arith.subf %116, %135 : vector<3x16x96xf32>
    %137 = vector.shape_cast %130 : vector<1x16x96xi1> to vector<1x16x96xi1>
    %138 = vector.broadcast %137 : vector<1x16x96xi1> to vector<3x16x96xi1>
    %139 = arith.select %138, %116, %136 : vector<3x16x96xi1>, vector<3x16x96xf32>
    %cst_60 = arith.constant 8.000000e-01 : f32
    %140 = vector.broadcast %cst_60 : f32 to vector<3x16x96xf32>
    %141 = arith.mulf %140, %139 : vector<3x16x96xf32>
    %142 = arith.addf %132, %141 : vector<3x16x96xf32>
    %cst_61 = arith.constant 0.000000e+00 : f32
    %143 = vector.broadcast %cst_61 : f32 to vector<16x192xf32>
    %144 = arith.cmpf oge, %103, %143 : vector<16x192xf32>
    %cst_62 = arith.constant 0.00999999977 : f32
    %145 = vector.broadcast %cst_62 : f32 to vector<16x192xf32>
    %146 = arith.mulf %145, %103 : vector<16x192xf32>
    %147 = arith.select %144, %103, %146 : vector<16x192xi1>, vector<16x192xf32>
    %148 = vector.shape_cast %142 : vector<3x16x96xf32> to vector<48x96xf32>
    %c752 = arith.constant 752 : index
    %c0_63 = arith.constant 0 : index
    %149 = vector.load %arg4[%c752, %c0_63] : memref<1136x256xf32, #tpu.memory_space<vmem>>, vector<96x96xf32>
    %cst_64 = arith.constant dense<0.000000e+00> : vector<48x96xf32>
    %150 = tpu.matmul %148, %149, %cst_64 {dimension_numbers = #tpu.dot_dimension_numbers<[1], [0], [0], [1], [0, 0, 1, 1], [], []>} : vector<48x96xf32>, vector<96x96xf32>, vector<48x96xf32> -> vector<48x96xf32>
    %151 = vector.shape_cast %150 : vector<48x96xf32> to vector<3x16x96xf32>
    %152 = arith.mulf %151, %151 : vector<3x16x96xf32>
    %cst_65 = arith.constant dense<0.000000e+00> : vector<16x96xf32>
    %153 = vector.multi_reduction <add>, %152, %cst_65 [0] : vector<3x16x96xf32> to vector<16x96xf32>
    %154 = math.sqrt %153 : vector<16x96xf32>
    %c848 = arith.constant 848 : index
    %c0_66 = arith.constant 0 : index
    %155 = vector.load %arg4[%c848, %c0_66] : memref<1136x256xf32, #tpu.memory_space<vmem>>, vector<96x120xf32>
    %cst_67 = arith.constant dense<0.000000e+00> : vector<16x120xf32>
    %156 = tpu.matmul %154, %155, %cst_67 {dimension_numbers = #tpu.dot_dimension_numbers<[1], [0], [0], [1], [0, 0, 1, 1], [], []>} : vector<16x96xf32>, vector<96x120xf32>, vector<16x120xf32> -> vector<16x120xf32>
    %c944 = arith.constant 944 : index
    %c0_68 = arith.constant 0 : index
    %157 = vector.load %arg4[%c944, %c0_68] : memref<1136x256xf32, #tpu.memory_space<vmem>>, vector<192x120xf32>
    %cst_69 = arith.constant dense<0.000000e+00> : vector<16x120xf32>
    %158 = tpu.matmul %147, %157, %cst_69 {dimension_numbers = #tpu.dot_dimension_numbers<[1], [0], [0], [1], [0, 0, 1, 1], [], []>} : vector<16x192xf32>, vector<192x120xf32>, vector<16x120xf32> -> vector<16x120xf32>
    %159 = arith.addf %156, %158 : vector<16x120xf32>
    %c0_70 = arith.constant 0 : index
    %c0_71 = arith.constant 0 : index
    %160 = vector.load %arg3[%c0_70, %c0_71] : memref<16x10xf32, #tpu.memory_space<vmem>>, vector<16x10xf32>
    %cst_72 = arith.constant 0.000000e+00 : f32
    %161 = vector.broadcast %cst_72 : f32 to vector<16x10xf32>
    %162 = vector.extract_strided_slice %159 {offsets = [0, 0], sizes = [16, 10], strides = [1, 1]} : vector<16x120xf32> to vector<16x10xf32>
    %163 = vector.extract_strided_slice %159 {offsets = [0, 10], sizes = [16, 10], strides = [1, 1]} : vector<16x120xf32> to vector<16x10xf32>
    %164 = math.exp %162 : vector<16x10xf32>
    %165 = arith.addf %160, %163 : vector<16x10xf32>
    %166 = arith.mulf %165, %164 : vector<16x10xf32>
    %cst_73 = arith.constant 9.99999968E-21 : f32
    %167 = vector.broadcast %cst_73 : f32 to vector<16x10xf32>
    %168 = arith.addf %164, %167 : vector<16x10xf32>
    %169 = math.log %168 : vector<16x10xf32>
    %170 = arith.addf %161, %169 : vector<16x10xf32>
    %171 = vector.extract_strided_slice %159 {offsets = [0, 20], sizes = [16, 10], strides = [1, 1]} : vector<16x120xf32> to vector<16x10xf32>
    %172 = vector.extract_strided_slice %159 {offsets = [0, 30], sizes = [16, 10], strides = [1, 1]} : vector<16x120xf32> to vector<16x10xf32>
    %173 = math.exp %171 : vector<16x10xf32>
    %174 = arith.addf %166, %172 : vector<16x10xf32>
    %175 = arith.mulf %174, %173 : vector<16x10xf32>
    %cst_74 = arith.constant 9.99999968E-21 : f32
    %176 = vector.broadcast %cst_74 : f32 to vector<16x10xf32>
    %177 = arith.addf %173, %176 : vector<16x10xf32>
    %178 = math.log %177 : vector<16x10xf32>
    %179 = arith.addf %170, %178 : vector<16x10xf32>
    %180 = vector.extract_strided_slice %159 {offsets = [0, 40], sizes = [16, 10], strides = [1, 1]} : vector<16x120xf32> to vector<16x10xf32>
    %181 = vector.extract_strided_slice %159 {offsets = [0, 50], sizes = [16, 10], strides = [1, 1]} : vector<16x120xf32> to vector<16x10xf32>
    %182 = math.exp %180 : vector<16x10xf32>
    %183 = arith.addf %175, %181 : vector<16x10xf32>
    %184 = arith.mulf %183, %182 : vector<16x10xf32>
    %cst_75 = arith.constant 9.99999968E-21 : f32
    %185 = vector.broadcast %cst_75 : f32 to vector<16x10xf32>
    %186 = arith.addf %182, %185 : vector<16x10xf32>
    %187 = math.log %186 : vector<16x10xf32>
    %188 = arith.addf %179, %187 : vector<16x10xf32>
    %189 = vector.extract_strided_slice %159 {offsets = [0, 60], sizes = [16, 10], strides = [1, 1]} : vector<16x120xf32> to vector<16x10xf32>
    %190 = vector.extract_strided_slice %159 {offsets = [0, 70], sizes = [16, 10], strides = [1, 1]} : vector<16x120xf32> to vector<16x10xf32>
    %191 = math.exp %189 : vector<16x10xf32>
    %192 = arith.addf %184, %190 : vector<16x10xf32>
    %193 = arith.mulf %192, %191 : vector<16x10xf32>
    %cst_76 = arith.constant 9.99999968E-21 : f32
    %194 = vector.broadcast %cst_76 : f32 to vector<16x10xf32>
    %195 = arith.addf %191, %194 : vector<16x10xf32>
    %196 = math.log %195 : vector<16x10xf32>
    %197 = arith.addf %188, %196 : vector<16x10xf32>
    %198 = vector.extract_strided_slice %159 {offsets = [0, 80], sizes = [16, 10], strides = [1, 1]} : vector<16x120xf32> to vector<16x10xf32>
    %199 = vector.extract_strided_slice %159 {offsets = [0, 90], sizes = [16, 10], strides = [1, 1]} : vector<16x120xf32> to vector<16x10xf32>
    %200 = math.exp %198 : vector<16x10xf32>
    %201 = arith.addf %193, %199 : vector<16x10xf32>
    %202 = arith.mulf %201, %200 : vector<16x10xf32>
    %cst_77 = arith.constant 9.99999968E-21 : f32
    %203 = vector.broadcast %cst_77 : f32 to vector<16x10xf32>
    %204 = arith.addf %200, %203 : vector<16x10xf32>
    %205 = math.log %204 : vector<16x10xf32>
    %206 = arith.addf %197, %205 : vector<16x10xf32>
    %207 = vector.extract_strided_slice %159 {offsets = [0, 100], sizes = [16, 10], strides = [1, 1]} : vector<16x120xf32> to vector<16x10xf32>
    %208 = vector.extract_strided_slice %159 {offsets = [0, 110], sizes = [16, 10], strides = [1, 1]} : vector<16x120xf32> to vector<16x10xf32>
    %209 = math.exp %207 : vector<16x10xf32>
    %210 = arith.addf %202, %208 : vector<16x10xf32>
    %211 = arith.mulf %210, %209 : vector<16x10xf32>
    %cst_78 = arith.constant 9.99999968E-21 : f32
    %212 = vector.broadcast %cst_78 : f32 to vector<16x10xf32>
    %213 = arith.addf %209, %212 : vector<16x10xf32>
    %214 = math.log %213 : vector<16x10xf32>
    %215 = arith.addf %206, %214 : vector<16x10xf32>
    %216 = tpu.concatenate %211, %215 in 1 : vector<16x10xf32>, vector<16x10xf32> -> vector<16x20xf32>
    %c0_79 = arith.constant 0 : index
    %c0_80 = arith.constant 0 : index
    %217 = vector.load %arg5[%c0_79, %c0_80] : memref<16x20xf32, #tpu.memory_space<vmem>>, vector<16x20xf32>
    tpu.vector_store %arg5[%c0_79, %c0_80], %216 {strides = array<i32>} : memref<16x20xf32, #tpu.memory_space<vmem>>, vector<16x20xf32>,
    return
  }
  func.func @transform_0(%arg0: i32) -> (i32, i32) {
    %c0_i32 = arith.constant 0 : i32
    %c0_i32_0 = arith.constant 0 : i32
    return %arg0, %c0_i32 : i32, i32
  }
  func.func @transform_1(%arg0: i32) -> (i32, i32, i32) {
    %c0_i32 = arith.constant 0 : i32
    %c0_i32_0 = arith.constant 0 : i32
    %c0_i32_1 = arith.constant 0 : i32
    return %c0_i32, %arg0, %c0_i32_0 : i32, i32, i32
  }
  func.func @transform_2(%arg0: i32) -> (i32, i32) {
    %c0_i32 = arith.constant 0 : i32
    %c0_i32_0 = arith.constant 0 : i32
    return %arg0, %c0_i32 : i32, i32
  }
  func.func @transform_3(%arg0: i32) -> (i32, i32) {
    %c0_i32 = arith.constant 0 : i32
    %c0_i32_0 = arith.constant 0 : i32
    %c0_i32_1 = arith.constant 0 : i32
    return %c0_i32, %c0_i32_0 : i32, i32
  }
  func.func @transform_4(%arg0: i32) -> (i32, i32) {
    %c0_i32 = arith.constant 0 : i32
    %c0_i32_0 = arith.constant 0 : i32
    return %arg0, %c0_i32 : i32, i32
  }
}

</mosaic_0001>

<llo_original>
// kernel: tpu_custom_call.1
$region0: #{tpu_custom_call.1}
  #allocation0 [shape = 'u32[]', space=smem, size = 0x4, offset = 0x4, fixed_abs, tag = 'smem constant byte address 0x4 - core index']
  #allocation1 [shape = 'u32[144,128]{1,0:T(1,128)}', space=vmem, size = 0x12000, scoped, tag = 'internal scratch']
  %s0 = inlined_call_operand.hbm [shape: f32[16,16], index: 0, kind: input, shape index: {}]
  %s1 = inlined_call_operand.vmem [shape: f32[3,16,8], index: 1, kind: input, shape index: {}]
  %s2 = inlined_call_operand.hbm [shape: f32[16,10], index: 2, kind: input, shape index: {}]
  %s3 = inlined_call_operand.hbm [shape: f32[1136,256], index: 3, kind: input, shape index: {}]
  %s4 = inlined_call_operand.hbm [shape: f32[16,20], index: 4, kind: output, shape index: {}]
  %s5 = sld [smem:[#allocation0]]
  $region38: #{tpu_custom_call.1} parent=0
    _
  %s7 = ssub.s32 1, %s5
  %s8 = scalar_select 0, %s7, %s5
  $region1: #{tpu_custom_call.1} parent=0
    #allocation2 [shape = 'u8[8192]{0}', space=vmem, size = 0x2000, scoped, tag = 'input window, operand 0, single buffered']
    #allocation3 [shape = 's32[1]{0}', space=sflag, size = 0x4, scoped, tag = 'scoped memory for tpu_custom_call.1']
    #allocation4 [shape = 's32[1]{0}', space=sflag, size = 0x4, scoped, tag = 'scoped memory for tpu_custom_call.1']
    #allocation5 [shape = 'u8[8192]{0}', space=vmem, size = 0x2000, scoped, tag = 'input window, operand 2, single buffered']
    #allocation6 [shape = 's32[1]{0}', space=sflag, size = 0x4, scoped, tag = 'scoped memory for tpu_custom_call.1']
    #allocation7 [shape = 'u8[1163264]{0}', space=vmem, size = 0x11c000, scoped, tag = 'input window, operand 3, single buffered']
    #allocation8 [shape = 'u8[8192]{0}', space=vmem, size = 0x2000, scoped, tag = 'output window, operand 0, single buffered']
    %9 = vsyncpa [#allocation3], 0
    %10 = vsyncpa [#allocation6], 0
    %11 = vsyncpa [#allocation4], 0
    // Predicated region
    $region2: #{tpu_custom_call.1} parent=1 // pred_check
      _
    $region3: #{tpu_custom_call.1} parent=1 // pred_check_branch
      %13 = sbr.rel (0) target = $region5
    $region4: #{tpu_custom_call.1} parent=1 // pred_region
      %s15 = ssub.s32 256, 256
      %16 = vsyncadd [#allocation3], %s15
      %s17 = sshll.u32 [#allocation2], 4
      %s18 = int_to_ptr.vmem [resolvable:$true] %s17
      %23 = dma.hbm_to_vmem [thread:$0]  %s0, 256, %s18, [#allocation3], 128, 128, 8
    $region5: #{tpu_custom_call.1} parent=1 // pred_fallthru
      _
    // Predicated region
    $region6: #{tpu_custom_call.1} parent=1 // pred_check
      _
    $region7: #{tpu_custom_call.1} parent=1 // pred_check_branch
      %25 = sbr.rel (0) target = $region9
    $region8: #{tpu_custom_call.1} parent=1 // pred_region
      _
    $region9: #{tpu_custom_call.1} parent=1 // pred_fallthru
      _
    // Predicated region
    $region10: #{tpu_custom_call.1} parent=1 // pred_check
      _
    $region11: #{tpu_custom_call.1} parent=1 // pred_check_branch
      %27 = sbr.rel (0) target = $region13
    $region12: #{tpu_custom_call.1} parent=1 // pred_region
      %s29 = ssub.s32 256, 256
      %30 = vsyncadd [#allocation6], %s29
      %s31 = sshll.u32 [#allocation5], 4
      %s32 = int_to_ptr.vmem [resolvable:$true] %s31
      %37 = dma.hbm_to_vmem [thread:$0]  %s2, 256, %s32, [#allocation6], 128, 128, 8
    $region13: #{tpu_custom_call.1} parent=1 // pred_fallthru
      _
    // Predicated region
    $region14: #{tpu_custom_call.1} parent=1 // pred_check
      _
    $region15: #{tpu_custom_call.1} parent=1 // pred_check_branch
      %39 = sbr.rel (0) target = $region17
    $region16: #{tpu_custom_call.1} parent=1 // pred_region
      %s41 = ssub.s32 36352, 36352
      %42 = vsyncadd [#allocation6], %s41
      %s43 = sshll.u32 [#allocation7], 4
      %s44 = int_to_ptr.vmem [resolvable:$true] %s43
      %49 = dma.hbm_to_vmem [thread:$0]  %s3, 36352, %s44, [#allocation6], 256, 256, 16
    $region17: #{tpu_custom_call.1} parent=1 // pred_fallthru
      _
    // Predicated region
    $region18: #{tpu_custom_call.1} parent=1 // pred_check
      _
    $region19: #{tpu_custom_call.1} parent=1 // pred_check_branch
      %51 = sbr.rel (0) target = $region21
    $region20: #{tpu_custom_call.1} parent=1 // pred_region
      %52 = dma.done [#allocation3], 256
    $region21: #{tpu_custom_call.1} parent=1 // pred_fallthru
      _
    // Predicated region
    $region22: #{tpu_custom_call.1} parent=1 // pred_check
      _
    $region23: #{tpu_custom_call.1} parent=1 // pred_check_branch
      %54 = sbr.rel (0) target = $region25
    $region24: #{tpu_custom_call.1} parent=1 // pred_region
      %55 = dma.done [#allocation6], 256
    $region25: #{tpu_custom_call.1} parent=1 // pred_fallthru
      _
    // Predicated region
    $region26: #{tpu_custom_call.1} parent=1 // pred_check
      _
    $region27: #{tpu_custom_call.1} parent=1 // pred_check_branch
      %57 = sbr.rel (0) target = $region29
    $region28: #{tpu_custom_call.1} parent=1 // pred_region
      %58 = dma.done [#allocation6], 36352
    $region29: #{tpu_custom_call.1} parent=1 // pred_fallthru
      _
    %v59 = vld [vmem:[#allocation2] sm:$0xff]
    %v60 = vld [vmem:[#allocation2 + $0x8] sm:$0xff]
    %v61 = vld [vmem:[%s1] sm:$0xff]
    %v62 = vld [vmem:[%s1 + $0x8] sm:$0xff]
    %v63 = vld [vmem:[%s1 + $0x10] sm:$0xff]
    %v64 = vld [vmem:[%s1 + $0x18] sm:$0xff]
    %v65 = vld [vmem:[%s1 + $0x20] sm:$0xff]
    %v66 = vld [vmem:[%s1 + $0x28] sm:$0xff]
    %v67 = vld [vmem:[#allocation7] sm:$0xff]
    %v68 = vld [vmem:[#allocation7 + $0x10] sm:$0xff]
    %v69 = vld [vmem:[#allocation7 + $0x20] sm:$0xff]
    %v70 = vld [vmem:[#allocation7 + $0x30] sm:$0xff]
    %v71 = vld [vmem:[#allocation7 + $0x40] sm:$0xff]
    %v72 = vld [vmem:[#allocation7 + $0x50] sm:$0xff]
    %v73 = vld [vmem:[#allocation7 + $0x60] sm:$0xff]
    %v74 = vld [vmem:[#allocation7 + $0x70] sm:$0xff]
    %v75 = vld [vmem:[#allocation7 + $0x80] sm:$0xff]
    %v76 = vld [vmem:[#allocation7 + $0x90] ss:$0 sm:$0xff]
    %vm77 = vcmask 64512
    %v79 = vsel %vm77, %v61, 0
    %v82 = vsel %vm77, %v62, 0
    %v85 = vsel %vm77, %v63, 0
    %v88 = vsel %vm77, %v64, 0
    %v91 = vsel %vm77, %v65, 0
    %v94 = vsel %vm77, %v66, 0
    %96 = vmatprep.subr.mxu0 0.0
    %97 = vmatpush1.msra.mxu0 0.0
    %98 = vmatprep.subr.mxu0 0.0
    %99 = vmatpush1.msra.mxu0 0.0
    %100 = vmatprep.subr.mxu0 0.0
    %101 = vmatpush1.msra.mxu0 0.0
    %102 = vmatprep.subr.mxu0 0.0
    %103 = vmatpush1.msra.mxu0 0.0
    %104 = vmatprep.subr.mxu0 0.0
    %105 = vmatpush1.msra.mxu0 0.0
    %106 = vmatprep.subr.mxu0 0.0
    %107 = vmatpush1.msra.mxu0 0.0
    %108 = vmatprep.subr.mxu0 0.0
    %109 = vmatpush1.msra.mxu0 0.0
    %110 = vmatprep.subr.mxu0 0.0
    %111 = vmatpush1.msra.mxu0 0.0
    %112 = vmatprep.subr.mxu0 0.0
    %113 = vmatpush1.msra.mxu0 0.0
    %114 = vmatprep.subr.mxu0 0.0
    %115 = vmatpush1.msra.mxu0 0.0
    %116 = vmatprep.subr.mxu0 0.0
    %117 = vmatpush1.msra.mxu0 0.0
    %118 = vmatprep.subr.mxu0 0.0
    %119 = vmatpush1.msra.mxu0 0.0
    %120 = vmatprep.subr.mxu0 0.0
    %121 = vmatpush1.msra.mxu0 0.0
    %122 = vmatprep.subr.mxu0 0.0
    %123 = vmatpush1.msra.mxu0 0.0
    %124 = vmatprep.subr.mxu0 0.0
    %125 = vmatpush1.msra.mxu0 0.0
    %126 = vmatprep.subr.mxu0 0.0
    %127 = vmatpush1.msra.mxu0 %v67
    %128 = vmatprep.subr.mxu0 0.0
    %129 = vmatpush2.msra.mxu0 0.0
    %130 = vmatprep.subr.mxu0 0.0
    %131 = vmatpush2.msra.mxu0 0.0
    %132 = vmatprep.subr.mxu0 0.0
    %133 = vmatpush2.msra.mxu0 0.0
    %134 = vmatprep.subr.mxu0 0.0
    %135 = vmatpush2.msra.mxu0 0.0
    %136 = vmatprep.subr.mxu0 0.0
    %137 = vmatpush2.msra.mxu0 0.0
    %138 = vmatprep.subr.mxu0 0.0
    %139 = vmatpush2.msra.mxu0 0.0
    %140 = vmatprep.subr.mxu0 0.0
    %141 = vmatpush2.msra.mxu0 0.0
    %142 = vmatprep.subr.mxu0 0.0
    %143 = vmatpush2.msra.mxu0 0.0
    %144 = vmatprep.subr.mxu0 0.0
    %145 = vmatpush2.msra.mxu0 0.0
    %146 = vmatprep.subr.mxu0 0.0
    %147 = vmatpush2.msra.mxu0 0.0
    %148 = vmatprep.subr.mxu0 0.0
    %149 = vmatpush2.msra.mxu0 0.0
    %150 = vmatprep.subr.mxu0 0.0
    %151 = vmatpush2.msra.mxu0 0.0
    %152 = vmatprep.subr.mxu0 0.0
    %153 = vmatpush2.msra.mxu0 0.0
    %154 = vmatprep.subr.mxu0 0.0
    %155 = vmatpush2.msra.mxu0 0.0
    %156 = vmatprep.subr.mxu0 0.0
    %157 = vmatpush2.msra.mxu0 0.0
    %158 = vmatprep.subr.mxu0 0.0
    %159 = vmatpush2.msra.mxu0 0.0
    %160 = vmatprep.mubr.f32.mxu0 0.0
    %161 = vmatmul.mubr.f32.gmra.mxu0 %v79
    %v162 = vpop.f32.mrf.mxu0
    %v163 = vadd.f32 0.0, %v162
    %v164 = vpop.f32.mrf.mxu0
    %165 = vmatprep.mubr.f32.mxu0 0.0
    %166 = vmatmul.mubr.f32.gmra.mxu0 %v82
    %v167 = vpop.f32.mrf.mxu0
    %v168 = vadd.f32 0.0, %v167
    %v169 = vpop.f32.mrf.mxu0
    %170 = vmatprep.mubr.f32.mxu0 0.0
    %171 = vmatmul.mubr.f32.gmra.mxu0 %v85
    %v172 = vpop.f32.mrf.mxu0
    %v173 = vadd.f32 0.0, %v172
    %v174 = vpop.f32.mrf.mxu0
    %175 = vmatprep.mubr.f32.mxu0 0.0
    %176 = vmatmul.mubr.f32.gmra.mxu0 %v88
    %v177 = vpop.f32.mrf.mxu0
    %v178 = vadd.f32 0.0, %v177
    %v179 = vpop.f32.mrf.mxu0
    %180 = vmatprep.mubr.f32.mxu0 0.0
    %181 = vmatmul.mubr.f32.gmra.mxu0 %v91
    %v182 = vpop.f32.mrf.mxu0
    %v183 = vadd.f32 0.0, %v182
    %v184 = vpop.f32.mrf.mxu0
    %185 = vmatprep.mubr.f32.mxu0 0.0
    %186 = vmatmul.mubr.f32.gmra.mxu0 %v94
    %v187 = vpop.f32.mrf.mxu0
    %v188 = vadd.f32 0.0, %v187
    %v189 = vpop.f32.mrf.mxu0
    %190 = vdwg.mxu0
    %v191 = vmul.f32 %v163, %v163
    %v192 = vmul.f32 %v168, %v168
    %v193 = vmul.f32 %v173, %v173
    %v194 = vmul.f32 %v178, %v178
    %v195 = vmul.f32 %v183, %v183
    %v196 = vmul.f32 %v188, %v188
    %v197 = vsel %vm77, %v191, 0.0
    %v198 = vsel %vm77, %v193, 0.0
    %v199 = vadd.f32 %v197, %v198
    %v200 = vsel %vm77, %v195, 0.0
    %v201 = vadd.f32 %v199, %v200
    %v202 = vsel %vm77, %v192, 0.0
    %v203 = vsel %vm77, %v194, 0.0
    %v204 = vadd.f32 %v202, %v203
    %v205 = vsel %vm77, %v196, 0.0
    %v206 = vadd.f32 %v204, %v205
    %v207 = vrsqrt.pop %v201
    %v208 = vmul.f32 %v201, %v207
    %vm209 = vcmp.eq.f32.partialorder %v201, inf
    %v210 = vsel %vm209, %v201, %v208
    %vm211 = vcmp.eq.f32.partialorder %v201, 0.0
    %v212 = vand.u32 %v201, 2147483648
    %v213 = vsel %vm211, %v212, %v210
    %v214 = vrsqrt.pop %v206
    %v215 = vmul.f32 %v206, %v214
    %vm216 = vcmp.eq.f32.partialorder %v206, inf
    %v217 = vsel %vm216, %v206, %v215
    %vm218 = vcmp.eq.f32.partialorder %v206, 0.0
    %v219 = vand.u32 %v206, 2147483648
    %v220 = vsel %vm218, %v219, %v217
    %vm221 = vcmask 130048
    %v223 = vsel %vm221, %v59, 0
    %v226 = vsel %vm221, %v60, 0
    %228 = vmatprep.subr.mxu0 0.0
    %229 = vmatpush1.msra.mxu0 0.0
    %230 = vmatprep.subr.mxu0 0.0
    %231 = vmatpush1.msra.mxu0 0.0
    %232 = vmatprep.subr.mxu0 0.0
    %233 = vmatpush1.msra.mxu0 0.0
    %234 = vmatprep.subr.mxu0 0.0
    %235 = vmatpush1.msra.mxu0 0.0
    %236 = vmatprep.subr.mxu0 0.0
    %237 = vmatpush1.msra.mxu0 0.0
    %238 = vmatprep.subr.mxu0 0.0
    %239 = vmatpush1.msra.mxu0 0.0
    %240 = vmatprep.subr.mxu0 0.0
    %241 = vmatpush1.msra.mxu0 0.0
    %242 = vmatprep.subr.mxu0 0.0
    %243 = vmatpush1.msra.mxu0 0.0
    %244 = vmatprep.subr.mxu0 0.0
    %245 = vmatpush1.msra.mxu0 0.0
    %246 = vmatprep.subr.mxu0 0.0
    %247 = vmatpush1.msra.mxu0 0.0
    %248 = vmatprep.subr.mxu0 0.0
    %249 = vmatpush1.msra.mxu0 0.0
    %250 = vmatprep.subr.mxu0 0.0
    %251 = vmatpush1.msra.mxu0 0.0
    %252 = vmatprep.subr.mxu0 0.0
    %253 = vmatpush1.msra.mxu0 0.0
    %254 = vmatprep.subr.mxu0 0.0
    %255 = vmatpush1.msra.mxu0 0.0
    %256 = vmatprep.subr.mxu0 0.0
    %257 = vmatpush1.msra.mxu0 %v71
    %258 = vmatprep.subr.mxu0 0.0
    %259 = vmatpush1.msra.mxu0 %v70
    %260 = vmatprep.subr.mxu0 0.0
    %261 = vmatpush2.msra.mxu0 0.0
    %262 = vmatprep.subr.mxu0 0.0
    %263 = vmatpush2.msra.mxu0 0.0
    %264 = vmatprep.subr.mxu0 0.0
    %265 = vmatpush2.msra.mxu0 0.0
    %266 = vmatprep.subr.mxu0 0.0
    %267 = vmatpush2.msra.mxu0 0.0
    %268 = vmatprep.subr.mxu0 0.0
    %269 = vmatpush2.msra.mxu0 0.0
    %270 = vmatprep.subr.mxu0 0.0
    %271 = vmatpush2.msra.mxu0 0.0
    %272 = vmatprep.subr.mxu0 0.0
    %273 = vmatpush2.msra.mxu0 0.0
    %274 = vmatprep.subr.mxu0 0.0
    %275 = vmatpush2.msra.mxu0 0.0
    %276 = vmatprep.subr.mxu0 0.0
    %277 = vmatpush2.msra.mxu0 0.0
    %278 = vmatprep.subr.mxu0 0.0
    %279 = vmatpush2.msra.mxu0 0.0
    %280 = vmatprep.subr.mxu0 0.0
    %281 = vmatpush2.msra.mxu0 0.0
    %282 = vmatprep.subr.mxu0 0.0
    %283 = vmatpush2.msra.mxu0 0.0
    %284 = vmatprep.subr.mxu0 0.0
    %285 = vmatpush2.msra.mxu0 0.0
    %286 = vmatprep.subr.mxu0 0.0
    %287 = vmatpush2.msra.mxu0 0.0
    %288 = vmatprep.subr.mxu0 0.0
    %289 = vmatpush2.msra.mxu0 0.0
    %290 = vmatprep.subr.mxu0 0.0
    %291 = vmatpush2.msra.mxu0 0.0
    %292 = vmatprep.mubr.f32.mxu0 0.0
    %293 = vmatmul.mubr.f32.gmra.mxu0 %v223
    %v294 = vpop.f32.mrf.mxu0
    %v295 = vadd.f32 0.0, %v294
    %v296 = vpop.f32.mrf.mxu0
    %297 = vmatprep.mubr.f32.mxu0 0.0
    %298 = vmatmul.mubr.f32.gmra.mxu0 %v226
    %v299 = vpop.f32.mrf.mxu0
    %v300 = vadd.f32 0.0, %v299
    %v301 = vpop.f32.mrf.mxu0
    %302 = vdwg.mxu0
    %v304 = vsel %vm77, %v213, 0
    %v307 = vsel %vm77, %v220, 0
    %309 = vmatprep.subr.mxu0 0.0
    %310 = vmatpush1.msra.mxu0 0.0
    %311 = vmatprep.subr.mxu0 0.0
    %312 = vmatpush1.msra.mxu0 0.0
    %313 = vmatprep.subr.mxu0 0.0
    %314 = vmatpush1.msra.mxu0 0.0
    %315 = vmatprep.subr.mxu0 0.0
    %316 = vmatpush1.msra.mxu0 0.0
    %317 = vmatprep.subr.mxu0 0.0
    %318 = vmatpush1.msra.mxu0 0.0
    %319 = vmatprep.subr.mxu0 0.0
    %320 = vmatpush1.msra.mxu0 0.0
    %321 = vmatprep.subr.mxu0 0.0
    %322 = vmatpush1.msra.mxu0 0.0
    %323 = vmatprep.subr.mxu0 0.0
    %324 = vmatpush1.msra.mxu0 0.0
    %325 = vmatprep.subr.mxu0 0.0
    %326 = vmatpush1.msra.mxu0 0.0
    %327 = vmatprep.subr.mxu0 0.0
    %328 = vmatpush1.msra.mxu0 0.0
    %329 = vmatprep.subr.mxu0 0.0
    %330 = vmatpush1.msra.mxu0 0.0
    %331 = vmatprep.subr.mxu0 0.0
    %332 = vmatpush1.msra.mxu0 0.0
    %333 = vmatprep.subr.mxu0 0.0
    %334 = vmatpush1.msra.mxu0 0.0
    %335 = vmatprep.subr.mxu0 0.0
    %336 = vmatpush1.msra.mxu0 0.0
    %337 = vmatprep.subr.mxu0 0.0
    %338 = vmatpush1.msra.mxu0 0.0
    %339 = vmatprep.subr.mxu0 0.0
    %340 = vmatpush1.msra.mxu0 %v69
    %341 = vmatprep.subr.mxu0 0.0
    %342 = vmatpush2.msra.mxu0 0.0
    %343 = vmatprep.subr.mxu0 0.0
    %344 = vmatpush2.msra.mxu0 0.0
    %345 = vmatprep.subr.mxu0 0.0
    %346 = vmatpush2.msra.mxu0 0.0
    %347 = vmatprep.subr.mxu0 0.0
    %348 = vmatpush2.msra.mxu0 0.0
    %349 = vmatprep.subr.mxu0 0.0
    %350 = vmatpush2.msra.mxu0 0.0
    %351 = vmatprep.subr.mxu0 0.0
    %352 = vmatpush2.msra.mxu0 0.0
    %353 = vmatprep.subr.mxu0 0.0
    %354 = vmatpush2.msra.mxu0 0.0
    %355 = vmatprep.subr.mxu0 0.0
    %356 = vmatpush2.msra.mxu0 0.0
    %357 = vmatprep.subr.mxu0 0.0
    %358 = vmatpush2.msra.mxu0 0.0
    %359 = vmatprep.subr.mxu0 0.0
    %360 = vmatpush2.msra.mxu0 0.0
    %361 = vmatprep.subr.mxu0 0.0
    %362 = vmatpush2.msra.mxu0 0.0
    %363 = vmatprep.subr.mxu0 0.0
    %364 = vmatpush2.msra.mxu0 0.0
    %365 = vmatprep.subr.mxu0 0.0
    %366 = vmatpush2.msra.mxu0 0.0
    %367 = vmatprep.subr.mxu0 0.0
    %368 = vmatpush2.msra.mxu0 0.0
    %369 = vmatprep.subr.mxu0 0.0
    %370 = vmatpush2.msra.mxu0 0.0
    %371 = vmatprep.subr.mxu0 0.0
    %372 = vmatpush2.msra.mxu0 0.0
    %373 = vmatprep.mubr.f32.mxu0 0.0
    %374 = vmatmul.mubr.f32.gmra.mxu0 %v304
    %v375 = vpop.f32.mrf.mxu0
    %v376 = vadd.f32 %v295, %v375
    %v377 = vpop.f32.mrf.mxu0
    %378 = vmatprep.mubr.f32.mxu0 0.0
    %379 = vmatmul.mubr.f32.gmra.mxu0 %v307
    %v380 = vpop.f32.mrf.mxu0
    %v381 = vadd.f32 %v300, %v380
    %v382 = vpop.f32.mrf.mxu0
    %383 = vdwg.mxu0
    %v385 = vsel %vm77, %v163, 0
    %v388 = vsel %vm77, %v168, 0
    %v391 = vsel %vm77, %v173, 0
    %v394 = vsel %vm77, %v178, 0
    %v397 = vsel %vm77, %v183, 0
    %v400 = vsel %vm77, %v188, 0
    %402 = vmatprep.subr.mxu0 0.0
    %403 = vmatpush1.msra.mxu0 0.0
    %404 = vmatprep.subr.mxu0 0.0
    %405 = vmatpush1.msra.mxu0 0.0
    %406 = vmatprep.subr.mxu0 0.0
    %407 = vmatpush1.msra.mxu0 0.0
    %408 = vmatprep.subr.mxu0 0.0
    %409 = vmatpush1.msra.mxu0 0.0
    %410 = vmatprep.subr.mxu0 0.0
    %411 = vmatpush1.msra.mxu0 0.0
    %412 = vmatprep.subr.mxu0 0.0
    %413 = vmatpush1.msra.mxu0 0.0
    %414 = vmatprep.subr.mxu0 0.0
    %415 = vmatpush1.msra.mxu0 0.0
    %416 = vmatprep.subr.mxu0 0.0
    %417 = vmatpush1.msra.mxu0 0.0
    %418 = vmatprep.subr.mxu0 0.0
    %419 = vmatpush1.msra.mxu0 0.0
    %420 = vmatprep.subr.mxu0 0.0
    %421 = vmatpush1.msra.mxu0 0.0
    %422 = vmatprep.subr.mxu0 0.0
    %423 = vmatpush1.msra.mxu0 0.0
    %424 = vmatprep.subr.mxu0 0.0
    %425 = vmatpush1.msra.mxu0 0.0
    %426 = vmatprep.subr.mxu0 0.0
    %427 = vmatpush1.msra.mxu0 0.0
    %428 = vmatprep.subr.mxu0 0.0
    %429 = vmatpush1.msra.mxu0 0.0
    %430 = vmatprep.subr.mxu0 0.0
    %431 = vmatpush1.msra.mxu0 0.0
    %432 = vmatprep.subr.mxu0 0.0
    %433 = vmatpush1.msra.mxu0 %v68
    %434 = vmatprep.subr.mxu0 0.0
    %435 = vmatpush2.msra.mxu0 0.0
    %436 = vmatprep.subr.mxu0 0.0
    %437 = vmatpush2.msra.mxu0 0.0
    %438 = vmatprep.subr.mxu0 0.0
    %439 = vmatpush2.msra.mxu0 0.0
    %440 = vmatprep.subr.mxu0 0.0
    %441 = vmatpush2.msra.mxu0 0.0
    %442 = vmatprep.subr.mxu0 0.0
    %443 = vmatpush2.msra.mxu0 0.0
    %444 = vmatprep.subr.mxu0 0.0
    %445 = vmatpush2.msra.mxu0 0.0
    %446 = vmatprep.subr.mxu0 0.0
    %447 = vmatpush2.msra.mxu0 0.0
    %448 = vmatprep.subr.mxu0 0.0
    %449 = vmatpush2.msra.mxu0 0.0
    %450 = vmatprep.subr.mxu0 0.0
    %451 = vmatpush2.msra.mxu0 0.0
    %452 = vmatprep.subr.mxu0 0.0
    %453 = vmatpush2.msra.mxu0 0.0
    %454 = vmatprep.subr.mxu0 0.0
    %455 = vmatpush2.msra.mxu0 0.0
    %456 = vmatprep.subr.mxu0 0.0
    %457 = vmatpush2.msra.mxu0 0.0
    %458 = vmatprep.subr.mxu0 0.0
    %459 = vmatpush2.msra.mxu0 0.0
    %460 = vmatprep.subr.mxu0 0.0
    %461 = vmatpush2.msra.mxu0 0.0
    %462 = vmatprep.subr.mxu0 0.0
    %463 = vmatpush2.msra.mxu0 0.0
    %464 = vmatprep.subr.mxu0 0.0
    %465 = vmatpush2.msra.mxu0 0.0
    %466 = vmatprep.mubr.f32.mxu0 0.0
    %467 = vmatmul.mubr.f32.gmra.mxu0 %v385
    %v468 = vpop.f32.mrf.mxu0
    %v469 = vadd.f32 0.0, %v468
    %v470 = vpop.f32.mrf.mxu0
    %471 = vmatprep.mubr.f32.mxu0 0.0
    %472 = vmatmul.mubr.f32.gmra.mxu0 %v388
    %v473 = vpop.f32.mrf.mxu0
    %v474 = vadd.f32 0.0, %v473
    %v475 = vpop.f32.mrf.mxu0
    %476 = vmatprep.mubr.f32.mxu0 0.0
    %477 = vmatmul.mubr.f32.gmra.mxu0 %v391
    %v478 = vpop.f32.mrf.mxu0
    %v479 = vadd.f32 0.0, %v478
    %v480 = vpop.f32.mrf.mxu0
    %481 = vmatprep.mubr.f32.mxu0 0.0
    %482 = vmatmul.mubr.f32.gmra.mxu0 %v394
    %v483 = vpop.f32.mrf.mxu0
    %v484 = vadd.f32 0.0, %v483
    %v485 = vpop.f32.mrf.mxu0
    %486 = vmatprep.mubr.f32.mxu0 0.0
    %487 = vmatmul.mubr.f32.gmra.mxu0 %v397
    %v488 = vpop.f32.mrf.mxu0
    %v489 = vadd.f32 0.0, %v488
    %v490 = vpop.f32.mrf.mxu0
    %491 = vmatprep.mubr.f32.mxu0 0.0
    %492 = vmatmul.mubr.f32.gmra.mxu0 %v400
    %v493 = vpop.f32.mrf.mxu0
    %v494 = vadd.f32 0.0, %v493
    %v495 = vpop.f32.mrf.mxu0
    %496 = vdwg.mxu0
    %vm497 = vcmask 261120
    %v499 = vsel %vm497, %v376, 0
    %v502 = vsel %vm497, %v381, 0
    %504 = vmatprep.subr.mxu0 0.0
    %505 = vmatpush1.msra.mxu0 0.0
    %506 = vmatprep.subr.mxu0 0.0
    %507 = vmatpush1.msra.mxu0 0.0
    %508 = vmatprep.subr.mxu0 0.0
    %509 = vmatpush1.msra.mxu0 0.0
    %510 = vmatprep.subr.mxu0 0.0
    %511 = vmatpush1.msra.mxu0 0.0
    %512 = vmatprep.subr.mxu0 0.0
    %513 = vmatpush1.msra.mxu0 0.0
    %514 = vmatprep.subr.mxu0 0.0
    %515 = vmatpush1.msra.mxu0 0.0
    %516 = vmatprep.subr.mxu0 0.0
    %517 = vmatpush1.msra.mxu0 0.0
    %518 = vmatprep.subr.mxu0 0.0
    %519 = vmatpush1.msra.mxu0 0.0
    %520 = vmatprep.subr.mxu0 0.0
    %521 = vmatpush1.msra.mxu0 0.0
    %522 = vmatprep.subr.mxu0 0.0
    %523 = vmatpush1.msra.mxu0 0.0
    %524 = vmatprep.subr.mxu0 0.0
    %525 = vmatpush1.msra.mxu0 0.0
    %526 = vmatprep.subr.mxu0 0.0
    %527 = vmatpush1.msra.mxu0 0.0
    %528 = vmatprep.subr.mxu0 0.0
    %529 = vmatpush1.msra.mxu0 %v75
    %530 = vmatprep.subr.mxu0 0.0
    %531 = vmatpush1.msra.mxu0 %v74
    %532 = vmatprep.subr.mxu0 0.0
    %533 = vmatpush1.msra.mxu0 %v73
    %534 = vmatprep.subr.mxu0 0.0
    %535 = vmatpush1.msra.mxu0 %v72
    %536 = vmatprep.subr.mxu0 0.0
    %537 = vmatpush2.msra.mxu0 0.0
    %538 = vmatprep.subr.mxu0 0.0
    %539 = vmatpush2.msra.mxu0 0.0
    %540 = vmatprep.subr.mxu0 0.0
    %541 = vmatpush2.msra.mxu0 0.0
    %542 = vmatprep.subr.mxu0 0.0
    %543 = vmatpush2.msra.mxu0 0.0
    %544 = vmatprep.subr.mxu0 0.0
    %545 = vmatpush2.msra.mxu0 0.0
    %546 = vmatprep.subr.mxu0 0.0
    %547 = vmatpush2.msra.mxu0 0.0
    %548 = vmatprep.subr.mxu0 0.0
    %549 = vmatpush2.msra.mxu0 0.0
    %550 = vmatprep.subr.mxu0 0.0
    %551 = vmatpush2.msra.mxu0 0.0
    %552 = vmatprep.subr.mxu0 0.0
    %553 = vmatpush2.msra.mxu0 0.0
    %554 = vmatprep.subr.mxu0 0.0
    %555 = vmatpush2.msra.mxu0 0.0
    %556 = vmatprep.subr.mxu0 0.0
    %557 = vmatpush2.msra.mxu0 0.0
    %558 = vmatprep.subr.mxu0 0.0
    %559 = vmatpush2.msra.mxu0 0.0
    %560 = vmatprep.subr.mxu0 0.0
    %561 = vmatpush2.msra.mxu0 0.0
    %562 = vmatprep.subr.mxu0 0.0
    %563 = vmatpush2.msra.mxu0 0.0
    %564 = vmatprep.subr.mxu0 0.0
    %565 = vmatpush2.msra.mxu0 0.0
    %566 = vmatprep.subr.mxu0 0.0
    %567 = vmatpush2.msra.mxu0 0.0
    %568 = vmatprep.mubr.f32.mxu0 0.0
    %569 = vmatmul.mubr.f32.gmra.mxu0 %v499
    %v570 = vpop.f32.mrf.mxu0
    %v571 = vadd.f32 %v76, %v570
    %v572 = vpop.f32.mrf.mxu0
    %573 = vmatprep.mubr.f32.mxu0 0.0
    %574 = vmatmul.mubr.f32.gmra.mxu0 %v502
    %v575 = vpop.f32.mrf.mxu0
    %v576 = vadd.f32 %v76, %v575
    %v577 = vpop.f32.mrf.mxu0
    %578 = vdwg.mxu0
    %v579 = vxor.u32 %v571, 2147483648
    %v580 = vxor.u32 %v576, 2147483648
    %v581 = vmul.f32 %v579, 1.442695
    %v582 = vpow.pop %v581
    %v583 = vmul.f32 %v580, 1.442695
    %v584 = vpow.pop %v583
    %v585 = vadd.f32 %v582, 1.0
    %v586 = vadd.f32 %v584, 1.0
    %v587 = vrcp.pop %v585
    %v588 = vmul.f32 1.0, %v587
    %v589 = vrcp.pop %v586
    %v590 = vmul.f32 1.0, %v589
    %v591 = vmul.f32 %v469, %v588
    %v592 = vmul.f32 %v474, %v590
    %v593 = vmul.f32 %v479, %v588
    %v594 = vmul.f32 %v484, %v590
    %v595 = vmul.f32 %v489, %v588
    %v596 = vmul.f32 %v494, %v590
    %v597 = vld [vmem:[#allocation7 + $0xa0] sm:$0xff]
    %v598 = vld [vmem:[#allocation7 + $0xb0] sm:$0xff]
    %v600 = vsel %vm221, %v591, 0
    %v603 = vsel %vm221, %v592, 0
    %v606 = vsel %vm221, %v593, 0
    %v609 = vsel %vm221, %v594, 0
    %v612 = vsel %vm221, %v595, 0
    %v615 = vsel %vm221, %v596, 0
    %617 = vmatprep.subr.mxu0 0.0
    %618 = vmatpush1.msra.mxu0 0.0
    %619 = vmatprep.subr.mxu0 0.0
    %620 = vmatpush1.msra.mxu0 0.0
    %621 = vmatprep.subr.mxu0 0.0
    %622 = vmatpush1.msra.mxu0 0.0
    %623 = vmatprep.subr.mxu0 0.0
    %624 = vmatpush1.msra.mxu0 0.0
    %625 = vmatprep.subr.mxu0 0.0
    %626 = vmatpush1.msra.mxu0 0.0
    %627 = vmatprep.subr.mxu0 0.0
    %628 = vmatpush1.msra.mxu0 0.0
    %629 = vmatprep.subr.mxu0 0.0
    %630 = vmatpush1.msra.mxu0 0.0
    %631 = vmatprep.subr.mxu0 0.0
    %632 = vmatpush1.msra.mxu0 0.0
    %633 = vmatprep.subr.mxu0 0.0
    %634 = vmatpush1.msra.mxu0 0.0
    %635 = vmatprep.subr.mxu0 0.0
    %636 = vmatpush1.msra.mxu0 0.0
    %637 = vmatprep.subr.mxu0 0.0
    %638 = vmatpush1.msra.mxu0 0.0
    %639 = vmatprep.subr.mxu0 0.0
    %640 = vmatpush1.msra.mxu0 0.0
    %641 = vmatprep.subr.mxu0 0.0
    %642 = vmatpush1.msra.mxu0 0.0
    %643 = vmatprep.subr.mxu0 0.0
    %644 = vmatpush1.msra.mxu0 0.0
    %645 = vmatprep.subr.mxu0 0.0
    %646 = vmatpush1.msra.mxu0 %v598
    %647 = vmatprep.subr.mxu0 0.0
    %648 = vmatpush1.msra.mxu0 %v597
    %649 = vmatprep.subr.mxu0 0.0
    %650 = vmatpush2.msra.mxu0 0.0
    %651 = vmatprep.subr.mxu0 0.0
    %652 = vmatpush2.msra.mxu0 0.0
    %653 = vmatprep.subr.mxu0 0.0
    %654 = vmatpush2.msra.mxu0 0.0
    %655 = vmatprep.subr.mxu0 0.0
    %656 = vmatpush2.msra.mxu0 0.0
    %657 = vmatprep.subr.mxu0 0.0
    %658 = vmatpush2.msra.mxu0 0.0
    %659 = vmatprep.subr.mxu0 0.0
    %660 = vmatpush2.msra.mxu0 0.0
    %661 = vmatprep.subr.mxu0 0.0
    %662 = vmatpush2.msra.mxu0 0.0
    %663 = vmatprep.subr.mxu0 0.0
    %664 = vmatpush2.msra.mxu0 0.0
    %665 = vmatprep.subr.mxu0 0.0
    %666 = vmatpush2.msra.mxu0 0.0
    %667 = vmatprep.subr.mxu0 0.0
    %668 = vmatpush2.msra.mxu0 0.0
    %669 = vmatprep.subr.mxu0 0.0
    %670 = vmatpush2.msra.mxu0 0.0
    %671 = vmatprep.subr.mxu0 0.0
    %672 = vmatpush2.msra.mxu0 0.0
    %673 = vmatprep.subr.mxu0 0.0
    %674 = vmatpush2.msra.mxu0 0.0
    %675 = vmatprep.subr.mxu0 0.0
    %676 = vmatpush2.msra.mxu0 0.0
    %677 = vmatprep.subr.mxu0 0.0
    %678 = vmatpush2.msra.mxu0 0.0
    %679 = vmatprep.subr.mxu0 0.0
    %680 = vmatpush2.msra.mxu0 0.0
    %681 = vmatprep.mubr.f32.mxu0 0.0
    %682 = vmatmul.mubr.f32.gmra.mxu0 %v600
    %v683 = vpop.f32.mrf.mxu0
    %v684 = vadd.f32 0.0, %v683
    %v685 = vpop.f32.mrf.mxu0
    %686 = vmatprep.mubr.f32.mxu0 0.0
    %687 = vmatmul.mubr.f32.gmra.mxu0 %v603
    %v688 = vpop.f32.mrf.mxu0
    %v689 = vadd.f32 0.0, %v688
    %v690 = vpop.f32.mrf.mxu0
    %691 = vmatprep.mubr.f32.mxu0 0.0
    %692 = vmatmul.mubr.f32.gmra.mxu0 %v606
    %v693 = vpop.f32.mrf.mxu0
    %v694 = vadd.f32 0.0, %v693
    %v695 = vpop.f32.mrf.mxu0
    %696 = vmatprep.mubr.f32.mxu0 0.0
    %697 = vmatmul.mubr.f32.gmra.mxu0 %v609
    %v698 = vpop.f32.mrf.mxu0
    %v699 = vadd.f32 0.0, %v698
    %v700 = vpop.f32.mrf.mxu0
    %701 = vmatprep.mubr.f32.mxu0 0.0
    %702 = vmatmul.mubr.f32.gmra.mxu0 %v612
    %v703 = vpop.f32.mrf.mxu0
    %v704 = vadd.f32 0.0, %v703
    %v705 = vpop.f32.mrf.mxu0
    %706 = vmatprep.mubr.f32.mxu0 0.0
    %707 = vmatmul.mubr.f32.gmra.mxu0 %v615
    %v708 = vpop.f32.mrf.mxu0
    %v709 = vadd.f32 0.0, %v708
    %v710 = vpop.f32.mrf.mxu0
    %711 = vdwg.mxu0
    %v712 = vmul.f32 %v591, %v684
    %v713 = vmul.f32 %v592, %v689
    %v714 = vmul.f32 %v593, %v694
    %v715 = vmul.f32 %v594, %v699
    %v716 = vmul.f32 %v595, %v704
    %v717 = vmul.f32 %v596, %v709
    %v718 = vsel %vm221, %v712, 0.0
    %v719 = vsel %vm221, %v714, 0.0
    %v720 = vadd.f32 %v718, %v719
    %v721 = vsel %vm221, %v716, 0.0
    %v722 = vadd.f32 %v720, %v721
    %v723 = vsel %vm221, %v713, 0.0
    %v724 = vsel %vm221, %v715, 0.0
    %v725 = vadd.f32 %v723, %v724
    %v726 = vsel %vm221, %v717, 0.0
    %v727 = vadd.f32 %v725, %v726
    %v728 = vmul.f32 %v684, %v684
    %v729 = vmul.f32 %v689, %v689
    %v730 = vmul.f32 %v694, %v694
    %v731 = vmul.f32 %v699, %v699
    %v732 = vmul.f32 %v704, %v704
    %v733 = vmul.f32 %v709, %v709
    %v734 = vsel %vm221, %v728, 0.0
    %v735 = vsel %vm221, %v730, 0.0
    %v736 = vadd.f32 %v734, %v735
    %v737 = vsel %vm221, %v732, 0.0
    %v738 = vadd.f32 %v736, %v737
    %v739 = vsel %vm221, %v729, 0.0
    %v740 = vsel %vm221, %v731, 0.0
    %v741 = vadd.f32 %v739, %v740
    %v742 = vsel %vm221, %v733, 0.0
    %v743 = vadd.f32 %v741, %v742
    %v744 = vadd.f32 %v738, 1e-06
    %v745 = vadd.f32 %v743, 1e-06
    %v746 = vrcp.pop %v744
    %v747 = vmul.f32 %v722, %v746
    %v748 = vrcp.pop %v745
    %v749 = vmul.f32 %v727, %v748
    %vm750 = vcmp.ge.f32.partialorder %v722, 0.0
    %vm751 = vcmp.ge.f32.partialorder %v727, 0.0
    %v752 = vmul.f32 %v591, 0.2
    %v753 = vmul.f32 %v592, 0.2
    %v754 = vmul.f32 %v593, 0.2
    %v755 = vmul.f32 %v594, 0.2
    %v756 = vmul.f32 %v595, 0.2
    %v757 = vmul.f32 %v596, 0.2
    %v758 = vmul.f32 %v747, %v684
    %v759 = vmul.f32 %v749, %v689
    %v760 = vmul.f32 %v747, %v694
    %v761 = vmul.f32 %v749, %v699
    %v762 = vmul.f32 %v747, %v704
    %v763 = vmul.f32 %v749, %v709
    %v764 = vsub.f32 %v591, %v758
    %v765 = vsub.f32 %v592, %v759
    %v766 = vsub.f32 %v593, %v760
    %v767 = vsub.f32 %v594, %v761
    %v768 = vsub.f32 %v595, %v762
    %v769 = vsub.f32 %v596, %v763
    %v770 = vsel %vm750, 1, 0
    %v771 = vsel %vm751, 1, 0
    %vm772 = vcmp.eq.s32.totalorder %v770, 1
    %vm773 = vcmp.eq.s32.totalorder %v771, 1
    %v774 = vsel %vm772, %v591, %v764
    %v775 = vsel %vm773, %v592, %v765
    %v776 = vsel %vm772, %v593, %v766
    %v777 = vsel %vm773, %v594, %v767
    %v778 = vsel %vm772, %v595, %v768
    %v779 = vsel %vm773, %v596, %v769
    %v780 = vmul.f32 %v774, 0.8
    %v781 = vmul.f32 %v775, 0.8
    %v782 = vmul.f32 %v776, 0.8
    %v783 = vmul.f32 %v777, 0.8
    %v784 = vmul.f32 %v778, 0.8
    %v785 = vmul.f32 %v779, 0.8
    %v786 = vadd.f32 %v752, %v780
    %v787 = vadd.f32 %v753, %v781
    %v788 = vadd.f32 %v754, %v782
    %v789 = vadd.f32 %v755, %v783
    %v790 = vadd.f32 %v756, %v784
    %v791 = vadd.f32 %v757, %v785
    %vm792 = vcmp.ge.f32.partialorder %v376, 0.0
    %vm793 = vcmp.ge.f32.partialorder %v381, 0.0
    %v794 = vmul.f32 %v376, 0.01
    %v795 = vmul.f32 %v381, 0.01
    %v796 = vsel %vm792, %v376, %v794
    %v797 = vsel %vm793, %v381, %v795
    %v798 = vld [vmem:[#allocation7 + $0xc0] sm:$0xff]
    %v799 = vld [vmem:[#allocation7 + $0xd0] sm:$0xff]
    %v800 = vld [vmem:[#allocation7 + $0xe0] sm:$0xff]
    %v801 = vld [vmem:[#allocation7 + $0xf0] sm:$0xff]
    %v802 = vld [vmem:[#allocation7 + $0x100] sm:$0xff]
    %v803 = vld [vmem:[#allocation7 + $0x110] sm:$0xff]
    %v804 = vld [vmem:[#allocation7 + $0x120] sm:$0xff]
    %v805 = vld [vmem:[#allocation7 + $0x130] sm:$0xff]
    %v806 = vld [vmem:[#allocation7 + $0x140] sm:$0xff]
    %v807 = vld [vmem:[#allocation7 + $0x150] sm:$0xff]
    %v808 = vld [vmem:[#allocation7 + $0x160] sm:$0xff]
    %v809 = vld [vmem:[#allocation7 + $0x170] sm:$0xff]
    %v810 = vld [vmem:[#allocation7 + $0x180] sm:$0xff]
    %v811 = vld [vmem:[#allocation7 + $0x190] sm:$0xff]
    %v812 = vld [vmem:[#allocation7 + $0x1a0] ss:$0 sm:$0xff]
    %v814 = vsel %vm221, %v786, 0
    %v817 = vsel %vm221, %v787, 0
    %v820 = vsel %vm221, %v788, 0
    %v823 = vsel %vm221, %v789, 0
    %v826 = vsel %vm221, %v790, 0
    %v829 = vsel %vm221, %v791, 0
    %831 = vmatprep.subr.mxu0 0.0
    %832 = vmatpush1.msra.mxu0 0.0
    %833 = vmatprep.subr.mxu0 0.0
    %834 = vmatpush1.msra.mxu0 0.0
    %835 = vmatprep.subr.mxu0 0.0
    %836 = vmatpush1.msra.mxu0 0.0
    %837 = vmatprep.subr.mxu0 0.0
    %838 = vmatpush1.msra.mxu0 0.0
    %839 = vmatprep.subr.mxu0 0.0
    %840 = vmatpush1.msra.mxu0 0.0
    %841 = vmatprep.subr.mxu0 0.0
    %842 = vmatpush1.msra.mxu0 0.0
    %843 = vmatprep.subr.mxu0 0.0
    %844 = vmatpush1.msra.mxu0 0.0
    %845 = vmatprep.subr.mxu0 0.0
    %846 = vmatpush1.msra.mxu0 0.0
    %847 = vmatprep.subr.mxu0 0.0
    %848 = vmatpush1.msra.mxu0 0.0
    %849 = vmatprep.subr.mxu0 0.0
    %850 = vmatpush1.msra.mxu0 0.0
    %851 = vmatprep.subr.mxu0 0.0
    %852 = vmatpush1.msra.mxu0 0.0
    %853 = vmatprep.subr.mxu0 0.0
    %854 = vmatpush1.msra.mxu0 0.0
    %855 = vmatprep.subr.mxu0 0.0
    %856 = vmatpush1.msra.mxu0 0.0
    %857 = vmatprep.subr.mxu0 0.0
    %858 = vmatpush1.msra.mxu0 0.0
    %859 = vmatprep.subr.mxu0 0.0
    %860 = vmatpush1.msra.mxu0 %v799
    %861 = vmatprep.subr.mxu0 0.0
    %862 = vmatpush1.msra.mxu0 %v798
    %863 = vmatprep.subr.mxu0 0.0
    %864 = vmatpush2.msra.mxu0 0.0
    %865 = vmatprep.subr.mxu0 0.0
    %866 = vmatpush2.msra.mxu0 0.0
    %867 = vmatprep.subr.mxu0 0.0
    %868 = vmatpush2.msra.mxu0 0.0
    %869 = vmatprep.subr.mxu0 0.0
    %870 = vmatpush2.msra.mxu0 0.0
    %871 = vmatprep.subr.mxu0 0.0
    %872 = vmatpush2.msra.mxu0 0.0
    %873 = vmatprep.subr.mxu0 0.0
    %874 = vmatpush2.msra.mxu0 0.0
    %875 = vmatprep.subr.mxu0 0.0
    %876 = vmatpush2.msra.mxu0 0.0
    %877 = vmatprep.subr.mxu0 0.0
    %878 = vmatpush2.msra.mxu0 0.0
    %879 = vmatprep.subr.mxu0 0.0
    %880 = vmatpush2.msra.mxu0 0.0
    %881 = vmatprep.subr.mxu0 0.0
    %882 = vmatpush2.msra.mxu0 0.0
    %883 = vmatprep.subr.mxu0 0.0
    %884 = vmatpush2.msra.mxu0 0.0
    %885 = vmatprep.subr.mxu0 0.0
    %886 = vmatpush2.msra.mxu0 0.0
    %887 = vmatprep.subr.mxu0 0.0
    %888 = vmatpush2.msra.mxu0 0.0
    %889 = vmatprep.subr.mxu0 0.0
    %890 = vmatpush2.msra.mxu0 0.0
    %891 = vmatprep.subr.mxu0 0.0
    %892 = vmatpush2.msra.mxu0 0.0
    %893 = vmatprep.subr.mxu0 0.0
    %894 = vmatpush2.msra.mxu0 0.0
    %895 = vmatprep.mubr.f32.mxu0 0.0
    %896 = vmatmul.mubr.f32.gmra.mxu0 %v814
    %v897 = vpop.f32.mrf.mxu0
    %v898 = vadd.f32 0.0, %v897
    %v899 = vpop.f32.mrf.mxu0
    %900 = vmatprep.mubr.f32.mxu0 0.0
    %901 = vmatmul.mubr.f32.gmra.mxu0 %v817
    %v902 = vpop.f32.mrf.mxu0
    %v903 = vadd.f32 0.0, %v902
    %v904 = vpop.f32.mrf.mxu0
    %905 = vmatprep.mubr.f32.mxu0 0.0
    %906 = vmatmul.mubr.f32.gmra.mxu0 %v820
    %v907 = vpop.f32.mrf.mxu0
    %v908 = vadd.f32 0.0, %v907
    %v909 = vpop.f32.mrf.mxu0
    %910 = vmatprep.mubr.f32.mxu0 0.0
    %911 = vmatmul.mubr.f32.gmra.mxu0 %v823
    %v912 = vpop.f32.mrf.mxu0
    %v913 = vadd.f32 0.0, %v912
    %v914 = vpop.f32.mrf.mxu0
    %915 = vmatprep.mubr.f32.mxu0 0.0
    %916 = vmatmul.mubr.f32.gmra.mxu0 %v826
    %v917 = vpop.f32.mrf.mxu0
    %v918 = vadd.f32 0.0, %v917
    %v919 = vpop.f32.mrf.mxu0
    %920 = vmatprep.mubr.f32.mxu0 0.0
    %921 = vmatmul.mubr.f32.gmra.mxu0 %v829
    %v922 = vpop.f32.mrf.mxu0
    %v923 = vadd.f32 0.0, %v922
    %v924 = vpop.f32.mrf.mxu0
    %925 = vdwg.mxu0
    %v926 = vmul.f32 %v898, %v898
    %v927 = vmul.f32 %v903, %v903
    %v928 = vmul.f32 %v908, %v908
    %v929 = vmul.f32 %v913, %v913
    %v930 = vmul.f32 %v918, %v918
    %v931 = vmul.f32 %v923, %v923
    %v932 = vsel %vm221, %v926, 0.0
    %v933 = vsel %vm221, %v928, 0.0
    %v934 = vadd.f32 %v932, %v933
    %v935 = vsel %vm221, %v930, 0.0
    %v936 = vadd.f32 %v934, %v935
    %v937 = vsel %vm221, %v927, 0.0
    %v938 = vsel %vm221, %v929, 0.0
    %v939 = vadd.f32 %v937, %v938
    %v940 = vsel %vm221, %v931, 0.0
    %v941 = vadd.f32 %v939, %v940
    %v942 = vrsqrt.pop %v936
    %v943 = vmul.f32 %v936, %v942
    %vm944 = vcmp.eq.f32.partialorder %v936, inf
    %v945 = vsel %vm944, %v936, %v943
    %vm946 = vcmp.eq.f32.partialorder %v936, 0.0
    %v947 = vand.u32 %v936, 2147483648
    %v948 = vsel %vm946, %v947, %v945
    %v949 = vrsqrt.pop %v941
    %v950 = vmul.f32 %v941, %v949
    %vm951 = vcmp.eq.f32.partialorder %v941, inf
    %v952 = vsel %vm951, %v941, %v950
    %vm953 = vcmp.eq.f32.partialorder %v941, 0.0
    %v954 = vand.u32 %v941, 2147483648
    %v955 = vsel %vm953, %v954, %v952
    %v957 = vsel %vm497, %v796, 0
    %v960 = vsel %vm497, %v797, 0
    %962 = vmatprep.subr.mxu0 0.0
    %963 = vmatpush1.msra.mxu0 0.0
    %964 = vmatprep.subr.mxu0 0.0
    %965 = vmatpush1.msra.mxu0 0.0
    %966 = vmatprep.subr.mxu0 0.0
    %967 = vmatpush1.msra.mxu0 0.0
    %968 = vmatprep.subr.mxu0 0.0
    %969 = vmatpush1.msra.mxu0 0.0
    %970 = vmatprep.subr.mxu0 0.0
    %971 = vmatpush1.msra.mxu0 0.0
    %972 = vmatprep.subr.mxu0 0.0
    %973 = vmatpush1.msra.mxu0 0.0
    %974 = vmatprep.subr.mxu0 0.0
    %975 = vmatpush1.msra.mxu0 0.0
    %976 = vmatprep.subr.mxu0 0.0
    %977 = vmatpush1.msra.mxu0 0.0
    %978 = vmatprep.subr.mxu0 0.0
    %979 = vmatpush1.msra.mxu0 0.0
    %980 = vmatprep.subr.mxu0 0.0
    %981 = vmatpush1.msra.mxu0 0.0
    %982 = vmatprep.subr.mxu0 0.0
    %983 = vmatpush1.msra.mxu0 0.0
    %984 = vmatprep.subr.mxu0 0.0
    %985 = vmatpush1.msra.mxu0 0.0
    %986 = vmatprep.subr.mxu0 0.0
    %987 = vmatpush1.msra.mxu0 %v807
    %988 = vmatprep.subr.mxu0 0.0
    %989 = vmatpush1.msra.mxu0 %v806
    %990 = vmatprep.subr.mxu0 0.0
    %991 = vmatpush1.msra.mxu0 %v805
    %992 = vmatprep.subr.mxu0 0.0
    %993 = vmatpush1.msra.mxu0 %v804
    %994 = vmatprep.subr.mxu0 0.0
    %995 = vmatpush2.msra.mxu0 0.0
    %996 = vmatprep.subr.mxu0 0.0
    %997 = vmatpush2.msra.mxu0 0.0
    %998 = vmatprep.subr.mxu0 0.0
    %999 = vmatpush2.msra.mxu0 0.0
    %1000 = vmatprep.subr.mxu0 0.0
    %1001 = vmatpush2.msra.mxu0 0.0
    %1002 = vmatprep.subr.mxu0 0.0
    %1003 = vmatpush2.msra.mxu0 0.0
    %1004 = vmatprep.subr.mxu0 0.0
    %1005 = vmatpush2.msra.mxu0 0.0
    %1006 = vmatprep.subr.mxu0 0.0
    %1007 = vmatpush2.msra.mxu0 0.0
    %1008 = vmatprep.subr.mxu0 0.0
    %1009 = vmatpush2.msra.mxu0 0.0
    %1010 = vmatprep.subr.mxu0 0.0
    %1011 = vmatpush2.msra.mxu0 0.0
    %1012 = vmatprep.subr.mxu0 0.0
    %1013 = vmatpush2.msra.mxu0 0.0
    %1014 = vmatprep.subr.mxu0 0.0
    %1015 = vmatpush2.msra.mxu0 0.0
    %1016 = vmatprep.subr.mxu0 0.0
    %1017 = vmatpush2.msra.mxu0 0.0
    %1018 = vmatprep.subr.mxu0 0.0
    %1019 = vmatpush2.msra.mxu0 0.0
    %1020 = vmatprep.subr.mxu0 0.0
    %1021 = vmatpush2.msra.mxu0 0.0
    %1022 = vmatprep.subr.mxu0 0.0
    %1023 = vmatpush2.msra.mxu0 0.0
    %1024 = vmatprep.subr.mxu0 0.0
    %1025 = vmatpush2.msra.mxu0 0.0
    %1026 = vmatprep.mubr.f32.mxu0 0.0
    %1027 = vmatmul.mubr.f32.gmra.mxu0 %v957
    %v1028 = vpop.f32.mrf.mxu0
    %v1029 = vadd.f32 0.0, %v1028
    %v1030 = vpop.f32.mrf.mxu0
    %1031 = vmatprep.mubr.f32.mxu0 0.0
    %1032 = vmatmul.mubr.f32.gmra.mxu0 %v960
    %v1033 = vpop.f32.mrf.mxu0
    %v1034 = vadd.f32 0.0, %v1033
    %v1035 = vpop.f32.mrf.mxu0
    %1036 = vdwg.mxu0
    %v1038 = vsel %vm221, %v948, 0
    %v1041 = vsel %vm221, %v955, 0
    %1043 = vmatprep.subr.mxu0 0.0
    %1044 = vmatpush1.msra.mxu0 0.0
    %1045 = vmatprep.subr.mxu0 0.0
    %1046 = vmatpush1.msra.mxu0 0.0
    %1047 = vmatprep.subr.mxu0 0.0
    %1048 = vmatpush1.msra.mxu0 0.0
    %1049 = vmatprep.subr.mxu0 0.0
    %1050 = vmatpush1.msra.mxu0 0.0
    %1051 = vmatprep.subr.mxu0 0.0
    %1052 = vmatpush1.msra.mxu0 0.0
    %1053 = vmatprep.subr.mxu0 0.0
    %1054 = vmatpush1.msra.mxu0 0.0
    %1055 = vmatprep.subr.mxu0 0.0
    %1056 = vmatpush1.msra.mxu0 0.0
    %1057 = vmatprep.subr.mxu0 0.0
    %1058 = vmatpush1.msra.mxu0 0.0
    %1059 = vmatprep.subr.mxu0 0.0
    %1060 = vmatpush1.msra.mxu0 0.0
    %1061 = vmatprep.subr.mxu0 0.0
    %1062 = vmatpush1.msra.mxu0 0.0
    %1063 = vmatprep.subr.mxu0 0.0
    %1064 = vmatpush1.msra.mxu0 0.0
    %1065 = vmatprep.subr.mxu0 0.0
    %1066 = vmatpush1.msra.mxu0 0.0
    %1067 = vmatprep.subr.mxu0 0.0
    %1068 = vmatpush1.msra.mxu0 0.0
    %1069 = vmatprep.subr.mxu0 0.0
    %1070 = vmatpush1.msra.mxu0 0.0
    %1071 = vmatprep.subr.mxu0 0.0
    %1072 = vmatpush1.msra.mxu0 %v803
    %1073 = vmatprep.subr.mxu0 0.0
    %1074 = vmatpush1.msra.mxu0 %v802
    %1075 = vmatprep.subr.mxu0 0.0
    %1076 = vmatpush2.msra.mxu0 0.0
    %1077 = vmatprep.subr.mxu0 0.0
    %1078 = vmatpush2.msra.mxu0 0.0
    %1079 = vmatprep.subr.mxu0 0.0
    %1080 = vmatpush2.msra.mxu0 0.0
    %1081 = vmatprep.subr.mxu0 0.0
    %1082 = vmatpush2.msra.mxu0 0.0
    %1083 = vmatprep.subr.mxu0 0.0
    %1084 = vmatpush2.msra.mxu0 0.0
    %1085 = vmatprep.subr.mxu0 0.0
    %1086 = vmatpush2.msra.mxu0 0.0
    %1087 = vmatprep.subr.mxu0 0.0
    %1088 = vmatpush2.msra.mxu0 0.0
    %1089 = vmatprep.subr.mxu0 0.0
    %1090 = vmatpush2.msra.mxu0 0.0
    %1091 = vmatprep.subr.mxu0 0.0
    %1092 = vmatpush2.msra.mxu0 0.0
    %1093 = vmatprep.subr.mxu0 0.0
    %1094 = vmatpush2.msra.mxu0 0.0
    %1095 = vmatprep.subr.mxu0 0.0
    %1096 = vmatpush2.msra.mxu0 0.0
    %1097 = vmatprep.subr.mxu0 0.0
    %1098 = vmatpush2.msra.mxu0 0.0
    %1099 = vmatprep.subr.mxu0 0.0
    %1100 = vmatpush2.msra.mxu0 0.0
    %1101 = vmatprep.subr.mxu0 0.0
    %1102 = vmatpush2.msra.mxu0 0.0
    %1103 = vmatprep.subr.mxu0 0.0
    %1104 = vmatpush2.msra.mxu0 0.0
    %1105 = vmatprep.subr.mxu0 0.0
    %1106 = vmatpush2.msra.mxu0 0.0
    %1107 = vmatprep.mubr.f32.mxu0 0.0
    %1108 = vmatmul.mubr.f32.gmra.mxu0 %v1038
    %v1109 = vpop.f32.mrf.mxu0
    %v1110 = vadd.f32 %v1029, %v1109
    %v1111 = vpop.f32.mrf.mxu0
    %1112 = vmatprep.mubr.f32.mxu0 0.0
    %1113 = vmatmul.mubr.f32.gmra.mxu0 %v1041
    %v1114 = vpop.f32.mrf.mxu0
    %v1115 = vadd.f32 %v1034, %v1114
    %v1116 = vpop.f32.mrf.mxu0
    %1117 = vdwg.mxu0
    %v1119 = vsel %vm221, %v898, 0
    %v1122 = vsel %vm221, %v903, 0
    %v1125 = vsel %vm221, %v908, 0
    %v1128 = vsel %vm221, %v913, 0
    %v1131 = vsel %vm221, %v918, 0
    %v1134 = vsel %vm221, %v923, 0
    %1136 = vmatprep.subr.mxu0 0.0
    %1137 = vmatpush1.msra.mxu0 0.0
    %1138 = vmatprep.subr.mxu0 0.0
    %1139 = vmatpush1.msra.mxu0 0.0
    %1140 = vmatprep.subr.mxu0 0.0
    %1141 = vmatpush1.msra.mxu0 0.0
    %1142 = vmatprep.subr.mxu0 0.0
    %1143 = vmatpush1.msra.mxu0 0.0
    %1144 = vmatprep.subr.mxu0 0.0
    %1145 = vmatpush1.msra.mxu0 0.0
    %1146 = vmatprep.subr.mxu0 0.0
    %1147 = vmatpush1.msra.mxu0 0.0
    %1148 = vmatprep.subr.mxu0 0.0
    %1149 = vmatpush1.msra.mxu0 0.0
    %1150 = vmatprep.subr.mxu0 0.0
    %1151 = vmatpush1.msra.mxu0 0.0
    %1152 = vmatprep.subr.mxu0 0.0
    %1153 = vmatpush1.msra.mxu0 0.0
    %1154 = vmatprep.subr.mxu0 0.0
    %1155 = vmatpush1.msra.mxu0 0.0
    %1156 = vmatprep.subr.mxu0 0.0
    %1157 = vmatpush1.msra.mxu0 0.0
    %1158 = vmatprep.subr.mxu0 0.0
    %1159 = vmatpush1.msra.mxu0 0.0
    %1160 = vmatprep.subr.mxu0 0.0
    %1161 = vmatpush1.msra.mxu0 0.0
    %1162 = vmatprep.subr.mxu0 0.0
    %1163 = vmatpush1.msra.mxu0 0.0
    %1164 = vmatprep.subr.mxu0 0.0
    %1165 = vmatpush1.msra.mxu0 %v801
    %1166 = vmatprep.subr.mxu0 0.0
    %1167 = vmatpush1.msra.mxu0 %v800
    %1168 = vmatprep.subr.mxu0 0.0
    %1169 = vmatpush2.msra.mxu0 0.0
    %1170 = vmatprep.subr.mxu0 0.0
    %1171 = vmatpush2.msra.mxu0 0.0
    %1172 = vmatprep.subr.mxu0 0.0
    %1173 = vmatpush2.msra.mxu0 0.0
    %1174 = vmatprep.subr.mxu0 0.0
    %1175 = vmatpush2.msra.mxu0 0.0
    %1176 = vmatprep.subr.mxu0 0.0
    %1177 = vmatpush2.msra.mxu0 0.0
    %1178 = vmatprep.subr.mxu0 0.0
    %1179 = vmatpush2.msra.mxu0 0.0
    %1180 = vmatprep.subr.mxu0 0.0
    %1181 = vmatpush2.msra.mxu0 0.0
    %1182 = vmatprep.subr.mxu0 0.0
    %1183 = vmatpush2.msra.mxu0 0.0
    %1184 = vmatprep.subr.mxu0 0.0
    %1185 = vmatpush2.msra.mxu0 0.0
    %1186 = vmatprep.subr.mxu0 0.0
    %1187 = vmatpush2.msra.mxu0 0.0
    %1188 = vmatprep.subr.mxu0 0.0
    %1189 = vmatpush2.msra.mxu0 0.0
    %1190 = vmatprep.subr.mxu0 0.0
    %1191 = vmatpush2.msra.mxu0 0.0
    %1192 = vmatprep.subr.mxu0 0.0
    %1193 = vmatpush2.msra.mxu0 0.0
    %1194 = vmatprep.subr.mxu0 0.0
    %1195 = vmatpush2.msra.mxu0 0.0
    %1196 = vmatprep.subr.mxu0 0.0
    %1197 = vmatpush2.msra.mxu0 0.0
    %1198 = vmatprep.subr.mxu0 0.0
    %1199 = vmatpush2.msra.mxu0 0.0
    %1200 = vmatprep.mubr.f32.mxu0 0.0
    %1201 = vmatmul.mubr.f32.gmra.mxu0 %v1119
    %v1202 = vpop.f32.mrf.mxu0
    %v1203 = vadd.f32 0.0, %v1202
    %v1204 = vpop.f32.mrf.mxu0
    %1205 = vmatprep.mubr.f32.mxu0 0.0
    %1206 = vmatmul.mubr.f32.gmra.mxu0 %v1122
    %v1207 = vpop.f32.mrf.mxu0
    %v1208 = vadd.f32 0.0, %v1207
    %v1209 = vpop.f32.mrf.mxu0
    %1210 = vmatprep.mubr.f32.mxu0 0.0
    %1211 = vmatmul.mubr.f32.gmra.mxu0 %v1125
    %v1212 = vpop.f32.mrf.mxu0
    %v1213 = vadd.f32 0.0, %v1212
    %v1214 = vpop.f32.mrf.mxu0
    %1215 = vmatprep.mubr.f32.mxu0 0.0
    %1216 = vmatmul.mubr.f32.gmra.mxu0 %v1128
    %v1217 = vpop.f32.mrf.mxu0
    %v1218 = vadd.f32 0.0, %v1217
    %v1219 = vpop.f32.mrf.mxu0
    %1220 = vmatprep.mubr.f32.mxu0 0.0
    %1221 = vmatmul.mubr.f32.gmra.mxu0 %v1131
    %v1222 = vpop.f32.mrf.mxu0
    %v1223 = vadd.f32 0.0, %v1222
    %v1224 = vpop.f32.mrf.mxu0
    %1225 = vmatprep.mubr.f32.mxu0 0.0
    %1226 = vmatmul.mubr.f32.gmra.mxu0 %v1134
    %v1227 = vpop.f32.mrf.mxu0
    %v1228 = vadd.f32 0.0, %v1227
    %v1229 = vpop.f32.mrf.mxu0
    %1230 = vdwg.mxu0
    %v1232 = vsel %vm497, %v1110, 0
    %v1235 = vsel %vm497, %v1115, 0
    %1237 = vmatprep.subr.mxu0 0.0
    %1238 = vmatpush1.msra.mxu0 0.0
    %1239 = vmatprep.subr.mxu0 0.0
    %1240 = vmatpush1.msra.mxu0 0.0
    %1241 = vmatprep.subr.mxu0 0.0
    %1242 = vmatpush1.msra.mxu0 0.0
    %1243 = vmatprep.subr.mxu0 0.0
    %1244 = vmatpush1.msra.mxu0 0.0
    %1245 = vmatprep.subr.mxu0 0.0
    %1246 = vmatpush1.msra.mxu0 0.0
    %1247 = vmatprep.subr.mxu0 0.0
    %1248 = vmatpush1.msra.mxu0 0.0
    %1249 = vmatprep.subr.mxu0 0.0
    %1250 = vmatpush1.msra.mxu0 0.0
    %1251 = vmatprep.subr.mxu0 0.0
    %1252 = vmatpush1.msra.mxu0 0.0
    %1253 = vmatprep.subr.mxu0 0.0
    %1254 = vmatpush1.msra.mxu0 0.0
    %1255 = vmatprep.subr.mxu0 0.0
    %1256 = vmatpush1.msra.mxu0 0.0
    %1257 = vmatprep.subr.mxu0 0.0
    %1258 = vmatpush1.msra.mxu0 0.0
    %1259 = vmatprep.subr.mxu0 0.0
    %1260 = vmatpush1.msra.mxu0 0.0
    %1261 = vmatprep.subr.mxu0 0.0
    %1262 = vmatpush1.msra.mxu0 %v811
    %1263 = vmatprep.subr.mxu0 0.0
    %1264 = vmatpush1.msra.mxu0 %v810
    %1265 = vmatprep.subr.mxu0 0.0
    %1266 = vmatpush1.msra.mxu0 %v809
    %1267 = vmatprep.subr.mxu0 0.0
    %1268 = vmatpush1.msra.mxu0 %v808
    %1269 = vmatprep.subr.mxu0 0.0
    %1270 = vmatpush2.msra.mxu0 0.0
    %1271 = vmatprep.subr.mxu0 0.0
    %1272 = vmatpush2.msra.mxu0 0.0
    %1273 = vmatprep.subr.mxu0 0.0
    %1274 = vmatpush2.msra.mxu0 0.0
    %1275 = vmatprep.subr.mxu0 0.0
    %1276 = vmatpush2.msra.mxu0 0.0
    %1277 = vmatprep.subr.mxu0 0.0
    %1278 = vmatpush2.msra.mxu0 0.0
    %1279 = vmatprep.subr.mxu0 0.0
    %1280 = vmatpush2.msra.mxu0 0.0
    %1281 = vmatprep.subr.mxu0 0.0
    %1282 = vmatpush2.msra.mxu0 0.0
    %1283 = vmatprep.subr.mxu0 0.0
    %1284 = vmatpush2.msra.mxu0 0.0
    %1285 = vmatprep.subr.mxu0 0.0
    %1286 = vmatpush2.msra.mxu0 0.0
    %1287 = vmatprep.subr.mxu0 0.0
    %1288 = vmatpush2.msra.mxu0 0.0
    %1289 = vmatprep.subr.mxu0 0.0
    %1290 = vmatpush2.msra.mxu0 0.0
    %1291 = vmatprep.subr.mxu0 0.0
    %1292 = vmatpush2.msra.mxu0 0.0
    %1293 = vmatprep.subr.mxu0 0.0
    %1294 = vmatpush2.msra.mxu0 0.0
    %1295 = vmatprep.subr.mxu0 0.0
    %1296 = vmatpush2.msra.mxu0 0.0
    %1297 = vmatprep.subr.mxu0 0.0
    %1298 = vmatpush2.msra.mxu0 0.0
    %1299 = vmatprep.subr.mxu0 0.0
    %1300 = vmatpush2.msra.mxu0 0.0
    %1301 = vmatprep.mubr.f32.mxu0 0.0
    %1302 = vmatmul.mubr.f32.gmra.mxu0 %v1232
    %v1303 = vpop.f32.mrf.mxu0
    %v1304 = vadd.f32 %v812, %v1303
    %v1305 = vpop.f32.mrf.mxu0
    %1306 = vmatprep.mubr.f32.mxu0 0.0
    %1307 = vmatmul.mubr.f32.gmra.mxu0 %v1235
    %v1308 = vpop.f32.mrf.mxu0
    %v1309 = vadd.f32 %v812, %v1308
    %v1310 = vpop.f32.mrf.mxu0
    %1311 = vdwg.mxu0
    %v1312 = vxor.u32 %v1304, 2147483648
    %v1313 = vxor.u32 %v1309, 2147483648
    %v1314 = vmul.f32 %v1312, 1.442695
    %v1315 = vpow.pop %v1314
    %v1316 = vmul.f32 %v1313, 1.442695
    %v1317 = vpow.pop %v1316
    %v1318 = vadd.f32 %v1315, 1.0
    %v1319 = vadd.f32 %v1317, 1.0
    %v1320 = vrcp.pop %v1318
    %v1321 = vmul.f32 1.0, %v1320
    %v1322 = vrcp.pop %v1319
    %v1323 = vmul.f32 1.0, %v1322
    %v1324 = vmul.f32 %v1203, %v1321
    %v1325 = vmul.f32 %v1208, %v1323
    %v1326 = vmul.f32 %v1213, %v1321
    %v1327 = vmul.f32 %v1218, %v1323
    %v1328 = vmul.f32 %v1223, %v1321
    %v1329 = vmul.f32 %v1228, %v1323
    %v1330 = vld [vmem:[#allocation7 + $0x1b0] sm:$0xff]
    %v1331 = vld [vmem:[#allocation7 + $0x1c0] sm:$0xff]
    %v1332 = vld [vmem:[#allocation7 + $0x1d0] sm:$0xff]
    %v1333 = vld [vmem:[#allocation7 + $0x1e0] sm:$0xff]
    %v1334 = vld [vmem:[#allocation7 + $0x1f0] sm:$0xff]
    %v1335 = vld [vmem:[#allocation7 + $0x200] sm:$0xff]
    %v1336 = vld [vmem:[#allocation7 + $0x210] sm:$0xff]
    %v1337 = vld [vmem:[#allocation7 + $0x220] sm:$0xff]
    %v1338 = vld [vmem:[#allocation7 + $0x230] sm:$0xff]
    %v1339 = vld [vmem:[#allocation7 + $0x240] sm:$0xff]
    %v1340 = vld [vmem:[#allocation7 + $0x250] sm:$0xff]
    %v1341 = vld [vmem:[#allocation7 + $0x260] sm:$0xff]
    %v1342 = vld [vmem:[#allocation7 + $0x270] sm:$0xff]
    %v1343 = vld [vmem:[#allocation7 + $0x280] sm:$0xff]
    %v1344 = vld [vmem:[#allocation7 + $0x290] sm:$0xff]
    %v1345 = vld [vmem:[#allocation7 + $0x298] sm:$0xff]
    %v1346 = vld [vmem:[#allocation7 + $0x2a0] sm:$0xff]
    %v1347 = vld [vmem:[#allocation7 + $0x2a8] sm:$0xff]
    %v1348 = vld [vmem:[#allocation7 + $0x2b0] sm:$0xff]
    %v1349 = vld [vmem:[#allocation7 + $0x2b8] sm:$0xff]
    %v1350 = vld [vmem:[#allocation7 + $0x2c0] sm:$0xff]
    %v1351 = vld [vmem:[#allocation7 + $0x2c8] sm:$0xff]
    %v1352 = vld [vmem:[#allocation7 + $0x2d0] sm:$0xff]
    %v1353 = vld [vmem:[#allocation7 + $0x2d8] sm:$0xff]
    %v1354 = vld [vmem:[#allocation7 + $0x2e0] sm:$0xff]
    %v1355 = vld [vmem:[#allocation7 + $0x2e8] sm:$0xff]
    %v1356 = vld [vmem:[#allocation7 + $0x2f0] sm:$0xff]
    %v1357 = vld [vmem:[#allocation7 + $0x2f8] sm:$0xff]
    %v1358 = vld [vmem:[#allocation7 + $0x300] sm:$0xff]
    %v1359 = vld [vmem:[#allocation7 + $0x308] sm:$0xff]
    %v1360 = vld [vmem:[#allocation7 + $0x310] sm:$0xff]
    %v1361 = vld [vmem:[#allocation7 + $0x318] sm:$0xff]
    %v1362 = vld [vmem:[#allocation7 + $0x320] sm:$0xff]
    %v1363 = vld [vmem:[#allocation7 + $0x328] sm:$0xff]
    %v1364 = vld [vmem:[#allocation7 + $0x330] sm:$0xff]
    %v1365 = vld [vmem:[#allocation7 + $0x338] sm:$0xff]
    %v1366 = vld [vmem:[#allocation7 + $0x340] sm:$0xff]
    %v1367 = vld [vmem:[#allocation7 + $0x348] sm:$0xff]
    %v1368 = vld [vmem:[#allocation7 + $0x350] sm:$0xff]
    %v1369 = vld [vmem:[#allocation7 + $0x358] sm:$0xff]
    %v1370 = vld [vmem:[#allocation7 + $0x360] sm:$0xff]
    %v1371 = vld [vmem:[#allocation7 + $0x368] sm:$0xff]
    %v1372 = vld [vmem:[#allocation7 + $0x370] sm:$0xff]
    %v1373 = vld [vmem:[#allocation7 + $0x378] sm:$0xff]
    %v1374 = vld [vmem:[#allocation7 + $0x380] sm:$0xff]
    %v1375 = vld [vmem:[#allocation7 + $0x388] sm:$0xff]
    %v1376 = vld [vmem:[#allocation7 + $0x390] sm:$0xff]
    %v1377 = vld [vmem:[#allocation7 + $0x3a0] sm:$0xff]
    %v1378 = vld [vmem:[#allocation7 + $0x3b0] sm:$0xff]
    %v1379 = vld [vmem:[#allocation7 + $0x3c0] sm:$0xff]
    %v1380 = vld [vmem:[#allocation7 + $0x3d0] sm:$0xff]
    %v1381 = vld [vmem:[#allocation7 + $0x3e0] sm:$0xff]
    %v1382 = vld [vmem:[#allocation7 + $0x3f0] sm:$0xff]
    %v1383 = vld [vmem:[#allocation7 + $0x400] sm:$0xff]
    %v1384 = vld [vmem:[#allocation7 + $0x410] sm:$0xff]
    %v1385 = vld [vmem:[#allocation7 + $0x420] sm:$0xff]
    %v1386 = vld [vmem:[#allocation7 + $0x430] sm:$0xff]
    %v1387 = vld [vmem:[#allocation7 + $0x440] sm:$0xff]
    %v1388 = vld [vmem:[#allocation7 + $0x450] sm:$0xff]
    %v1389 = vld [vmem:[#allocation7 + $0x460] sm:$0xff]
    %v1390 = vld [vmem:[#allocation7 + $0x470] sm:$0xff]
    %v1391 = vld [vmem:[#allocation7 + $0x480] sm:$0xff]
    %v1392 = vld [vmem:[#allocation7 + $0x490] sm:$0xff]
    %v1393 = vld [vmem:[#allocation7 + $0x4a0] sm:$0xff]
    %v1394 = vld [vmem:[#allocation7 + $0x4b0] sm:$0xff]
    %v1395 = vld [vmem:[#allocation7 + $0x4c0] sm:$0xff]
    %v1396 = vld [vmem:[#allocation7 + $0x4d0] sm:$0xff]
    %v1397 = vld [vmem:[#allocation7 + $0x4e0] sm:$0xff]
    %v1398 = vld [vmem:[#allocation7 + $0x4f0] sm:$0xff]
    %v1399 = vld [vmem:[#allocation7 + $0x500] sm:$0xff]
    %v1400 = vld [vmem:[#allocation7 + $0x510] ss:$0 sm:$0xff]
    %v1402 = vsel %vm221, %v1324, 0
    %v1405 = vsel %vm221, %v1325, 0
    %v1408 = vsel %vm221, %v1326, 0
    %v1411 = vsel %vm221, %v1327, 0
    %v1414 = vsel %vm221, %v1328, 0
    %v1417 = vsel %vm221, %v1329, 0
    %1419 = vmatprep.subr.mxu0 0.0
    %1420 = vmatpush1.msra.mxu0 0.0
    %1421 = vmatprep.subr.mxu0 0.0
    %1422 = vmatpush1.msra.mxu0 0.0
    %1423 = vmatprep.subr.mxu0 0.0
    %1424 = vmatpush1.msra.mxu0 0.0
    %1425 = vmatprep.subr.mxu0 0.0
    %1426 = vmatpush1.msra.mxu0 0.0
    %1427 = vmatprep.subr.mxu0 0.0
    %1428 = vmatpush1.msra.mxu0 0.0
    %1429 = vmatprep.subr.mxu0 0.0
    %1430 = vmatpush1.msra.mxu0 0.0
    %1431 = vmatprep.subr.mxu0 0.0
    %1432 = vmatpush1.msra.mxu0 0.0
    %1433 = vmatprep.subr.mxu0 0.0
    %1434 = vmatpush1.msra.mxu0 0.0
    %1435 = vmatprep.subr.mxu0 0.0
    %1436 = vmatpush1.msra.mxu0 0.0
    %1437 = vmatprep.subr.mxu0 0.0
    %1438 = vmatpush1.msra.mxu0 0.0
    %1439 = vmatprep.subr.mxu0 0.0
    %1440 = vmatpush1.msra.mxu0 0.0
    %1441 = vmatprep.subr.mxu0 0.0
    %1442 = vmatpush1.msra.mxu0 0.0
    %1443 = vmatprep.subr.mxu0 0.0
    %1444 = vmatpush1.msra.mxu0 0.0
    %1445 = vmatprep.subr.mxu0 0.0
    %1446 = vmatpush1.msra.mxu0 0.0
    %1447 = vmatprep.subr.mxu0 0.0
    %1448 = vmatpush1.msra.mxu0 %v1331
    %1449 = vmatprep.subr.mxu0 0.0
    %1450 = vmatpush1.msra.mxu0 %v1330
    %1451 = vmatprep.subr.mxu0 0.0
    %1452 = vmatpush2.msra.mxu0 0.0
    %1453 = vmatprep.subr.mxu0 0.0
    %1454 = vmatpush2.msra.mxu0 0.0
    %1455 = vmatprep.subr.mxu0 0.0
    %1456 = vmatpush2.msra.mxu0 0.0
    %1457 = vmatprep.subr.mxu0 0.0
    %1458 = vmatpush2.msra.mxu0 0.0
    %1459 = vmatprep.subr.mxu0 0.0
    %1460 = vmatpush2.msra.mxu0 0.0
    %1461 = vmatprep.subr.mxu0 0.0
    %1462 = vmatpush2.msra.mxu0 0.0
    %1463 = vmatprep.subr.mxu0 0.0
    %1464 = vmatpush2.msra.mxu0 0.0
    %1465 = vmatprep.subr.mxu0 0.0
    %1466 = vmatpush2.msra.mxu0 0.0
    %1467 = vmatprep.subr.mxu0 0.0
    %1468 = vmatpush2.msra.mxu0 0.0
    %1469 = vmatprep.subr.mxu0 0.0
    %1470 = vmatpush2.msra.mxu0 0.0
    %1471 = vmatprep.subr.mxu0 0.0
    %1472 = vmatpush2.msra.mxu0 0.0
    %1473 = vmatprep.subr.mxu0 0.0
    %1474 = vmatpush2.msra.mxu0 0.0
    %1475 = vmatprep.subr.mxu0 0.0
    %1476 = vmatpush2.msra.mxu0 0.0
    %1477 = vmatprep.subr.mxu0 0.0
    %1478 = vmatpush2.msra.mxu0 0.0
    %1479 = vmatprep.subr.mxu0 0.0
    %1480 = vmatpush2.msra.mxu0 0.0
    %1481 = vmatprep.subr.mxu0 0.0
    %1482 = vmatpush2.msra.mxu0 0.0
    %1483 = vmatprep.mubr.f32.mxu0 0.0
    %1484 = vmatmul.mubr.f32.gmra.mxu0 %v1402
    %v1485 = vpop.f32.mrf.mxu0
    %v1486 = vadd.f32 0.0, %v1485
    %v1487 = vpop.f32.mrf.mxu0
    %1488 = vmatprep.mubr.f32.mxu0 0.0
    %1489 = vmatmul.mubr.f32.gmra.mxu0 %v1405
    %v1490 = vpop.f32.mrf.mxu0
    %v1491 = vadd.f32 0.0, %v1490
    %v1492 = vpop.f32.mrf.mxu0
    %1493 = vmatprep.mubr.f32.mxu0 0.0
    %1494 = vmatmul.mubr.f32.gmra.mxu0 %v1408
    %v1495 = vpop.f32.mrf.mxu0
    %v1496 = vadd.f32 0.0, %v1495
    %v1497 = vpop.f32.mrf.mxu0
    %1498 = vmatprep.mubr.f32.mxu0 0.0
    %1499 = vmatmul.mubr.f32.gmra.mxu0 %v1411
    %v1500 = vpop.f32.mrf.mxu0
    %v1501 = vadd.f32 0.0, %v1500
    %v1502 = vpop.f32.mrf.mxu0
    %1503 = vmatprep.mubr.f32.mxu0 0.0
    %1504 = vmatmul.mubr.f32.gmra.mxu0 %v1414
    %v1505 = vpop.f32.mrf.mxu0
    %v1506 = vadd.f32 0.0, %v1505
    %v1507 = vpop.f32.mrf.mxu0
    %1508 = vmatprep.mubr.f32.mxu0 0.0
    %1509 = vmatmul.mubr.f32.gmra.mxu0 %v1417
    %v1510 = vpop.f32.mrf.mxu0
    %v1511 = vadd.f32 0.0, %v1510
    %v1512 = vpop.f32.mrf.mxu0
    %1513 = vdwg.mxu0
    %v1514 = vmul.f32 %v1486, %v1486
    %v1515 = vmul.f32 %v1491, %v1491
    %v1516 = vmul.f32 %v1496, %v1496
    %v1517 = vmul.f32 %v1501, %v1501
    %v1518 = vmul.f32 %v1506, %v1506
    %v1519 = vmul.f32 %v1511, %v1511
    %vm1520 = vcmask 785408
    %v1521 = vsel %vm1520, %v1514, 0.0
    %v1522 = vsel %vm1520, %v1516, 0.0
    %v1523 = vadd.f32 %v1521, %v1522
    %v1524 = vsel %vm1520, %v1518, 0.0
    %v1525 = vadd.f32 %v1523, %v1524
    %v1526 = vsel %vm1520, %v1515, 0.0
    %v1527 = vsel %vm1520, %v1517, 0.0
    %v1528 = vadd.f32 %v1526, %v1527
    %v1529 = vsel %vm1520, %v1519, 0.0
    %v1530 = vadd.f32 %v1528, %v1529
    %v1531 = vrsqrt.pop %v1525
    %v1532 = vmul.f32 %v1525, %v1531
    %vm1533 = vcmp.eq.f32.partialorder %v1525, inf
    %v1534 = vsel %vm1533, %v1525, %v1532
    %vm1535 = vcmp.eq.f32.partialorder %v1525, 0.0
    %v1536 = vand.u32 %v1525, 2147483648
    %v1537 = vsel %vm1535, %v1536, %v1534
    %v1538 = vrsqrt.pop %v1530
    %v1539 = vmul.f32 %v1530, %v1538
    %vm1540 = vcmp.eq.f32.partialorder %v1530, inf
    %v1541 = vsel %vm1540, %v1530, %v1539
    %vm1542 = vcmp.eq.f32.partialorder %v1530, 0.0
    %v1543 = vand.u32 %v1530, 2147483648
    %v1544 = vsel %vm1542, %v1543, %v1541
    %1545 = vmatprep.subr.mxu0 0.0
    %1546 = vmatpush1.msra.mxu0 0.0
    %1547 = vmatprep.subr.mxu0 0.0
    %1548 = vmatpush1.msra.mxu0 0.0
    %1549 = vmatprep.subr.mxu0 0.0
    %1550 = vmatpush1.msra.mxu0 0.0
    %1551 = vmatprep.subr.mxu0 0.0
    %1552 = vmatpush1.msra.mxu0 0.0
    %1553 = vmatprep.subr.mxu0 0.0
    %1554 = vmatpush1.msra.mxu0 0.0
    %1555 = vmatprep.subr.mxu0 0.0
    %1556 = vmatpush1.msra.mxu0 0.0
    %1557 = vmatprep.subr.mxu0 0.0
    %1558 = vmatpush1.msra.mxu0 0.0
    %1559 = vmatprep.subr.mxu0 0.0
    %1560 = vmatpush1.msra.mxu0 0.0
    %1561 = vmatprep.subr.mxu0 0.0
    %1562 = vmatpush1.msra.mxu0 0.0
    %1563 = vmatprep.subr.mxu0 0.0
    %1564 = vmatpush1.msra.mxu0 0.0
    %1565 = vmatprep.subr.mxu0 0.0
    %1566 = vmatpush1.msra.mxu0 0.0
    %1567 = vmatprep.subr.mxu0 0.0
    %1568 = vmatpush1.msra.mxu0 0.0
    %1569 = vmatprep.subr.mxu0 %v1375
    %1570 = vmatpush1.msra.mxu0 %v1374
    %1571 = vmatprep.subr.mxu0 %v1373
    %1572 = vmatpush1.msra.mxu0 %v1372
    %1573 = vmatprep.subr.mxu0 %v1371
    %1574 = vmatpush1.msra.mxu0 %v1370
    %1575 = vmatprep.subr.mxu0 %v1369
    %1576 = vmatpush1.msra.mxu0 %v1368
    %1577 = vmatprep.subr.mxu0 0.0
    %1578 = vmatpush2.msra.mxu0 0.0
    %1579 = vmatprep.subr.mxu0 0.0
    %1580 = vmatpush2.msra.mxu0 0.0
    %1581 = vmatprep.subr.mxu0 0.0
    %1582 = vmatpush2.msra.mxu0 0.0
    %1583 = vmatprep.subr.mxu0 0.0
    %1584 = vmatpush2.msra.mxu0 0.0
    %1585 = vmatprep.subr.mxu0 0.0
    %1586 = vmatpush2.msra.mxu0 0.0
    %1587 = vmatprep.subr.mxu0 0.0
    %1588 = vmatpush2.msra.mxu0 0.0
    %1589 = vmatprep.subr.mxu0 0.0
    %1590 = vmatpush2.msra.mxu0 0.0
    %1591 = vmatprep.subr.mxu0 0.0
    %1592 = vmatpush2.msra.mxu0 0.0
    %1593 = vmatprep.subr.mxu0 0.0
    %1594 = vmatpush2.msra.mxu0 0.0
    %1595 = vmatprep.subr.mxu0 0.0
    %1596 = vmatpush2.msra.mxu0 0.0
    %1597 = vmatprep.subr.mxu0 0.0
    %1598 = vmatpush2.msra.mxu0 0.0
    %1599 = vmatprep.subr.mxu0 0.0
    %1600 = vmatpush2.msra.mxu0 0.0
    %1601 = vmatprep.subr.mxu0 0.0
    %1602 = vmatpush2.msra.mxu0 0.0
    %1603 = vmatprep.subr.mxu0 0.0
    %1604 = vmatpush2.msra.mxu0 0.0
    %1605 = vmatprep.subr.mxu0 0.0
    %1606 = vmatpush2.msra.mxu0 0.0
    %1607 = vmatprep.subr.mxu0 0.0
    %1608 = vmatpush2.msra.mxu0 0.0
    %1609 = vmatprep.mubr.f32.mxu0 0.0
    %1610 = vmatmul.mubr.f32.gmra.mxu0 %v1232
    %v1611 = vpop.f32.mrf.mxu0
    %v1612 = vadd.f32 0.0, %v1611
    %v1613 = vpop.f32.mrf.mxu0
    %v1614 = vadd.f32 0.0, %v1613
    %1615 = vmatprep.mubr.f32.mxu0 0.0
    %1616 = vmatmul.mubr.f32.gmra.mxu0 %v1235
    %v1617 = vpop.f32.mrf.mxu0
    %v1618 = vadd.f32 0.0, %v1617
    %v1619 = vpop.f32.mrf.mxu0
    %v1620 = vadd.f32 0.0, %v1619
    %1621 = vdwg.mxu0
    %v1623 = vsel %vm1520, %v1537, 0
    %v1626 = vsel %vm1520, %v1544, 0
    %1628 = vmatprep.subr.mxu0 0.0
    %1629 = vmatpush1.msra.mxu0 0.0
    %1630 = vmatprep.subr.mxu0 0.0
    %1631 = vmatpush1.msra.mxu0 0.0
    %1632 = vmatprep.subr.mxu0 0.0
    %1633 = vmatpush1.msra.mxu0 0.0
    %1634 = vmatprep.subr.mxu0 0.0
    %1635 = vmatpush1.msra.mxu0 0.0
    %1636 = vmatprep.subr.mxu0 %v1367
    %1637 = vmatpush1.msra.mxu0 %v1366
    %1638 = vmatprep.subr.mxu0 %v1365
    %1639 = vmatpush1.msra.mxu0 %v1364
    %1640 = vmatprep.subr.mxu0 %v1363
    %1641 = vmatpush1.msra.mxu0 %v1362
    %1642 = vmatprep.subr.mxu0 %v1361
    %1643 = vmatpush1.msra.mxu0 %v1360
    %1644 = vmatprep.subr.mxu0 %v1359
    %1645 = vmatpush1.msra.mxu0 %v1358
    %1646 = vmatprep.subr.mxu0 %v1357
    %1647 = vmatpush1.msra.mxu0 %v1356
    %1648 = vmatprep.subr.mxu0 %v1355
    %1649 = vmatpush1.msra.mxu0 %v1354
    %1650 = vmatprep.subr.mxu0 %v1353
    %1651 = vmatpush1.msra.mxu0 %v1352
    %1652 = vmatprep.subr.mxu0 %v1351
    %1653 = vmatpush1.msra.mxu0 %v1350
    %1654 = vmatprep.subr.mxu0 %v1349
    %1655 = vmatpush1.msra.mxu0 %v1348
    %1656 = vmatprep.subr.mxu0 %v1347
    %1657 = vmatpush1.msra.mxu0 %v1346
    %1658 = vmatprep.subr.mxu0 %v1345
    %1659 = vmatpush1.msra.mxu0 %v1344
    %1660 = vmatprep.subr.mxu0 0.0
    %1661 = vmatpush2.msra.mxu0 0.0
    %1662 = vmatprep.subr.mxu0 0.0
    %1663 = vmatpush2.msra.mxu0 0.0
    %1664 = vmatprep.subr.mxu0 0.0
    %1665 = vmatpush2.msra.mxu0 0.0
    %1666 = vmatprep.subr.mxu0 0.0
    %1667 = vmatpush2.msra.mxu0 0.0
    %1668 = vmatprep.subr.mxu0 0.0
    %1669 = vmatpush2.msra.mxu0 0.0
    %1670 = vmatprep.subr.mxu0 0.0
    %1671 = vmatpush2.msra.mxu0 0.0
    %1672 = vmatprep.subr.mxu0 0.0
    %1673 = vmatpush2.msra.mxu0 0.0
    %1674 = vmatprep.subr.mxu0 0.0
    %1675 = vmatpush2.msra.mxu0 0.0
    %1676 = vmatprep.subr.mxu0 0.0
    %1677 = vmatpush2.msra.mxu0 0.0
    %1678 = vmatprep.subr.mxu0 0.0
    %1679 = vmatpush2.msra.mxu0 0.0
    %1680 = vmatprep.subr.mxu0 0.0
    %1681 = vmatpush2.msra.mxu0 0.0
    %1682 = vmatprep.subr.mxu0 0.0
    %1683 = vmatpush2.msra.mxu0 0.0
    %1684 = vmatprep.subr.mxu0 0.0
    %1685 = vmatpush2.msra.mxu0 0.0
    %1686 = vmatprep.subr.mxu0 0.0
    %1687 = vmatpush2.msra.mxu0 0.0
    %1688 = vmatprep.subr.mxu0 0.0
    %1689 = vmatpush2.msra.mxu0 0.0
    %1690 = vmatprep.subr.mxu0 0.0
    %1691 = vmatpush2.msra.mxu0 0.0
    %1692 = vmatprep.mubr.f32.mxu0 0.0
    %1693 = vmatmul.mubr.f32.gmra.mxu0 %v1623
    %v1694 = vpop.f32.mrf.mxu0
    %v1695 = vadd.f32 %v1612, %v1694
    %v1696 = vpop.f32.mrf.mxu0
    %v1697 = vadd.f32 %v1614, %v1696
    %1698 = vmatprep.mubr.f32.mxu0 0.0
    %1699 = vmatmul.mubr.f32.gmra.mxu0 %v1626
    %v1700 = vpop.f32.mrf.mxu0
    %v1701 = vadd.f32 %v1618, %v1700
    %v1702 = vpop.f32.mrf.mxu0
    %v1703 = vadd.f32 %v1620, %v1702
    %1704 = vdwg.mxu0
    %v1706 = vsel %vm1520, %v1486, 0
    %v1709 = vsel %vm1520, %v1491, 0
    %v1712 = vsel %vm1520, %v1496, 0
    %v1715 = vsel %vm1520, %v1501, 0
    %v1718 = vsel %vm1520, %v1506, 0
    %v1721 = vsel %vm1520, %v1511, 0
    %1723 = vmatprep.subr.mxu0 0.0
    %1724 = vmatpush1.msra.mxu0 0.0
    %1725 = vmatprep.subr.mxu0 0.0
    %1726 = vmatpush1.msra.mxu0 0.0
    %1727 = vmatprep.subr.mxu0 0.0
    %1728 = vmatpush1.msra.mxu0 0.0
    %1729 = vmatprep.subr.mxu0 0.0
    %1730 = vmatpush1.msra.mxu0 0.0
    %1731 = vmatprep.subr.mxu0 0.0
    %1732 = vmatpush1.msra.mxu0 %v1343
    %1733 = vmatprep.subr.mxu0 0.0
    %1734 = vmatpush1.msra.mxu0 %v1342
    %1735 = vmatprep.subr.mxu0 0.0
    %1736 = vmatpush1.msra.mxu0 %v1341
    %1737 = vmatprep.subr.mxu0 0.0
    %1738 = vmatpush1.msra.mxu0 %v1340
    %1739 = vmatprep.subr.mxu0 0.0
    %1740 = vmatpush1.msra.mxu0 %v1339
    %1741 = vmatprep.subr.mxu0 0.0
    %1742 = vmatpush1.msra.mxu0 %v1338
    %1743 = vmatprep.subr.mxu0 0.0
    %1744 = vmatpush1.msra.mxu0 %v1337
    %1745 = vmatprep.subr.mxu0 0.0
    %1746 = vmatpush1.msra.mxu0 %v1336
    %1747 = vmatprep.subr.mxu0 0.0
    %1748 = vmatpush1.msra.mxu0 %v1335
    %1749 = vmatprep.subr.mxu0 0.0
    %1750 = vmatpush1.msra.mxu0 %v1334
    %1751 = vmatprep.subr.mxu0 0.0
    %1752 = vmatpush1.msra.mxu0 %v1333
    %1753 = vmatprep.subr.mxu0 0.0
    %1754 = vmatpush1.msra.mxu0 %v1332
    %1755 = vmatprep.subr.mxu0 0.0
    %1756 = vmatpush2.msra.mxu0 0.0
    %1757 = vmatprep.subr.mxu0 0.0
    %1758 = vmatpush2.msra.mxu0 0.0
    %1759 = vmatprep.subr.mxu0 0.0
    %1760 = vmatpush2.msra.mxu0 0.0
    %1761 = vmatprep.subr.mxu0 0.0
    %1762 = vmatpush2.msra.mxu0 0.0
    %1763 = vmatprep.subr.mxu0 0.0
    %1764 = vmatpush2.msra.mxu0 0.0
    %1765 = vmatprep.subr.mxu0 0.0
    %1766 = vmatpush2.msra.mxu0 0.0
    %1767 = vmatprep.subr.mxu0 0.0
    %1768 = vmatpush2.msra.mxu0 0.0
    %1769 = vmatprep.subr.mxu0 0.0
    %1770 = vmatpush2.msra.mxu0 0.0
    %1771 = vmatprep.subr.mxu0 0.0
    %1772 = vmatpush2.msra.mxu0 0.0
    %1773 = vmatprep.subr.mxu0 0.0
    %1774 = vmatpush2.msra.mxu0 0.0
    %1775 = vmatprep.subr.mxu0 0.0
    %1776 = vmatpush2.msra.mxu0 0.0
    %1777 = vmatprep.subr.mxu0 0.0
    %1778 = vmatpush2.msra.mxu0 0.0
    %1779 = vmatprep.subr.mxu0 0.0
    %1780 = vmatpush2.msra.mxu0 0.0
    %1781 = vmatprep.subr.mxu0 0.0
    %1782 = vmatpush2.msra.mxu0 0.0
    %1783 = vmatprep.subr.mxu0 0.0
    %1784 = vmatpush2.msra.mxu0 0.0
    %1785 = vmatprep.subr.mxu0 0.0
    %1786 = vmatpush2.msra.mxu0 0.0
    %1787 = vmatprep.mubr.f32.mxu0 0.0
    %1788 = vmatmul.mubr.f32.gmra.mxu0 %v1706
    %v1789 = vpop.f32.mrf.mxu0
    %v1790 = vadd.f32 0.0, %v1789
    %v1791 = vpop.f32.mrf.mxu0
    %1792 = vmatprep.mubr.f32.mxu0 0.0
    %1793 = vmatmul.mubr.f32.gmra.mxu0 %v1709
    %v1794 = vpop.f32.mrf.mxu0
    %v1795 = vadd.f32 0.0, %v1794
    %v1796 = vpop.f32.mrf.mxu0
    %1797 = vmatprep.mubr.f32.mxu0 0.0
    %1798 = vmatmul.mubr.f32.gmra.mxu0 %v1712
    %v1799 = vpop.f32.mrf.mxu0
    %v1800 = vadd.f32 0.0, %v1799
    %v1801 = vpop.f32.mrf.mxu0
    %1802 = vmatprep.mubr.f32.mxu0 0.0
    %1803 = vmatmul.mubr.f32.gmra.mxu0 %v1715
    %v1804 = vpop.f32.mrf.mxu0
    %v1805 = vadd.f32 0.0, %v1804
    %v1806 = vpop.f32.mrf.mxu0
    %1807 = vmatprep.mubr.f32.mxu0 0.0
    %1808 = vmatmul.mubr.f32.gmra.mxu0 %v1718
    %v1809 = vpop.f32.mrf.mxu0
    %v1810 = vadd.f32 0.0, %v1809
    %v1811 = vpop.f32.mrf.mxu0
    %1812 = vmatprep.mubr.f32.mxu0 0.0
    %1813 = vmatmul.mubr.f32.gmra.mxu0 %v1721
    %v1814 = vpop.f32.mrf.mxu0
    %v1815 = vadd.f32 0.0, %v1814
    %v1816 = vpop.f32.mrf.mxu0
    %1817 = vdwg.mxu0
    %vm1818 = vcmask 523264
    %v1820 = vsel %vm1818, %v1697, 0
    %v1823 = vsel %vm1818, %v1703, 0
    %1825 = vmatprep.subr.mxu0 0.0
    %1826 = vmatpush1.msra.mxu0 %v1391
    %1827 = vmatprep.subr.mxu0 0.0
    %1828 = vmatpush1.msra.mxu0 %v1390
    %1829 = vmatprep.subr.mxu0 0.0
    %1830 = vmatpush1.msra.mxu0 %v1389
    %1831 = vmatprep.subr.mxu0 0.0
    %1832 = vmatpush1.msra.mxu0 %v1388
    %1833 = vmatprep.subr.mxu0 0.0
    %1834 = vmatpush1.msra.mxu0 %v1387
    %1835 = vmatprep.subr.mxu0 0.0
    %1836 = vmatpush1.msra.mxu0 %v1386
    %1837 = vmatprep.subr.mxu0 0.0
    %1838 = vmatpush1.msra.mxu0 %v1385
    %1839 = vmatprep.subr.mxu0 0.0
    %1840 = vmatpush1.msra.mxu0 %v1384
    %1841 = vmatprep.subr.mxu0 0.0
    %1842 = vmatpush1.msra.mxu0 %v1383
    %1843 = vmatprep.subr.mxu0 0.0
    %1844 = vmatpush1.msra.mxu0 %v1382
    %1845 = vmatprep.subr.mxu0 0.0
    %1846 = vmatpush1.msra.mxu0 %v1381
    %1847 = vmatprep.subr.mxu0 0.0
    %1848 = vmatpush1.msra.mxu0 %v1380
    %1849 = vmatprep.subr.mxu0 0.0
    %1850 = vmatpush1.msra.mxu0 %v1379
    %1851 = vmatprep.subr.mxu0 0.0
    %1852 = vmatpush1.msra.mxu0 %v1378
    %1853 = vmatprep.subr.mxu0 0.0
    %1854 = vmatpush1.msra.mxu0 %v1377
    %1855 = vmatprep.subr.mxu0 0.0
    %1856 = vmatpush1.msra.mxu0 %v1376
    %1857 = vmatprep.subr.mxu0 0.0
    %1858 = vmatpush2.msra.mxu0 0.0
    %1859 = vmatprep.subr.mxu0 0.0
    %1860 = vmatpush2.msra.mxu0 0.0
    %1861 = vmatprep.subr.mxu0 0.0
    %1862 = vmatpush2.msra.mxu0 0.0
    %1863 = vmatprep.subr.mxu0 0.0
    %1864 = vmatpush2.msra.mxu0 0.0
    %1865 = vmatprep.subr.mxu0 0.0
    %1866 = vmatpush2.msra.mxu0 0.0
    %1867 = vmatprep.subr.mxu0 0.0
    %1868 = vmatpush2.msra.mxu0 0.0
    %1869 = vmatprep.subr.mxu0 0.0
    %1870 = vmatpush2.msra.mxu0 0.0
    %1871 = vmatprep.subr.mxu0 0.0
    %1872 = vmatpush2.msra.mxu0 0.0
    %1873 = vmatprep.subr.mxu0 0.0
    %1874 = vmatpush2.msra.mxu0 %v1399
    %1875 = vmatprep.subr.mxu0 0.0
    %1876 = vmatpush2.msra.mxu0 %v1398
    %1877 = vmatprep.subr.mxu0 0.0
    %1878 = vmatpush2.msra.mxu0 %v1397
    %1879 = vmatprep.subr.mxu0 0.0
    %1880 = vmatpush2.msra.mxu0 %v1396
    %1881 = vmatprep.subr.mxu0 0.0
    %1882 = vmatpush2.msra.mxu0 %v1395
    %1883 = vmatprep.subr.mxu0 0.0
    %1884 = vmatpush2.msra.mxu0 %v1394
    %1885 = vmatprep.subr.mxu0 0.0
    %1886 = vmatpush2.msra.mxu0 %v1393
    %1887 = vmatprep.subr.mxu0 0.0
    %1888 = vmatpush2.msra.mxu0 %v1392
    %1889 = vmatprep.mubr.f32.mxu0 %v1820
    %1890 = vmatmul.mubr.f32.gmra.mxu0 %v1695
    %v1891 = vpop.f32.mrf.mxu0
    %v1892 = vadd.f32 %v1400, %v1891
    %v1893 = vpop.f32.mrf.mxu0
    %1894 = vmatprep.mubr.f32.mxu0 %v1823
    %1895 = vmatmul.mubr.f32.gmra.mxu0 %v1701
    %v1896 = vpop.f32.mrf.mxu0
    %v1897 = vadd.f32 %v1400, %v1896
    %v1898 = vpop.f32.mrf.mxu0
    %1899 = vdwg.mxu0
    %v1900 = vxor.u32 %v1892, 2147483648
    %v1901 = vxor.u32 %v1897, 2147483648
    %v1902 = vmul.f32 %v1900, 1.442695
    %v1903 = vpow.pop %v1902
    %v1904 = vmul.f32 %v1901, 1.442695
    %v1905 = vpow.pop %v1904
    %v1906 = vadd.f32 %v1903, 1.0
    %v1907 = vadd.f32 %v1905, 1.0
    %v1908 = vrcp.pop %v1906
    %v1909 = vmul.f32 1.0, %v1908
    %v1910 = vrcp.pop %v1907
    %v1911 = vmul.f32 1.0, %v1910
    %v1912 = vmul.f32 %v1790, %v1909
    %v1913 = vmul.f32 %v1795, %v1911
    %v1914 = vmul.f32 %v1800, %v1909
    %v1915 = vmul.f32 %v1805, %v1911
    %v1916 = vmul.f32 %v1810, %v1909
    %v1917 = vmul.f32 %v1815, %v1911
    %v1918 = vld [vmem:[#allocation7 + $0x520] sm:$0xff]
    %v1919 = vld [vmem:[#allocation7 + $0x530] sm:$0xff]
    %v1920 = vld [vmem:[#allocation7 + $0x540] sm:$0xff]
    %v1921 = vld [vmem:[#allocation7 + $0x550] sm:$0xff]
    %v1922 = vld [vmem:[#allocation7 + $0x560] sm:$0xff]
    %v1923 = vld [vmem:[#allocation7 + $0x570] sm:$0xff]
    %v1924 = vld [vmem:[#allocation7 + $0x580] sm:$0xff]
    %v1925 = vld [vmem:[#allocation7 + $0x590] sm:$0xff]
    %v1926 = vld [vmem:[#allocation7 + $0x5a0] sm:$0xff]
    %v1927 = vld [vmem:[#allocation7 + $0x5b0] sm:$0xff]
    %v1928 = vld [vmem:[#allocation7 + $0x5c0] sm:$0xff]
    %v1929 = vld [vmem:[#allocation7 + $0x5d0] sm:$0xff]
    %v1931 = vsel %vm1520, %v1912, 0
    %v1934 = vsel %vm1520, %v1913, 0
    %v1937 = vsel %vm1520, %v1914, 0
    %v1940 = vsel %vm1520, %v1915, 0
    %v1943 = vsel %vm1520, %v1916, 0
    %v1946 = vsel %vm1520, %v1917, 0
    %1948 = vmatprep.subr.mxu0 0.0
    %1949 = vmatpush1.msra.mxu0 0.0
    %1950 = vmatprep.subr.mxu0 0.0
    %1951 = vmatpush1.msra.mxu0 0.0
    %1952 = vmatprep.subr.mxu0 0.0
    %1953 = vmatpush1.msra.mxu0 0.0
    %1954 = vmatprep.subr.mxu0 0.0
    %1955 = vmatpush1.msra.mxu0 0.0
    %1956 = vmatprep.subr.mxu0 0.0
    %1957 = vmatpush1.msra.mxu0 %v1929
    %1958 = vmatprep.subr.mxu0 0.0
    %1959 = vmatpush1.msra.mxu0 %v1928
    %1960 = vmatprep.subr.mxu0 0.0
    %1961 = vmatpush1.msra.mxu0 %v1927
    %1962 = vmatprep.subr.mxu0 0.0
    %1963 = vmatpush1.msra.mxu0 %v1926
    %1964 = vmatprep.subr.mxu0 0.0
    %1965 = vmatpush1.msra.mxu0 %v1925
    %1966 = vmatprep.subr.mxu0 0.0
    %1967 = vmatpush1.msra.mxu0 %v1924
    %1968 = vmatprep.subr.mxu0 0.0
    %1969 = vmatpush1.msra.mxu0 %v1923
    %1970 = vmatprep.subr.mxu0 0.0
    %1971 = vmatpush1.msra.mxu0 %v1922
    %1972 = vmatprep.subr.mxu0 0.0
    %1973 = vmatpush1.msra.mxu0 %v1921
    %1974 = vmatprep.subr.mxu0 0.0
    %1975 = vmatpush1.msra.mxu0 %v1920
    %1976 = vmatprep.subr.mxu0 0.0
    %1977 = vmatpush1.msra.mxu0 %v1919
    %1978 = vmatprep.subr.mxu0 0.0
    %1979 = vmatpush1.msra.mxu0 %v1918
    %1980 = vmatprep.subr.mxu0 0.0
    %1981 = vmatpush2.msra.mxu0 0.0
    %1982 = vmatprep.subr.mxu0 0.0
    %1983 = vmatpush2.msra.mxu0 0.0
    %1984 = vmatprep.subr.mxu0 0.0
    %1985 = vmatpush2.msra.mxu0 0.0
    %1986 = vmatprep.subr.mxu0 0.0
    %1987 = vmatpush2.msra.mxu0 0.0
    %1988 = vmatprep.subr.mxu0 0.0
    %1989 = vmatpush2.msra.mxu0 0.0
    %1990 = vmatprep.subr.mxu0 0.0
    %1991 = vmatpush2.msra.mxu0 0.0
    %1992 = vmatprep.subr.mxu0 0.0
    %1993 = vmatpush2.msra.mxu0 0.0
    %1994 = vmatprep.subr.mxu0 0.0
    %1995 = vmatpush2.msra.mxu0 0.0
    %1996 = vmatprep.subr.mxu0 0.0
    %1997 = vmatpush2.msra.mxu0 0.0
    %1998 = vmatprep.subr.mxu0 0.0
    %1999 = vmatpush2.msra.mxu0 0.0
    %2000 = vmatprep.subr.mxu0 0.0
    %2001 = vmatpush2.msra.mxu0 0.0
    %2002 = vmatprep.subr.mxu0 0.0
    %2003 = vmatpush2.msra.mxu0 0.0
    %2004 = vmatprep.subr.mxu0 0.0
    %2005 = vmatpush2.msra.mxu0 0.0
    %2006 = vmatprep.subr.mxu0 0.0
    %2007 = vmatpush2.msra.mxu0 0.0
    %2008 = vmatprep.subr.mxu0 0.0
    %2009 = vmatpush2.msra.mxu0 0.0
    %2010 = vmatprep.subr.mxu0 0.0
    %2011 = vmatpush2.msra.mxu0 0.0
    %2012 = vmatprep.mubr.f32.mxu0 0.0
    %2013 = vmatmul.mubr.f32.gmra.mxu0 %v1931
    %v2014 = vpop.f32.mrf.mxu0
    %v2015 = vadd.f32 0.0, %v2014
    %v2016 = vpop.f32.mrf.mxu0
    %2017 = vmatprep.mubr.f32.mxu0 0.0
    %2018 = vmatmul.mubr.f32.gmra.mxu0 %v1934
    %v2019 = vpop.f32.mrf.mxu0
    %v2020 = vadd.f32 0.0, %v2019
    %v2021 = vpop.f32.mrf.mxu0
    %2022 = vmatprep.mubr.f32.mxu0 0.0
    %2023 = vmatmul.mubr.f32.gmra.mxu0 %v1937
    %v2024 = vpop.f32.mrf.mxu0
    %v2025 = vadd.f32 0.0, %v2024
    %v2026 = vpop.f32.mrf.mxu0
    %2027 = vmatprep.mubr.f32.mxu0 0.0
    %2028 = vmatmul.mubr.f32.gmra.mxu0 %v1940
    %v2029 = vpop.f32.mrf.mxu0
    %v2030 = vadd.f32 0.0, %v2029
    %v2031 = vpop.f32.mrf.mxu0
    %2032 = vmatprep.mubr.f32.mxu0 0.0
    %2033 = vmatmul.mubr.f32.gmra.mxu0 %v1943
    %v2034 = vpop.f32.mrf.mxu0
    %v2035 = vadd.f32 0.0, %v2034
    %v2036 = vpop.f32.mrf.mxu0
    %2037 = vmatprep.mubr.f32.mxu0 0.0
    %2038 = vmatmul.mubr.f32.gmra.mxu0 %v1946
    %v2039 = vpop.f32.mrf.mxu0
    %v2040 = vadd.f32 0.0, %v2039
    %v2041 = vpop.f32.mrf.mxu0
    %2042 = vdwg.mxu0
    %v2043 = vmul.f32 %v1912, %v2015
    %v2044 = vmul.f32 %v1913, %v2020
    %v2045 = vmul.f32 %v1914, %v2025
    %v2046 = vmul.f32 %v1915, %v2030
    %v2047 = vmul.f32 %v1916, %v2035
    %v2048 = vmul.f32 %v1917, %v2040
    %v2049 = vsel %vm1520, %v2043, 0.0
    %v2050 = vsel %vm1520, %v2045, 0.0
    %v2051 = vadd.f32 %v2049, %v2050
    %v2052 = vsel %vm1520, %v2047, 0.0
    %v2053 = vadd.f32 %v2051, %v2052
    %v2054 = vsel %vm1520, %v2044, 0.0
    %v2055 = vsel %vm1520, %v2046, 0.0
    %v2056 = vadd.f32 %v2054, %v2055
    %v2057 = vsel %vm1520, %v2048, 0.0
    %v2058 = vadd.f32 %v2056, %v2057
    %v2059 = vmul.f32 %v2015, %v2015
    %v2060 = vmul.f32 %v2020, %v2020
    %v2061 = vmul.f32 %v2025, %v2025
    %v2062 = vmul.f32 %v2030, %v2030
    %v2063 = vmul.f32 %v2035, %v2035
    %v2064 = vmul.f32 %v2040, %v2040
    %v2065 = vsel %vm1520, %v2059, 0.0
    %v2066 = vsel %vm1520, %v2061, 0.0
    %v2067 = vadd.f32 %v2065, %v2066
    %v2068 = vsel %vm1520, %v2063, 0.0
    %v2069 = vadd.f32 %v2067, %v2068
    %v2070 = vsel %vm1520, %v2060, 0.0
    %v2071 = vsel %vm1520, %v2062, 0.0
    %v2072 = vadd.f32 %v2070, %v2071
    %v2073 = vsel %vm1520, %v2064, 0.0
    %v2074 = vadd.f32 %v2072, %v2073
    %v2075 = vadd.f32 %v2069, 1e-06
    %v2076 = vadd.f32 %v2074, 1e-06
    %v2077 = vrcp.pop %v2075
    %v2078 = vmul.f32 %v2053, %v2077
    %v2079 = vrcp.pop %v2076
    %v2080 = vmul.f32 %v2058, %v2079
    %vm2081 = vcmp.ge.f32.partialorder %v2053, 0.0
    %vm2082 = vcmp.ge.f32.partialorder %v2058, 0.0
    %v2083 = vmul.f32 %v1912, 0.2
    %v2084 = vmul.f32 %v1913, 0.2
    %v2085 = vmul.f32 %v1914, 0.2
    %v2086 = vmul.f32 %v1915, 0.2
    %v2087 = vmul.f32 %v1916, 0.2
    %v2088 = vmul.f32 %v1917, 0.2
    %v2089 = vmul.f32 %v2078, %v2015
    %v2090 = vmul.f32 %v2080, %v2020
    %v2091 = vmul.f32 %v2078, %v2025
    %v2092 = vmul.f32 %v2080, %v2030
    %v2093 = vmul.f32 %v2078, %v2035
    %v2094 = vmul.f32 %v2080, %v2040
    %v2095 = vsub.f32 %v1912, %v2089
    %v2096 = vsub.f32 %v1913, %v2090
    %v2097 = vsub.f32 %v1914, %v2091
    %v2098 = vsub.f32 %v1915, %v2092
    %v2099 = vsub.f32 %v1916, %v2093
    %v2100 = vsub.f32 %v1917, %v2094
    %v2101 = vsel %vm2081, 1, 0
    %v2102 = vsel %vm2082, 1, 0
    %vm2103 = vcmp.eq.s32.totalorder %v2101, 1
    %vm2104 = vcmp.eq.s32.totalorder %v2102, 1
    %v2105 = vsel %vm2103, %v1912, %v2095
    %v2106 = vsel %vm2104, %v1913, %v2096
    %v2107 = vsel %vm2103, %v1914, %v2097
    %v2108 = vsel %vm2104, %v1915, %v2098
    %v2109 = vsel %vm2103, %v1916, %v2099
    %v2110 = vsel %vm2104, %v1917, %v2100
    %v2111 = vmul.f32 %v2105, 0.8
    %v2112 = vmul.f32 %v2106, 0.8
    %v2113 = vmul.f32 %v2107, 0.8
    %v2114 = vmul.f32 %v2108, 0.8
    %v2115 = vmul.f32 %v2109, 0.8
    %v2116 = vmul.f32 %v2110, 0.8
    %v2117 = vadd.f32 %v2083, %v2111
    %v2118 = vadd.f32 %v2084, %v2112
    %v2119 = vadd.f32 %v2085, %v2113
    %v2120 = vadd.f32 %v2086, %v2114
    %v2121 = vadd.f32 %v2087, %v2115
    %v2122 = vadd.f32 %v2088, %v2116
    %vm2123 = vcmp.ge.f32.partialorder %v1695, 0.0
    %vm2124 = vcmp.ge.f32.partialorder %v1697, 0.0
    %vm2125 = vcmp.ge.f32.partialorder %v1701, 0.0
    %vm2126 = vcmp.ge.f32.partialorder %v1703, 0.0
    %v2127 = vmul.f32 %v1695, 0.01
    %v2128 = vmul.f32 %v1697, 0.01
    %v2129 = vmul.f32 %v1701, 0.01
    %v2130 = vmul.f32 %v1703, 0.01
    %v2131 = vsel %vm2123, %v1695, %v2127
    %v2132 = vsel %vm2124, %v1697, %v2128
    %v2133 = vsel %vm2125, %v1701, %v2129
    %v2134 = vsel %vm2126, %v1703, %v2130
    %v2135 = vld [vmem:[#allocation7 + $0x5e0] sm:$0xff]
    %v2136 = vld [vmem:[#allocation7 + $0x5f0] sm:$0xff]
    %v2137 = vld [vmem:[#allocation7 + $0x600] sm:$0xff]
    %v2138 = vld [vmem:[#allocation7 + $0x610] sm:$0xff]
    %v2139 = vld [vmem:[#allocation7 + $0x620] sm:$0xff]
    %v2140 = vld [vmem:[#allocation7 + $0x630] sm:$0xff]
    %v2141 = vld [vmem:[#allocation7 + $0x640] sm:$0xff]
    %v2142 = vld [vmem:[#allocation7 + $0x650] sm:$0xff]
    %v2143 = vld [vmem:[#allocation7 + $0x660] sm:$0xff]
    %v2144 = vld [vmem:[#allocation7 + $0x670] sm:$0xff]
    %v2145 = vld [vmem:[#allocation7 + $0x680] sm:$0xff]
    %v2146 = vld [vmem:[#allocation7 + $0x690] sm:$0xff]
    %v2148 = vsel %vm1520, %v2117, 0
    %v2151 = vsel %vm1520, %v2118, 0
    %v2154 = vsel %vm1520, %v2119, 0
    %v2157 = vsel %vm1520, %v2120, 0
    %v2160 = vsel %vm1520, %v2121, 0
    %v2163 = vsel %vm1520, %v2122, 0
    %2165 = vmatprep.subr.mxu0 0.0
    %2166 = vmatpush1.msra.mxu0 0.0
    %2167 = vmatprep.subr.mxu0 0.0
    %2168 = vmatpush1.msra.mxu0 0.0
    %2169 = vmatprep.subr.mxu0 0.0
    %2170 = vmatpush1.msra.mxu0 0.0
    %2171 = vmatprep.subr.mxu0 0.0
    %2172 = vmatpush1.msra.mxu0 0.0
    %2173 = vmatprep.subr.mxu0 0.0
    %2174 = vmatpush1.msra.mxu0 %v2146
    %2175 = vmatprep.subr.mxu0 0.0
    %2176 = vmatpush1.msra.mxu0 %v2145
    %2177 = vmatprep.subr.mxu0 0.0
    %2178 = vmatpush1.msra.mxu0 %v2144
    %2179 = vmatprep.subr.mxu0 0.0
    %2180 = vmatpush1.msra.mxu0 %v2143
    %2181 = vmatprep.subr.mxu0 0.0
    %2182 = vmatpush1.msra.mxu0 %v2142
    %2183 = vmatprep.subr.mxu0 0.0
    %2184 = vmatpush1.msra.mxu0 %v2141
    %2185 = vmatprep.subr.mxu0 0.0
    %2186 = vmatpush1.msra.mxu0 %v2140
    %2187 = vmatprep.subr.mxu0 0.0
    %2188 = vmatpush1.msra.mxu0 %v2139
    %2189 = vmatprep.subr.mxu0 0.0
    %2190 = vmatpush1.msra.mxu0 %v2138
    %2191 = vmatprep.subr.mxu0 0.0
    %2192 = vmatpush1.msra.mxu0 %v2137
    %2193 = vmatprep.subr.mxu0 0.0
    %2194 = vmatpush1.msra.mxu0 %v2136
    %2195 = vmatprep.subr.mxu0 0.0
    %2196 = vmatpush1.msra.mxu0 %v2135
    %2197 = vmatprep.subr.mxu0 0.0
    %2198 = vmatpush2.msra.mxu0 0.0
    %2199 = vmatprep.subr.mxu0 0.0
    %2200 = vmatpush2.msra.mxu0 0.0
    %2201 = vmatprep.subr.mxu0 0.0
    %2202 = vmatpush2.msra.mxu0 0.0
    %2203 = vmatprep.subr.mxu0 0.0
    %2204 = vmatpush2.msra.mxu0 0.0
    %2205 = vmatprep.subr.mxu0 0.0
    %2206 = vmatpush2.msra.mxu0 0.0
    %2207 = vmatprep.subr.mxu0 0.0
    %2208 = vmatpush2.msra.mxu0 0.0
    %2209 = vmatprep.subr.mxu0 0.0
    %2210 = vmatpush2.msra.mxu0 0.0
    %2211 = vmatprep.subr.mxu0 0.0
    %2212 = vmatpush2.msra.mxu0 0.0
    %2213 = vmatprep.subr.mxu0 0.0
    %2214 = vmatpush2.msra.mxu0 0.0
    %2215 = vmatprep.subr.mxu0 0.0
    %2216 = vmatpush2.msra.mxu0 0.0
    %2217 = vmatprep.subr.mxu0 0.0
    %2218 = vmatpush2.msra.mxu0 0.0
    %2219 = vmatprep.subr.mxu0 0.0
    %2220 = vmatpush2.msra.mxu0 0.0
    %2221 = vmatprep.subr.mxu0 0.0
    %2222 = vmatpush2.msra.mxu0 0.0
    %2223 = vmatprep.subr.mxu0 0.0
    %2224 = vmatpush2.msra.mxu0 0.0
    %2225 = vmatprep.subr.mxu0 0.0
    %2226 = vmatpush2.msra.mxu0 0.0
    %2227 = vmatprep.subr.mxu0 0.0
    %2228 = vmatpush2.msra.mxu0 0.0
    %2229 = vmatprep.mubr.f32.mxu0 0.0
    %2230 = vmatmul.mubr.f32.gmra.mxu0 %v2148
    %v2231 = vpop.f32.mrf.mxu0
    %v2232 = vadd.f32 0.0, %v2231
    %v2233 = vpop.f32.mrf.mxu0
    %2234 = vmatprep.mubr.f32.mxu0 0.0
    %2235 = vmatmul.mubr.f32.gmra.mxu0 %v2151
    %v2236 = vpop.f32.mrf.mxu0
    %v2237 = vadd.f32 0.0, %v2236
    %v2238 = vpop.f32.mrf.mxu0
    %2239 = vmatprep.mubr.f32.mxu0 0.0
    %2240 = vmatmul.mubr.f32.gmra.mxu0 %v2154
    %v2241 = vpop.f32.mrf.mxu0
    %v2242 = vadd.f32 0.0, %v2241
    %v2243 = vpop.f32.mrf.mxu0
    %2244 = vmatprep.mubr.f32.mxu0 0.0
    %2245 = vmatmul.mubr.f32.gmra.mxu0 %v2157
    %v2246 = vpop.f32.mrf.mxu0
    %v2247 = vadd.f32 0.0, %v2246
    %v2248 = vpop.f32.mrf.mxu0
    %2249 = vmatprep.mubr.f32.mxu0 0.0
    %2250 = vmatmul.mubr.f32.gmra.mxu0 %v2160
    %v2251 = vpop.f32.mrf.mxu0
    %v2252 = vadd.f32 0.0, %v2251
    %v2253 = vpop.f32.mrf.mxu0
    %2254 = vmatprep.mubr.f32.mxu0 0.0
    %2255 = vmatmul.mubr.f32.gmra.mxu0 %v2163
    %v2256 = vpop.f32.mrf.mxu0
    %v2257 = vadd.f32 0.0, %v2256
    %v2258 = vpop.f32.mrf.mxu0
    %2259 = vdwg.mxu0
    %v2260 = vmul.f32 %v2232, %v2232
    %v2261 = vmul.f32 %v2237, %v2237
    %v2262 = vmul.f32 %v2242, %v2242
    %v2263 = vmul.f32 %v2247, %v2247
    %v2264 = vmul.f32 %v2252, %v2252
    %v2265 = vmul.f32 %v2257, %v2257
    %v2266 = vsel %vm1520, %v2260, 0.0
    %v2267 = vsel %vm1520, %v2262, 0.0
    %v2268 = vadd.f32 %v2266, %v2267
    %v2269 = vsel %vm1520, %v2264, 0.0
    %v2270 = vadd.f32 %v2268, %v2269
    %v2271 = vsel %vm1520, %v2261, 0.0
    %v2272 = vsel %vm1520, %v2263, 0.0
    %v2273 = vadd.f32 %v2271, %v2272
    %v2274 = vsel %vm1520, %v2265, 0.0
    %v2275 = vadd.f32 %v2273, %v2274
    %v2276 = vrsqrt.pop %v2270
    %v2277 = vmul.f32 %v2270, %v2276
    %vm2278 = vcmp.eq.f32.partialorder %v2270, inf
    %v2279 = vsel %vm2278, %v2270, %v2277
    %vm2280 = vcmp.eq.f32.partialorder %v2270, 0.0
    %v2281 = vand.u32 %v2270, 2147483648
    %v2282 = vsel %vm2280, %v2281, %v2279
    %v2283 = vrsqrt.pop %v2275
    %v2284 = vmul.f32 %v2275, %v2283
    %vm2285 = vcmp.eq.f32.partialorder %v2275, inf
    %v2286 = vsel %vm2285, %v2275, %v2284
    %vm2287 = vcmp.eq.f32.partialorder %v2275, 0.0
    %v2288 = vand.u32 %v2275, 2147483648
    %v2289 = vsel %vm2287, %v2288, %v2286
    %v2290 = vld [vmem:[#allocation7 + $0x6a0] sm:$0xff]
    %v2291 = vld [vmem:[#allocation7 + $0x6b0] sm:$0xff]
    %v2292 = vld [vmem:[#allocation7 + $0x6c0] sm:$0xff]
    %v2293 = vld [vmem:[#allocation7 + $0x6d0] sm:$0xff]
    %v2294 = vld [vmem:[#allocation7 + $0x6e0] sm:$0xff]
    %v2295 = vld [vmem:[#allocation7 + $0x6f0] sm:$0xff]
    %v2296 = vld [vmem:[#allocation7 + $0x700] sm:$0xff]
    %v2297 = vld [vmem:[#allocation7 + $0x710] sm:$0xff]
    %v2298 = vld [vmem:[#allocation7 + $0x720] sm:$0xff]
    %v2299 = vld [vmem:[#allocation7 + $0x730] sm:$0xff]
    %v2300 = vld [vmem:[#allocation7 + $0x740] sm:$0xff]
    %v2301 = vld [vmem:[#allocation7 + $0x750] sm:$0xff]
    %v2302 = vld [vmem:[#allocation7 + $0x760] sm:$0xff]
    %v2303 = vld [vmem:[#allocation7 + $0x770] sm:$0xff]
    %v2304 = vld [vmem:[#allocation7 + $0x780] sm:$0xff]
    %v2305 = vld [vmem:[#allocation7 + $0x790] sm:$0xff]
    %v2306 = vld [vmem:[#allocation7 + $0x7a0] sm:$0xff]
    %v2307 = vld [vmem:[#allocation7 + $0x7b0] sm:$0xff]
    %v2308 = vld [vmem:[#allocation7 + $0x7c0] sm:$0xff]
    %v2309 = vld [vmem:[#allocation7 + $0x7d0] sm:$0xff]
    %v2310 = vld [vmem:[#allocation7 + $0x7e0] sm:$0xff]
    %v2311 = vld [vmem:[#allocation7 + $0x7f0] sm:$0xff]
    %v2312 = vld [vmem:[#allocation7 + $0x800] sm:$0xff]
    %v2313 = vld [vmem:[#allocation7 + $0x810] sm:$0xff]
    %v2314 = vld [vmem:[#allocation7 + $0x820] sm:$0xff]
    %v2315 = vld [vmem:[#allocation7 + $0x830] sm:$0xff]
    %v2316 = vld [vmem:[#allocation7 + $0x840] sm:$0xff]
    %v2317 = vld [vmem:[#allocation7 + $0x850] sm:$0xff]
    %v2318 = vld [vmem:[#allocation7 + $0x860] sm:$0xff]
    %v2319 = vld [vmem:[#allocation7 + $0x870] sm:$0xff]
    %v2320 = vld [vmem:[#allocation7 + $0x880] sm:$0xff]
    %v2321 = vld [vmem:[#allocation7 + $0x890] sm:$0xff]
    %v2322 = vld [vmem:[#allocation7 + $0x8a0] sm:$0xff]
    %v2323 = vld [vmem:[#allocation7 + $0x8b0] sm:$0xff]
    %v2324 = vld [vmem:[#allocation7 + $0x8c0] sm:$0xff]
    %v2325 = vld [vmem:[#allocation7 + $0x8d0] sm:$0xff]
    %v2327 = vsel %vm1818, %v2132, 0
    %v2330 = vsel %vm1818, %v2134, 0
    %2332 = vmatprep.subr.mxu0 0.0
    %2333 = vmatpush1.msra.mxu0 %v2317
    %2334 = vmatprep.subr.mxu0 0.0
    %2335 = vmatpush1.msra.mxu0 %v2316
    %2336 = vmatprep.subr.mxu0 0.0
    %2337 = vmatpush1.msra.mxu0 %v2315
    %2338 = vmatprep.subr.mxu0 0.0
    %2339 = vmatpush1.msra.mxu0 %v2314
    %2340 = vmatprep.subr.mxu0 0.0
    %2341 = vmatpush1.msra.mxu0 %v2313
    %2342 = vmatprep.subr.mxu0 0.0
    %2343 = vmatpush1.msra.mxu0 %v2312
    %2344 = vmatprep.subr.mxu0 0.0
    %2345 = vmatpush1.msra.mxu0 %v2311
    %2346 = vmatprep.subr.mxu0 0.0
    %2347 = vmatpush1.msra.mxu0 %v2310
    %2348 = vmatprep.subr.mxu0 0.0
    %2349 = vmatpush1.msra.mxu0 %v2309
    %2350 = vmatprep.subr.mxu0 0.0
    %2351 = vmatpush1.msra.mxu0 %v2308
    %2352 = vmatprep.subr.mxu0 0.0
    %2353 = vmatpush1.msra.mxu0 %v2307
    %2354 = vmatprep.subr.mxu0 0.0
    %2355 = vmatpush1.msra.mxu0 %v2306
    %2356 = vmatprep.subr.mxu0 0.0
    %2357 = vmatpush1.msra.mxu0 %v2305
    %2358 = vmatprep.subr.mxu0 0.0
    %2359 = vmatpush1.msra.mxu0 %v2304
    %2360 = vmatprep.subr.mxu0 0.0
    %2361 = vmatpush1.msra.mxu0 %v2303
    %2362 = vmatprep.subr.mxu0 0.0
    %2363 = vmatpush1.msra.mxu0 %v2302
    %2364 = vmatprep.subr.mxu0 0.0
    %2365 = vmatpush2.msra.mxu0 0.0
    %2366 = vmatprep.subr.mxu0 0.0
    %2367 = vmatpush2.msra.mxu0 0.0
    %2368 = vmatprep.subr.mxu0 0.0
    %2369 = vmatpush2.msra.mxu0 0.0
    %2370 = vmatprep.subr.mxu0 0.0
    %2371 = vmatpush2.msra.mxu0 0.0
    %2372 = vmatprep.subr.mxu0 0.0
    %2373 = vmatpush2.msra.mxu0 0.0
    %2374 = vmatprep.subr.mxu0 0.0
    %2375 = vmatpush2.msra.mxu0 0.0
    %2376 = vmatprep.subr.mxu0 0.0
    %2377 = vmatpush2.msra.mxu0 0.0
    %2378 = vmatprep.subr.mxu0 0.0
    %2379 = vmatpush2.msra.mxu0 0.0
    %2380 = vmatprep.subr.mxu0 0.0
    %2381 = vmatpush2.msra.mxu0 %v2325
    %2382 = vmatprep.subr.mxu0 0.0
    %2383 = vmatpush2.msra.mxu0 %v2324
    %2384 = vmatprep.subr.mxu0 0.0
    %2385 = vmatpush2.msra.mxu0 %v2323
    %2386 = vmatprep.subr.mxu0 0.0
    %2387 = vmatpush2.msra.mxu0 %v2322
    %2388 = vmatprep.subr.mxu0 0.0
    %2389 = vmatpush2.msra.mxu0 %v2321
    %2390 = vmatprep.subr.mxu0 0.0
    %2391 = vmatpush2.msra.mxu0 %v2320
    %2392 = vmatprep.subr.mxu0 0.0
    %2393 = vmatpush2.msra.mxu0 %v2319
    %2394 = vmatprep.subr.mxu0 0.0
    %2395 = vmatpush2.msra.mxu0 %v2318
    %2396 = vmatprep.mubr.f32.mxu0 %v2327
    %2397 = vmatmul.mubr.f32.gmra.mxu0 %v2131
    %v2398 = vpop.f32.mrf.mxu0
    %v2399 = vadd.f32 0.0, %v2398
    %v2400 = vpop.f32.mrf.mxu0
    %2401 = vmatprep.mubr.f32.mxu0 %v2330
    %2402 = vmatmul.mubr.f32.gmra.mxu0 %v2133
    %v2403 = vpop.f32.mrf.mxu0
    %v2404 = vadd.f32 0.0, %v2403
    %v2405 = vpop.f32.mrf.mxu0
    %2406 = vdwg.mxu0
    %v2408 = vsel %vm1520, %v2282, 0
    %v2411 = vsel %vm1520, %v2289, 0
    %2413 = vmatprep.subr.mxu0 0.0
    %2414 = vmatpush1.msra.mxu0 0.0
    %2415 = vmatprep.subr.mxu0 0.0
    %2416 = vmatpush1.msra.mxu0 0.0
    %2417 = vmatprep.subr.mxu0 0.0
    %2418 = vmatpush1.msra.mxu0 0.0
    %2419 = vmatprep.subr.mxu0 0.0
    %2420 = vmatpush1.msra.mxu0 0.0
    %2421 = vmatprep.subr.mxu0 0.0
    %2422 = vmatpush1.msra.mxu0 %v2301
    %2423 = vmatprep.subr.mxu0 0.0
    %2424 = vmatpush1.msra.mxu0 %v2300
    %2425 = vmatprep.subr.mxu0 0.0
    %2426 = vmatpush1.msra.mxu0 %v2299
    %2427 = vmatprep.subr.mxu0 0.0
    %2428 = vmatpush1.msra.mxu0 %v2298
    %2429 = vmatprep.subr.mxu0 0.0
    %2430 = vmatpush1.msra.mxu0 %v2297
    %2431 = vmatprep.subr.mxu0 0.0
    %2432 = vmatpush1.msra.mxu0 %v2296
    %2433 = vmatprep.subr.mxu0 0.0
    %2434 = vmatpush1.msra.mxu0 %v2295
    %2435 = vmatprep.subr.mxu0 0.0
    %2436 = vmatpush1.msra.mxu0 %v2294
    %2437 = vmatprep.subr.mxu0 0.0
    %2438 = vmatpush1.msra.mxu0 %v2293
    %2439 = vmatprep.subr.mxu0 0.0
    %2440 = vmatpush1.msra.mxu0 %v2292
    %2441 = vmatprep.subr.mxu0 0.0
    %2442 = vmatpush1.msra.mxu0 %v2291
    %2443 = vmatprep.subr.mxu0 0.0
    %2444 = vmatpush1.msra.mxu0 %v2290
    %2445 = vmatprep.subr.mxu0 0.0
    %2446 = vmatpush2.msra.mxu0 0.0
    %2447 = vmatprep.subr.mxu0 0.0
    %2448 = vmatpush2.msra.mxu0 0.0
    %2449 = vmatprep.subr.mxu0 0.0
    %2450 = vmatpush2.msra.mxu0 0.0
    %2451 = vmatprep.subr.mxu0 0.0
    %2452 = vmatpush2.msra.mxu0 0.0
    %2453 = vmatprep.subr.mxu0 0.0
    %2454 = vmatpush2.msra.mxu0 0.0
    %2455 = vmatprep.subr.mxu0 0.0
    %2456 = vmatpush2.msra.mxu0 0.0
    %2457 = vmatprep.subr.mxu0 0.0
    %2458 = vmatpush2.msra.mxu0 0.0
    %2459 = vmatprep.subr.mxu0 0.0
    %2460 = vmatpush2.msra.mxu0 0.0
    %2461 = vmatprep.subr.mxu0 0.0
    %2462 = vmatpush2.msra.mxu0 0.0
    %2463 = vmatprep.subr.mxu0 0.0
    %2464 = vmatpush2.msra.mxu0 0.0
    %2465 = vmatprep.subr.mxu0 0.0
    %2466 = vmatpush2.msra.mxu0 0.0
    %2467 = vmatprep.subr.mxu0 0.0
    %2468 = vmatpush2.msra.mxu0 0.0
    %2469 = vmatprep.subr.mxu0 0.0
    %2470 = vmatpush2.msra.mxu0 0.0
    %2471 = vmatprep.subr.mxu0 0.0
    %2472 = vmatpush2.msra.mxu0 0.0
    %2473 = vmatprep.subr.mxu0 0.0
    %2474 = vmatpush2.msra.mxu0 0.0
    %2475 = vmatprep.subr.mxu0 0.0
    %2476 = vmatpush2.msra.mxu0 0.0
    %2477 = vmatprep.mubr.f32.mxu0 0.0
    %2478 = vmatmul.mubr.f32.gmra.mxu0 %v2408
    %v2479 = vpop.f32.mrf.mxu0
    %v2480 = vadd.f32 %v2399, %v2479
    %v2481 = vpop.f32.mrf.mxu0
    %2482 = vmatprep.mubr.f32.mxu0 0.0
    %2483 = vmatmul.mubr.f32.gmra.mxu0 %v2411
    %v2484 = vpop.f32.mrf.mxu0
    %v2485 = vadd.f32 %v2404, %v2484
    %v2486 = vpop.f32.mrf.mxu0
    %2487 = vdwg.mxu0
    %v2488 = vld [vmem:[#allocation5] sm:$0xff]
    %v2489 = vld [vmem:[#allocation5 + $0x8] sm:$0xff]
    %v2490 = vmul.f32 %v2480, 1.442695
    %v2491 = vpow.pop %v2490
    %v2492 = vmul.f32 %v2485, 1.442695
    %v2493 = vpow.pop %v2492
    %2496 = vrot.lane.b32.xlu0 %v2480, 118
    %v2497 = vpop.permute.xlu0 %2496
    %2498 = vrot.lane.b32.xlu0 %v2485, 118
    %v2499 = vpop.permute.xlu0 %2498
    %v2502 = vadd.f32 %v2488, %v2497
    %v2503 = vadd.f32 %v2489, %v2499
    %v2504 = vmul.f32 %v2502, %v2491
    %v2505 = vmul.f32 %v2503, %v2493
    %v2506 = vadd.f32 %v2491, 1e-20
    %v2507 = vadd.f32 %v2493, 1e-20
    %v2508 = vlog2.pop %v2506
    %v2509 = vmul.f32 %v2508, 0.6931472
    %v2510 = vlog2.pop %v2507
    %v2511 = vmul.f32 %v2510, 0.6931472
    %v2512 = vadd.f32 %v2509, 0.0
    %v2513 = vadd.f32 %v2511, 0.0
    %2514 = vrot.lane.b32.xlu0 %v2480, 98
    %v2515 = vpop.permute.xlu0 %2514
    %2516 = vrot.lane.b32.xlu0 %v2485, 98
    %v2517 = vpop.permute.xlu0 %2516
    %v2520 = vadd.f32 %v2504, %v2515
    %v2521 = vadd.f32 %v2505, %v2517
    %2524 = vrot.lane.b32.xlu0 %v2491, 108
    %v2525 = vpop.permute.xlu0 %2524
    %2526 = vrot.lane.b32.xlu0 %v2493, 108
    %v2527 = vpop.permute.xlu0 %2526
    %v2530 = vmul.f32 %v2520, %v2525
    %v2531 = vmul.f32 %v2521, %v2527
    %2534 = vrot.lane.b32.xlu0 %v2509, 108
    %v2535 = vpop.permute.xlu0 %2534
    %2536 = vrot.lane.b32.xlu0 %v2511, 108
    %v2537 = vpop.permute.xlu0 %2536
    %v2540 = vadd.f32 %v2512, %v2535
    %v2541 = vadd.f32 %v2513, %v2537
    %2542 = vrot.lane.b32.xlu0 %v2480, 78
    %v2543 = vpop.permute.xlu0 %2542
    %2544 = vrot.lane.b32.xlu0 %v2485, 78
    %v2545 = vpop.permute.xlu0 %2544
    %v2548 = vadd.f32 %v2530, %v2543
    %v2549 = vadd.f32 %v2531, %v2545
    %2550 = vrot.lane.b32.xlu0 %v2491, 88
    %v2551 = vpop.permute.xlu0 %2550
    %2552 = vrot.lane.b32.xlu0 %v2493, 88
    %v2553 = vpop.permute.xlu0 %2552
    %v2556 = vmul.f32 %v2548, %v2551
    %v2557 = vmul.f32 %v2549, %v2553
    %2558 = vrot.lane.b32.xlu0 %v2509, 88
    %v2559 = vpop.permute.xlu0 %2558
    %2560 = vrot.lane.b32.xlu0 %v2511, 88
    %v2561 = vpop.permute.xlu0 %2560
    %v2564 = vadd.f32 %v2540, %v2559
    %v2565 = vadd.f32 %v2541, %v2561
    %2566 = vrot.lane.b32.xlu0 %v2480, 58
    %v2567 = vpop.permute.xlu0 %2566
    %2568 = vrot.lane.b32.xlu0 %v2485, 58
    %v2569 = vpop.permute.xlu0 %2568
    %v2572 = vadd.f32 %v2556, %v2567
    %v2573 = vadd.f32 %v2557, %v2569
    %2574 = vrot.lane.b32.xlu0 %v2491, 68
    %v2575 = vpop.permute.xlu0 %2574
    %2576 = vrot.lane.b32.xlu0 %v2493, 68
    %v2577 = vpop.permute.xlu0 %2576
    %v2580 = vmul.f32 %v2572, %v2575
    %v2581 = vmul.f32 %v2573, %v2577
    %2582 = vrot.lane.b32.xlu0 %v2509, 68
    %v2583 = vpop.permute.xlu0 %2582
    %2584 = vrot.lane.b32.xlu0 %v2511, 68
    %v2585 = vpop.permute.xlu0 %2584
    %v2588 = vadd.f32 %v2564, %v2583
    %v2589 = vadd.f32 %v2565, %v2585
    %2590 = vrot.lane.b32.xlu0 %v2480, 38
    %v2591 = vpop.permute.xlu0 %2590
    %2592 = vrot.lane.b32.xlu0 %v2485, 38
    %v2593 = vpop.permute.xlu0 %2592
    %v2596 = vadd.f32 %v2580, %v2591
    %v2597 = vadd.f32 %v2581, %v2593
    %2598 = vrot.lane.b32.xlu0 %v2491, 48
    %v2599 = vpop.permute.xlu0 %2598
    %2600 = vrot.lane.b32.xlu0 %v2493, 48
    %v2601 = vpop.permute.xlu0 %2600
    %v2604 = vmul.f32 %v2596, %v2599
    %v2605 = vmul.f32 %v2597, %v2601
    %2606 = vrot.lane.b32.xlu0 %v2509, 48
    %v2607 = vpop.permute.xlu0 %2606
    %2608 = vrot.lane.b32.xlu0 %v2511, 48
    %v2609 = vpop.permute.xlu0 %2608
    %v2612 = vadd.f32 %v2588, %v2607
    %v2613 = vadd.f32 %v2589, %v2609
    %2614 = vrot.lane.b32.xlu0 %v2480, 18
    %v2615 = vpop.permute.xlu0 %2614
    %2616 = vrot.lane.b32.xlu0 %v2485, 18
    %v2617 = vpop.permute.xlu0 %2616
    %v2620 = vadd.f32 %v2604, %v2615
    %v2621 = vadd.f32 %v2605, %v2617
    %2622 = vrot.lane.b32.xlu0 %v2491, 28
    %v2623 = vpop.permute.xlu0 %2622
    %2624 = vrot.lane.b32.xlu0 %v2493, 28
    %v2625 = vpop.permute.xlu0 %2624
    %v2628 = vmul.f32 %v2620, %v2623
    %v2629 = vmul.f32 %v2621, %v2625
    %2630 = vrot.lane.b32.xlu0 %v2509, 28
    %v2631 = vpop.permute.xlu0 %2630
    %2632 = vrot.lane.b32.xlu0 %v2511, 28
    %v2633 = vpop.permute.xlu0 %2632
    %v2636 = vadd.f32 %v2612, %v2631
    %v2637 = vadd.f32 %v2613, %v2633
    %2640 = vrot.lane.b32.xlu0 %v2636, 10
    %v2641 = vpop.permute.xlu0 %2640
    %2642 = vrot.lane.b32.xlu0 %v2637, 10
    %v2643 = vpop.permute.xlu0 %2642
    %vm2646 = vcmask 80896
    %v2647 = vsel %vm2646, %v2628, %v2641
    %v2648 = vsel %vm2646, %v2629, %v2643
    %vm2649 = vcmask 162816
    %2650 = vst.msk [vmem:[#allocation8] sm:$0xff] %vm2649, %v2647
    %2651 = vst.msk [vmem:[#allocation8 + $0x8] sm:$0xff] %vm2649, %v2648
    // Predicated region
    $region30: #{tpu_custom_call.1} parent=1 // pred_check
      _
    $region31: #{tpu_custom_call.1} parent=1 // pred_check_branch
      %2653 = sbr.rel (0) target = $region33
    $region32: #{tpu_custom_call.1} parent=1 // pred_region
      %s2655 = ssub.s32 256, 256
      %2656 = vsyncadd [#allocation4], %s2655
      %s2657 = sshll.u32 [#allocation8], 4
      %s2658 = int_to_ptr.vmem [resolvable:$true] %s2657
      %2663 = dma.vmem_to_hbm [thread:$0]  %s2658, 256, %s4, [#allocation4], 128, 128, 8
    $region33: #{tpu_custom_call.1} parent=1 // pred_fallthru
      _
    // Predicated region
    $region34: #{tpu_custom_call.1} parent=1 // pred_check
      _
    $region35: #{tpu_custom_call.1} parent=1 // pred_check_branch
      %2665 = sbr.rel (0) target = $region37
    $region36: #{tpu_custom_call.1} parent=1 // pred_region
      %2666 = dma.done [#allocation4], 256
    $region37: #{tpu_custom_call.1} parent=1 // pred_fallthru
      _
    %2667 = vsyncpa [#allocation3], 1
    %2668 = vsyncpa [#allocation6], 1
    %2669 = vsyncpa [#allocation4], 1

</llo_original>
